<compile_context>
chip_gen: v7x
topology: tpu7x:2x2x1
jax: 0.10.0
libtpu: 0.0.40
codegen_flags: <defaults>
</compile_context>

<pallas_src>
import functools

import numpy as np

import jax
import jax.numpy as jnp
from jax.experimental import pallas as pl
from jax.experimental.pallas import tpu as pltpu


_LAYER_DIMS = (10, 5, 4, 3, 2, 1)          # output widths of fc1..fc6

_DEF_VMEM_LIMIT = 48 * 1024 * 1024         # requested scoped VMEM (safe across v5e/v6e/v7x)
_DEF_TILE_BUDGET = 36 * 1024 * 1024        # VMEM budget for batch-tile-scaled buffers
_MAX_BATCH_TILE = 128 * 1024               # sanity cap on rows per tile
_PRECISION = jax.lax.Precision.HIGHEST     # match fp32 nn.Linear semantics


def _round_up(x, m):
    return (x + m - 1) // m * m


def _cdiv(a, b):
    return (a + b - 1) // b


# --------------------------------------------------------------------------- #
# Kernel
# --------------------------------------------------------------------------- #
def _mlp_kernel(x_ref, w_ref, b_ref, o_ref, *, input_dim, padded_dims):
    """One batch tile of the MLP, computed in (feature, batch) layout.

    x_ref : (bt, input_dim)              input rows (batch on sublanes)
    w_ref : (sum(padded_dims), max_in)   packed torch-layout weights, 8-aligned rows
    b_ref : (sum(padded_dims), 1)        packed biases (zero in padded rows)
    o_ref : (1, bt)                      probabilities, batch on the 128-lane axis
    """
    x = x_ref[...]                       # keep input dtype; dot promotes as needed
    w_all = w_ref[...]
    b_all = b_ref[...]

    # Layer 0: fold the (bt, in) -> (in, bt) transpose into the MXU contraction
    # (contract both operands' feature axis) -> (p0, bt). No XLU transpose,
    # no full-tile VMEM copy.
    p0 = padded_dims[0]
    h = jax.lax.dot_general(
        w_all[0:p0, :input_dim], x,
        dimension_numbers=(((1,), (1,)), ((), ())),
        precision=_PRECISION,
        preferred_element_type=jnp.float32) + b_all[0:p0, :]
    h = jnp.maximum(h, 0.0)

    # Remaining layers: W_l @ h + b_l, batch stays on the lane axis. Padded
    # rows/cols are zero so they contribute nothing and stay zero through ReLU.
    row = p0
    p_prev = p0
    n_layers = len(padded_dims)
    for li in range(1, n_layers):
        p_out = padded_dims[li]
        w = w_all[row:row + p_out, :p_prev]        # 8-aligned row offset
        b = b_all[row:row + p_out, :]
        h = jnp.dot(w, h, precision=_PRECISION,
                    preferred_element_type=jnp.float32) + b
        if li < n_layers - 1:
            h = jnp.maximum(h, 0.0)
        row += p_out
        p_prev = p_out

    # True head width is 1 -> row 0 of the padded (8, bt) result; lane-dense store.
    o_ref[...] = jax.nn.sigmoid(h[0:1, :]).astype(o_ref.dtype)


# --------------------------------------------------------------------------- #
# Parameter packing (host-side, once per parameter set)
# --------------------------------------------------------------------------- #
def pack_params(params):
    """Pack torch-layout (out, in) weights/biases into two small fp32 blocks.

    Each layer's rows are padded to a multiple of 8 so every in-kernel slice
    starts on a sublane-tile boundary. Padded rows/cols are zero.
    """
    input_dim = int(params[0][0].shape[1])
    layer_dims = tuple(int(w.shape[0]) for (w, _) in params)
    assert layer_dims[-1] == 1, "TransactionMLP head must have a single output unit"

    padded_dims = tuple(_round_up(d, 8) for d in layer_dims)
    max_in = max([input_dim] + list(padded_dims[:-1]))
    total_rows = sum(padded_dims)

    w_pack = np.zeros((total_rows, max_in), np.float32)
    b_pack = np.zeros((total_rows, 1), np.float32)
    row = 0
    for li, (w, b) in enumerate(params):
        w_np = np.asarray(w, dtype=np.float32)
        b_np = np.asarray(b, dtype=np.float32).reshape(-1)
        out_dim, in_dim = w_np.shape
        w_pack[row:row + out_dim, :in_dim] = w_np
        b_pack[row:row + out_dim, 0] = b_np
        row += padded_dims[li]

    return jnp.asarray(w_pack), jnp.asarray(b_pack), padded_dims, input_dim


# --------------------------------------------------------------------------- #
# Batch tile selection
# --------------------------------------------------------------------------- #
def _choose_batch_tile(B, input_dim, hidden_rows, x_itemsize, requested, tile_budget):
    # VMEM bytes that scale with the batch tile:
    #   2 * input_dim * itemsize : double-buffered x tile
    #   hidden_rows * 4          : f32 (padded_out, bt) layer intermediates (conservative sum)
    #   8                        : double-buffered (1, bt) f32 output
    #   input_dim * 4            : possible f32 promotion of a non-f32 x tile
    per_row = 2 * input_dim * x_itemsize + hidden_rows * 4 + 8
    if x_itemsize != 4:
        per_row += input_dim * 4
    bt_max = max(128, (tile_budget // per_row) // 128 * 128)
    bt_max = min(bt_max, _MAX_BATCH_TILE)
    if requested is not None:
        bt_max = min(bt_max, max(128, _round_up(int(requested), 128)))

    n_tiles = _cdiv(B, bt_max)
    # v7x megacore: keep both TensorCores busy when the batch allows >=2 tiles.
    if n_tiles == 1 and B > 128:
        n_tiles = 2
    bt = min(bt_max, _round_up(_cdiv(B, n_tiles), 128))
    return bt, _cdiv(B, bt)


# --------------------------------------------------------------------------- #
# Forward pass
# --------------------------------------------------------------------------- #
def _forward_packed(x, w_pack, b_pack, *, input_dim, padded_dims,
                    batch_tile=None, vmem_limit_bytes=_DEF_VMEM_LIMIT,
                    tile_budget=_DEF_TILE_BUDGET):
    B, in_dim = x.shape
    assert in_dim == input_dim
    bt, num_tiles = _choose_batch_tile(
        B, input_dim, sum(padded_dims), jnp.dtype(x.dtype).itemsize,
        batch_tile, tile_budget)
    total_rows, max_in = w_pack.shape

    kernel = functools.partial(_mlp_kernel, input_dim=input_dim,
                               padded_dims=padded_dims)

    # No jnp.pad of x: the grid covers B with a (possibly) partial last input
    # block. Rows are independent, so garbage lanes of the last tile only land
    # in the padded tail of the fully-tiled (1, num_tiles*bt) output, which is
    # sliced off below; every output block store is full-width and lane-dense.
    out_t = pl.pallas_call(
        kernel,
        out_shape=jax.ShapeDtypeStruct((1, num_tiles * bt), x.dtype),
        grid_spec=pltpu.PrefetchScalarGridSpec(
            num_scalar_prefetch=0,
            grid=(num_tiles,),
            in_specs=[
                pl.BlockSpec((bt, input_dim), lambda i: (i, 0)),       # x tile
                pl.BlockSpec((total_rows, max_in), lambda i: (0, 0)),  # packed W (resident)
                pl.BlockSpec((total_rows, 1), lambda i: (0, 0)),       # packed b (resident)
            ],
            out_specs=pl.BlockSpec((1, bt), lambda i: (0, i)),         # lane-dense out
        ),
        compiler_params=pltpu.CompilerParams(
            dimension_semantics=("parallel",),
            vmem_limit_bytes=int(vmem_limit_bytes)),
    )(x, w_pack, b_pack)

    # (1, num_tiles*bt) -> (B, 1)
    return out_t.reshape(-1)[:B].reshape(B, 1)


def make_transaction_mlp(params, **kwargs):
    """Pack params once and return a jitted forward: x (B, input_dim) -> (B, 1)."""
    w_pack, b_pack, padded_dims, input_dim = pack_params(params)
    fwd = functools.partial(_forward_packed, w_pack=w_pack, b_pack=b_pack,
                            input_dim=input_dim, padded_dims=padded_dims, **kwargs)
    return jax.jit(fwd)


def transaction_mlp_forward(x, params, **kwargs):
    """Convenience one-shot forward (packs params on every call)."""
    w_pack, b_pack, padded_dims, input_dim = pack_params(params)
    return _forward_packed(x, w_pack, b_pack, input_dim=input_dim,
                           padded_dims=padded_dims, **kwargs)


# --------------------------------------------------------------------------- #
# Reference / init
# --------------------------------------------------------------------------- #
def init_params(input_dim, key):
    """Deterministic init matching nn.Linear shapes (W in torch (out, in) layout)."""
    dims = [input_dim] + list(_LAYER_DIMS)
    params = []
    for i in range(len(dims) - 1):
        fan_in, fan_out = dims[i], dims[i + 1]
        key, kw, kb = jax.random.split(key, 3)
        bound = 1.0 / jnp.sqrt(fan_in)
        w = jax.random.uniform(kw, (fan_out, fan_in), jnp.float32, -bound, bound)
        b = jax.random.uniform(kb, (fan_out,), jnp.float32, -bound, bound)
        params.append((w, b))
    return params


def reference_forward(x, params):
    """Plain-JAX reference with identical semantics to the torch module."""
    h = x
    for i, (w, b) in enumerate(params):
        h = jnp.dot(h, w.T, precision=_PRECISION) + b
        if i < len(params) - 1:
            h = jnp.maximum(h, 0.0)
    return jax.nn.sigmoid(h)


if __name__ == "__main__":
    key = jax.random.PRNGKey(0)
    k_x, k_p, k_x2 = jax.random.split(key, 3)

    input_dim = 16
    params = init_params(input_dim, k_p)
    mlp = make_transaction_mlp(params)

    # Small smoke test (batch=8) — exercises the partial-input-block path.
    x = jax.random.normal(k_x, (8, input_dim), jnp.float32)
    out = jax.block_until_ready(mlp(x))
    ref = reference_forward(x, params)
    assert out.shape == (8, 1)
    assert jnp.allclose(out, ref, atol=1e-5, rtol=1e-5), (out, ref)

    # Ragged multi-tile test: 2 tiles on the parallel batch axis, partial tail.
    x2 = jax.random.normal(k_x2, (300, input_dim), jnp.float32)
    out2 = jax.block_until_ready(transaction_mlp_forward(x2, params, batch_tile=256))
    ref2 = reference_forward(x2, params)
    assert out2.shape == (300, 1)
    assert jnp.allclose(out2, ref2, atol=1e-5, rtol=1e-5), (out2, ref2)

    print("KERNEL_OK")
</pallas_src>

<mosaic_0001>
module attributes {stable_mosaic.version = 11 : i64} {
  func.func @_mlp_kernel(%arg0: i32, %arg1: memref<128x16xf32, #tpu.memory_space<vmem>>, %arg2: memref<56x16xf32, #tpu.memory_space<vmem>>, %arg3: memref<56x1xf32, #tpu.memory_space<vmem>>, %arg4: memref<1x128xf32, #tpu.memory_space<vmem>>) attributes {dimension_semantics = [#tpu.dimension_semantics<parallel>], iteration_bounds = array<i64: 1>, scalar_prefetch = 0 : i64, scratch_operands = 0 : i64, tpu.core_type = #tpu.core_type<tc>, window_params = [{transform_indices = @transform_0, window_bounds = array<i64: 128, 16>}, {pipeline_mode = #tpu.pipeline_mode<synchronous>, transform_indices = @transform_1, window_bounds = array<i64: 56, 16>}, {pipeline_mode = #tpu.pipeline_mode<synchronous>, transform_indices = @transform_2, window_bounds = array<i64: 56, 1>}, {transform_indices = @transform_3, window_bounds = array<i64: 1, 128>}]} {
    %c0 = arith.constant 0 : index
    %c0_0 = arith.constant 0 : index
    %0 = vector.load %arg1[%c0, %c0_0] : memref<128x16xf32, #tpu.memory_space<vmem>>, vector<128x16xf32>
    %c0_1 = arith.constant 0 : index
    %c0_2 = arith.constant 0 : index
    %1 = vector.load %arg2[%c0_1, %c0_2] : memref<56x16xf32, #tpu.memory_space<vmem>>, vector<56x16xf32>
    %c0_3 = arith.constant 0 : index
    %c0_4 = arith.constant 0 : index
    %2 = vector.load %arg3[%c0_3, %c0_4] : memref<56x1xf32, #tpu.memory_space<vmem>>, vector<56x1xf32>
    %3 = vector.extract_strided_slice %1 {offsets = [0, 0], sizes = [16, 16], strides = [1, 1]} : vector<56x16xf32> to vector<16x16xf32>
    %cst = arith.constant dense<0.000000e+00> : vector<16x128xf32>
    %4 = tpu.matmul %3, %0, %cst {dimension_numbers = #tpu.dot_dimension_numbers<[1], [1], [0], [0], [0, 0, 1, 0], [], []>, precision = #tpu.contract_precision<fp32>} : vector<16x16xf32>, vector<128x16xf32>, vector<16x128xf32> -> vector<16x128xf32>
    %5 = vector.extract_strided_slice %2 {offsets = [0, 0], sizes = [16, 1], strides = [1, 1]} : vector<56x1xf32> to vector<16x1xf32>
    %6 = vector.broadcast %5 : vector<16x1xf32> to vector<16x128xf32>
    %7 = arith.addf %4, %6 : vector<16x128xf32>
    %cst_5 = arith.constant 0.000000e+00 : f32
    %8 = vector.broadcast %cst_5 : f32 to vector<16x128xf32>
    %9 = arith.maximumf %7, %8 : vector<16x128xf32>
    %10 = vector.extract_strided_slice %1 {offsets = [16, 0], sizes = [8, 16], strides = [1, 1]} : vector<56x16xf32> to vector<8x16xf32>
    %11 = vector.extract_strided_slice %2 {offsets = [16, 0], sizes = [8, 1], strides = [1, 1]} : vector<56x1xf32> to vector<8x1xf32>
    %cst_6 = arith.constant dense<0.000000e+00> : vector<8x128xf32>
    %12 = tpu.matmul %10, %9, %cst_6 {dimension_numbers = #tpu.dot_dimension_numbers<[1], [0], [0], [1], [0, 0, 1, 1], [], []>, precision = #tpu.contract_precision<fp32>} : vector<8x16xf32>, vector<16x128xf32>, vector<8x128xf32> -> vector<8x128xf32>
    %13 = vector.broadcast %11 : vector<8x1xf32> to vector<8x128xf32>
    %14 = arith.addf %12, %13 : vector<8x128xf32>
    %cst_7 = arith.constant 0.000000e+00 : f32
    %15 = vector.broadcast %cst_7 : f32 to vector<8x128xf32>
    %16 = arith.maximumf %14, %15 : vector<8x128xf32>
    %17 = vector.extract_strided_slice %1 {offsets = [24, 0], sizes = [8, 8], strides = [1, 1]} : vector<56x16xf32> to vector<8x8xf32>
    %18 = vector.extract_strided_slice %2 {offsets = [24, 0], sizes = [8, 1], strides = [1, 1]} : vector<56x1xf32> to vector<8x1xf32>
    %cst_8 = arith.constant dense<0.000000e+00> : vector<8x128xf32>
    %19 = tpu.matmul %17, %16, %cst_8 {dimension_numbers = #tpu.dot_dimension_numbers<[1], [0], [0], [1], [0, 0, 1, 1], [], []>, precision = #tpu.contract_precision<fp32>} : vector<8x8xf32>, vector<8x128xf32>, vector<8x128xf32> -> vector<8x128xf32>
    %20 = vector.broadcast %18 : vector<8x1xf32> to vector<8x128xf32>
    %21 = arith.addf %19, %20 : vector<8x128xf32>
    %cst_9 = arith.constant 0.000000e+00 : f32
    %22 = vector.broadcast %cst_9 : f32 to vector<8x128xf32>
    %23 = arith.maximumf %21, %22 : vector<8x128xf32>
    %24 = vector.extract_strided_slice %1 {offsets = [32, 0], sizes = [8, 8], strides = [1, 1]} : vector<56x16xf32> to vector<8x8xf32>
    %25 = vector.extract_strided_slice %2 {offsets = [32, 0], sizes = [8, 1], strides = [1, 1]} : vector<56x1xf32> to vector<8x1xf32>
    %cst_10 = arith.constant dense<0.000000e+00> : vector<8x128xf32>
    %26 = tpu.matmul %24, %23, %cst_10 {dimension_numbers = #tpu.dot_dimension_numbers<[1], [0], [0], [1], [0, 0, 1, 1], [], []>, precision = #tpu.contract_precision<fp32>} : vector<8x8xf32>, vector<8x128xf32>, vector<8x128xf32> -> vector<8x128xf32>
    %27 = vector.broadcast %25 : vector<8x1xf32> to vector<8x128xf32>
    %28 = arith.addf %26, %27 : vector<8x128xf32>
    %cst_11 = arith.constant 0.000000e+00 : f32
    %29 = vector.broadcast %cst_11 : f32 to vector<8x128xf32>
    %30 = arith.maximumf %28, %29 : vector<8x128xf32>
    %31 = vector.extract_strided_slice %1 {offsets = [40, 0], sizes = [8, 8], strides = [1, 1]} : vector<56x16xf32> to vector<8x8xf32>
    %32 = vector.extract_strided_slice %2 {offsets = [40, 0], sizes = [8, 1], strides = [1, 1]} : vector<56x1xf32> to vector<8x1xf32>
    %cst_12 = arith.constant dense<0.000000e+00> : vector<8x128xf32>
    %33 = tpu.matmul %31, %30, %cst_12 {dimension_numbers = #tpu.dot_dimension_numbers<[1], [0], [0], [1], [0, 0, 1, 1], [], []>, precision = #tpu.contract_precision<fp32>} : vector<8x8xf32>, vector<8x128xf32>, vector<8x128xf32> -> vector<8x128xf32>
    %34 = vector.broadcast %32 : vector<8x1xf32> to vector<8x128xf32>
    %35 = arith.addf %33, %34 : vector<8x128xf32>
    %cst_13 = arith.constant 0.000000e+00 : f32
    %36 = vector.broadcast %cst_13 : f32 to vector<8x128xf32>
    %37 = arith.maximumf %35, %36 : vector<8x128xf32>
    %38 = vector.extract_strided_slice %1 {offsets = [48, 0], sizes = [8, 8], strides = [1, 1]} : vector<56x16xf32> to vector<8x8xf32>
    %39 = vector.extract_strided_slice %2 {offsets = [48, 0], sizes = [8, 1], strides = [1, 1]} : vector<56x1xf32> to vector<8x1xf32>
    %cst_14 = arith.constant dense<0.000000e+00> : vector<8x128xf32>
    %40 = tpu.matmul %38, %37, %cst_14 {dimension_numbers = #tpu.dot_dimension_numbers<[1], [0], [0], [1], [0, 0, 1, 1], [], []>, precision = #tpu.contract_precision<fp32>} : vector<8x8xf32>, vector<8x128xf32>, vector<8x128xf32> -> vector<8x128xf32>
    %41 = vector.broadcast %39 : vector<8x1xf32> to vector<8x128xf32>
    %42 = arith.addf %40, %41 : vector<8x128xf32>
    %43 = vector.extract_strided_slice %42 {offsets = [0, 0], sizes = [1, 128], strides = [1, 1]} : vector<8x128xf32> to vector<1x128xf32>
    %44 = arith.negf %43 : vector<1x128xf32>
    %45 = math.exp %44 : vector<1x128xf32>
    %cst_15 = arith.constant 1.000000e+00 : f32
    %46 = vector.broadcast %cst_15 : f32 to vector<1x128xf32>
    %47 = arith.addf %46, %45 : vector<1x128xf32>
    %48 = arith.divf %46, %47 : vector<1x128xf32>
    %c0_16 = arith.constant 0 : index
    %c0_17 = arith.constant 0 : index
    %49 = vector.load %arg4[%c0_16, %c0_17] : memref<1x128xf32, #tpu.memory_space<vmem>>, vector<1x128xf32>
    tpu.vector_store %arg4[%c0_16, %c0_17], %48 {strides = array<i32>} : memref<1x128xf32, #tpu.memory_space<vmem>>, vector<1x128xf32>,
    return
  }
  func.func @transform_0(%arg0: i32) -> (i32, i32) {
    %c0_i32 = arith.constant 0 : i32
    %c0_i32_0 = arith.constant 0 : i32
    return %arg0, %c0_i32 : i32, i32
  }
  func.func @transform_1(%arg0: i32) -> (i32, i32) {
    %c0_i32 = arith.constant 0 : i32
    %c0_i32_0 = arith.constant 0 : i32
    %c0_i32_1 = arith.constant 0 : i32
    return %c0_i32, %c0_i32_0 : i32, i32
  }
  func.func @transform_2(%arg0: i32) -> (i32, i32) {
    %c0_i32 = arith.constant 0 : i32
    %c0_i32_0 = arith.constant 0 : i32
    %c0_i32_1 = arith.constant 0 : i32
    return %c0_i32, %c0_i32_0 : i32, i32
  }
  func.func @transform_3(%arg0: i32) -> (i32, i32) {
    %c0_i32 = arith.constant 0 : i32
    %c0_i32_0 = arith.constant 0 : i32
    return %c0_i32, %arg0 : i32, i32
  }
}

</mosaic_0001>

<llo_original>
// kernel: _forward_packed.1
$region0: #{_forward_packed.1}
  #allocation0 [shape = 'u32[]', space=smem, size = 0x4, offset = 0x4, fixed_abs, tag = 'smem constant byte address 0x4 - core index']
  #allocation1 [shape = 'u32[144,128]{1,0:T(1,128)}', space=vmem, size = 0x12000, scoped, tag = 'internal scratch']
  %s0 = inlined_call_operand.hbm [shape: f32[8,16], index: 0, kind: input, shape index: {}]
  %s1 = inlined_call_operand.hbm [shape: f32[56,16], index: 1, kind: input, shape index: {}]
  %s2 = inlined_call_operand.hbm [shape: f32[56,1], index: 2, kind: input, shape index: {}]
  %s3 = inlined_call_operand.vmem [shape: f32[1,128], index: 3, kind: output, shape index: {}]
  %s4 = sld [smem:[#allocation0]]
  $region34: #{_forward_packed.1} parent=0
    _
  %s6 = ssub.s32 1, %s4
  %s7 = scalar_select 0, %s6, %s4
  $region1: #{_forward_packed.1} parent=0
    #allocation2 [shape = 'u8[65536]{0}', space=vmem, size = 0x10000, scoped, tag = 'input window, operand 0, single buffered']
    #allocation3 [shape = 's32[1]{0}', space=sflag, size = 0x4, scoped, tag = 'scoped memory for _forward_packed.1']
    #allocation4 [shape = 'u8[28672]{0}', space=vmem, size = 0x7000, scoped, tag = 'input window, operand 1, single buffered']
    #allocation5 [shape = 's32[1]{0}', space=sflag, size = 0x4, scoped, tag = 'scoped memory for _forward_packed.1']
    #allocation6 [shape = 'u8[28672]{0}', space=vmem, size = 0x7000, scoped, tag = 'input window, operand 2, single buffered']
    %8 = vsyncpa [#allocation3], 0
    %9 = vsyncpa [#allocation5], 0
    // Predicated region
    $region2: #{_forward_packed.1} parent=1 // pred_check
      _
    $region3: #{_forward_packed.1} parent=1 // pred_check_branch
      %11 = sbr.rel (0) target = $region5
    $region4: #{_forward_packed.1} parent=1 // pred_region
      %s13 = ssub.s32 2048, 128
      %14 = vsyncadd [#allocation3], %s13
      %s15 = sshll.u32 [#allocation2], 4
      %s16 = int_to_ptr.vmem [resolvable:$true] %s15
      %21 = dma.hbm_to_vmem [thread:$0]  %s0, 128, %s16, [#allocation3], 128, 128, 8
    $region5: #{_forward_packed.1} parent=1 // pred_fallthru
      _
    // Predicated region
    $region6: #{_forward_packed.1} parent=1 // pred_check
      _
    $region7: #{_forward_packed.1} parent=1 // pred_check_branch
      %23 = sbr.rel (0) target = $region9
    $region8: #{_forward_packed.1} parent=1 // pred_region
      %s25 = ssub.s32 896, 896
      %26 = vsyncadd [#allocation5], %s25
      %s27 = sshll.u32 [#allocation4], 4
      %s28 = int_to_ptr.vmem [resolvable:$true] %s27
      %33 = dma.hbm_to_vmem [thread:$0]  %s1, 896, %s28, [#allocation5], 128, 128, 8
    $region9: #{_forward_packed.1} parent=1 // pred_fallthru
      _
    // Predicated region
    $region10: #{_forward_packed.1} parent=1 // pred_check
      _
    $region11: #{_forward_packed.1} parent=1 // pred_check_branch
      %35 = sbr.rel (0) target = $region13
    $region12: #{_forward_packed.1} parent=1 // pred_region
      %s37 = ssub.s32 896, 896
      %38 = vsyncadd [#allocation5], %s37
      %s39 = sshll.u32 [#allocation6], 4
      %s40 = int_to_ptr.vmem [resolvable:$true] %s39
      %45 = dma.hbm_to_vmem [thread:$0]  %s2, 896, %s40, [#allocation5], 128, 128, 8
    $region13: #{_forward_packed.1} parent=1 // pred_fallthru
      _
    // Predicated region
    $region14: #{_forward_packed.1} parent=1 // pred_check
      _
    $region15: #{_forward_packed.1} parent=1 // pred_check_branch
      %47 = sbr.rel (0) target = $region17
    $region16: #{_forward_packed.1} parent=1 // pred_region
      %48 = dma.done [#allocation3], 2048
    $region17: #{_forward_packed.1} parent=1 // pred_fallthru
      _
    // Predicated region
    $region18: #{_forward_packed.1} parent=1 // pred_check
      _
    $region19: #{_forward_packed.1} parent=1 // pred_check_branch
      %50 = sbr.rel (0) target = $region21
    $region20: #{_forward_packed.1} parent=1 // pred_region
      %51 = dma.done [#allocation5], 896
    $region21: #{_forward_packed.1} parent=1 // pred_fallthru
      _
    // Predicated region
    $region22: #{_forward_packed.1} parent=1 // pred_check
      _
    $region23: #{_forward_packed.1} parent=1 // pred_check_branch
      %53 = sbr.rel (0) target = $region25
    $region24: #{_forward_packed.1} parent=1 // pred_region
      %54 = dma.done [#allocation5], 896
    $region25: #{_forward_packed.1} parent=1 // pred_fallthru
      _
    %v55 = vld [vmem:[#allocation2] sm:$0xff]
    %v56 = vld [vmem:[#allocation2 + $0x8] sm:$0xff]
    %v57 = vld [vmem:[#allocation2 + $0x10] sm:$0xff]
    %v58 = vld [vmem:[#allocation2 + $0x18] sm:$0xff]
    %v59 = vld [vmem:[#allocation2 + $0x20] sm:$0xff]
    %v60 = vld [vmem:[#allocation2 + $0x28] sm:$0xff]
    %v61 = vld [vmem:[#allocation2 + $0x30] sm:$0xff]
    %v62 = vld [vmem:[#allocation2 + $0x38] sm:$0xff]
    %v63 = vld [vmem:[#allocation2 + $0x40] sm:$0xff]
    %v64 = vld [vmem:[#allocation2 + $0x48] sm:$0xff]
    %v65 = vld [vmem:[#allocation2 + $0x50] sm:$0xff]
    %v66 = vld [vmem:[#allocation2 + $0x58] sm:$0xff]
    %v67 = vld [vmem:[#allocation2 + $0x60] sm:$0xff]
    %v68 = vld [vmem:[#allocation2 + $0x68] sm:$0xff]
    %v69 = vld [vmem:[#allocation2 + $0x70] sm:$0xff]
    %v70 = vld [vmem:[#allocation2 + $0x78] sm:$0xff]
    %v71 = vld [vmem:[#allocation4] sm:$0xff]
    %v72 = vld [vmem:[#allocation4 + $0x8] sm:$0xff]
    %v73 = vld [vmem:[#allocation4 + $0x10] sm:$0xff]
    %v74 = vld [vmem:[#allocation4 + $0x18] sm:$0xff]
    %v75 = vld [vmem:[#allocation4 + $0x20] sm:$0xff]
    %v76 = vld [vmem:[#allocation4 + $0x28] sm:$0xff]
    %v77 = vld [vmem:[#allocation4 + $0x30] sm:$0xff]
    %v78 = vld [vmem:[#allocation6] sm:$0xff]
    %v79 = vld [vmem:[#allocation6 + $0x8] sm:$0xff]
    %v80 = vld [vmem:[#allocation6 + $0x10] sm:$0xff]
    %v81 = vld [vmem:[#allocation6 + $0x18] sm:$0xff]
    %v82 = vld [vmem:[#allocation6 + $0x20] sm:$0xff]
    %v83 = vld [vmem:[#allocation6 + $0x28] sm:$0xff]
    %v84 = vld [vmem:[#allocation6 + $0x30] sm:$0xff]
    %86 = vset.pattern.permute.xlu0 0
    %87 = vperm.xlu0 %86, %v78
    %v88 = vpop.permute.xlu0 %87
    %91 = vset.pattern.permute.xlu0 0
    %92 = vperm.xlu0 %91, %v79
    %v93 = vpop.permute.xlu0 %92
    %vm95 = vcmask 130048
    %v97 = vsel %vm95, %v71, 0
    %v100 = vsel %vm95, %v72, 0
    %v103 = vsel %vm95, %v55, 0
    %v106 = vsel %vm95, %v56, 0
    %v109 = vsel %vm95, %v57, 0
    %v112 = vsel %vm95, %v58, 0
    %v115 = vsel %vm95, %v59, 0
    %v118 = vsel %vm95, %v60, 0
    %v121 = vsel %vm95, %v61, 0
    %v124 = vsel %vm95, %v62, 0
    %v127 = vsel %vm95, %v63, 0
    %v130 = vsel %vm95, %v64, 0
    %v133 = vsel %vm95, %v65, 0
    %v136 = vsel %vm95, %v66, 0
    %v139 = vsel %vm95, %v67, 0
    %v142 = vsel %vm95, %v68, 0
    %v145 = vsel %vm95, %v69, 0
    %v148 = vsel %vm95, %v70, 0
    %150 = vmatprep.subr.mxu0 0.0
    %v151 = vand.u32 %v103, 4294901760
    %152 = vmatpush1.xpose.msra.mxu0 %v151
    %153 = vmatprep.subr.mxu0 0.0
    %v154 = vand.u32 %v106, 4294901760
    %155 = vmatpush1.xpose.msra.mxu0 %v154
    %156 = vmatprep.subr.mxu0 0.0
    %v157 = vand.u32 %v109, 4294901760
    %158 = vmatpush1.xpose.msra.mxu0 %v157
    %159 = vmatprep.subr.mxu0 0.0
    %v160 = vand.u32 %v112, 4294901760
    %161 = vmatpush1.xpose.msra.mxu0 %v160
    %162 = vmatprep.subr.mxu0 0.0
    %v163 = vand.u32 %v115, 4294901760
    %164 = vmatpush1.xpose.msra.mxu0 %v163
    %165 = vmatprep.subr.mxu0 0.0
    %v166 = vand.u32 %v118, 4294901760
    %167 = vmatpush1.xpose.msra.mxu0 %v166
    %168 = vmatprep.subr.mxu0 0.0
    %v169 = vand.u32 %v121, 4294901760
    %170 = vmatpush1.xpose.msra.mxu0 %v169
    %171 = vmatprep.subr.mxu0 0.0
    %v172 = vand.u32 %v124, 4294901760
    %173 = vmatpush1.xpose.msra.mxu0 %v172
    %174 = vmatprep.subr.mxu0 0.0
    %v175 = vand.u32 %v127, 4294901760
    %176 = vmatpush1.xpose.msra.mxu0 %v175
    %177 = vmatprep.subr.mxu0 0.0
    %v178 = vand.u32 %v130, 4294901760
    %179 = vmatpush1.xpose.msra.mxu0 %v178
    %180 = vmatprep.subr.mxu0 0.0
    %v181 = vand.u32 %v133, 4294901760
    %182 = vmatpush1.xpose.msra.mxu0 %v181
    %183 = vmatprep.subr.mxu0 0.0
    %v184 = vand.u32 %v136, 4294901760
    %185 = vmatpush1.xpose.msra.mxu0 %v184
    %186 = vmatprep.subr.mxu0 0.0
    %v187 = vand.u32 %v139, 4294901760
    %188 = vmatpush1.xpose.msra.mxu0 %v187
    %189 = vmatprep.subr.mxu0 0.0
    %v190 = vand.u32 %v142, 4294901760
    %191 = vmatpush1.xpose.msra.mxu0 %v190
    %192 = vmatprep.subr.mxu0 0.0
    %v193 = vand.u32 %v145, 4294901760
    %194 = vmatpush1.xpose.msra.mxu0 %v193
    %195 = vmatprep.subr.mxu0 0.0
    %v196 = vand.u32 %v148, 4294901760
    %197 = vmatpush1.xpose.msra.mxu0 %v196
    %198 = vmatprep.subr.mxu0 0.0
    %199 = vmatpush1.xpose.msra.mxu0 0.0
    %200 = vmatprep.subr.mxu0 0.0
    %201 = vmatpush1.xpose.msra.mxu0 0.0
    %202 = vmatprep.subr.mxu0 0.0
    %203 = vmatpush1.xpose.msra.mxu0 0.0
    %204 = vmatprep.subr.mxu0 0.0
    %205 = vmatpush1.xpose.msra.mxu0 0.0
    %206 = vmatprep.subr.mxu0 0.0
    %207 = vmatpush1.xpose.msra.mxu0 0.0
    %208 = vmatprep.subr.mxu0 0.0
    %209 = vmatpush1.xpose.msra.mxu0 0.0
    %210 = vmatprep.subr.mxu0 0.0
    %211 = vmatpush1.xpose.msra.mxu0 0.0
    %212 = vmatprep.subr.mxu0 0.0
    %213 = vmatpush1.xpose.msra.mxu0 0.0
    %214 = vmatprep.subr.mxu0 0.0
    %215 = vmatpush1.xpose.msra.mxu0 0.0
    %216 = vmatprep.subr.mxu0 0.0
    %217 = vmatpush1.xpose.msra.mxu0 0.0
    %218 = vmatprep.subr.mxu0 0.0
    %219 = vmatpush1.xpose.msra.mxu0 0.0
    %220 = vmatprep.subr.mxu0 0.0
    %221 = vmatpush1.xpose.msra.mxu0 0.0
    %222 = vmatprep.subr.mxu0 0.0
    %223 = vmatpush1.xpose.msra.mxu0 0.0
    %224 = vmatprep.subr.mxu0 0.0
    %225 = vmatpush1.xpose.msra.mxu0 0.0
    %226 = vmatprep.subr.mxu0 0.0
    %227 = vmatpush1.xpose.msra.mxu0 0.0
    %228 = vmatprep.subr.mxu0 0.0
    %229 = vmatpush1.xpose.msra.mxu0 0.0
    %230 = vmatprep.mubr.f32.mxu0 0.0
    %v231 = vand.u32 %v97, 4294901760
    %v232 = vsub.f32 %v97, %v231
    %v233 = vand.u32 %v232, 4294901760
    %v234 = vsub.f32 %v232, %v233
    %v235 = vand.u32 %v234, 4294901760
    %236 = vmatmul.mubr.f32.gmra.mrb[0].mxu0 %v235
    %v237 = vpop.f32.mrb[0].mxu0
    %v238 = vadd.f32 %v88, %v237
    %v239 = vpop.f32.mrb[0].mxu0
    %240 = vmatprep.mubr.f32.mxu0 0.0
    %v241 = vand.u32 %v100, 4294901760
    %v242 = vsub.f32 %v100, %v241
    %v243 = vand.u32 %v242, 4294901760
    %v244 = vsub.f32 %v242, %v243
    %v245 = vand.u32 %v244, 4294901760
    %246 = vmatmul.mubr.f32.gmra.mrb[0].mxu0 %v245
    %v247 = vpop.f32.mrb[0].mxu0
    %v248 = vadd.f32 %v93, %v247
    %v249 = vpop.f32.mrb[0].mxu0
    %250 = vdwg.mxu0
    %251 = vmatprep.subr.mxu0 0.0
    %v252 = vand.u32 %v103, 4294901760
    %v253 = vsub.f32 %v103, %v252
    %v254 = vand.u32 %v253, 4294901760
    %v255 = vsub.f32 %v253, %v254
    %v256 = vand.u32 %v255, 4294901760
    %257 = vmatpush1.xpose.msra.mxu0 %v256
    %258 = vmatprep.subr.mxu0 0.0
    %v259 = vand.u32 %v106, 4294901760
    %v260 = vsub.f32 %v106, %v259
    %v261 = vand.u32 %v260, 4294901760
    %v262 = vsub.f32 %v260, %v261
    %v263 = vand.u32 %v262, 4294901760
    %264 = vmatpush1.xpose.msra.mxu0 %v263
    %265 = vmatprep.subr.mxu0 0.0
    %v266 = vand.u32 %v109, 4294901760
    %v267 = vsub.f32 %v109, %v266
    %v268 = vand.u32 %v267, 4294901760
    %v269 = vsub.f32 %v267, %v268
    %v270 = vand.u32 %v269, 4294901760
    %271 = vmatpush1.xpose.msra.mxu0 %v270
    %272 = vmatprep.subr.mxu0 0.0
    %v273 = vand.u32 %v112, 4294901760
    %v274 = vsub.f32 %v112, %v273
    %v275 = vand.u32 %v274, 4294901760
    %v276 = vsub.f32 %v274, %v275
    %v277 = vand.u32 %v276, 4294901760
    %278 = vmatpush1.xpose.msra.mxu0 %v277
    %279 = vmatprep.subr.mxu0 0.0
    %v280 = vand.u32 %v115, 4294901760
    %v281 = vsub.f32 %v115, %v280
    %v282 = vand.u32 %v281, 4294901760
    %v283 = vsub.f32 %v281, %v282
    %v284 = vand.u32 %v283, 4294901760
    %285 = vmatpush1.xpose.msra.mxu0 %v284
    %286 = vmatprep.subr.mxu0 0.0
    %v287 = vand.u32 %v118, 4294901760
    %v288 = vsub.f32 %v118, %v287
    %v289 = vand.u32 %v288, 4294901760
    %v290 = vsub.f32 %v288, %v289
    %v291 = vand.u32 %v290, 4294901760
    %292 = vmatpush1.xpose.msra.mxu0 %v291
    %293 = vmatprep.subr.mxu0 0.0
    %v294 = vand.u32 %v121, 4294901760
    %v295 = vsub.f32 %v121, %v294
    %v296 = vand.u32 %v295, 4294901760
    %v297 = vsub.f32 %v295, %v296
    %v298 = vand.u32 %v297, 4294901760
    %299 = vmatpush1.xpose.msra.mxu0 %v298
    %300 = vmatprep.subr.mxu0 0.0
    %v301 = vand.u32 %v124, 4294901760
    %v302 = vsub.f32 %v124, %v301
    %v303 = vand.u32 %v302, 4294901760
    %v304 = vsub.f32 %v302, %v303
    %v305 = vand.u32 %v304, 4294901760
    %306 = vmatpush1.xpose.msra.mxu0 %v305
    %307 = vmatprep.subr.mxu0 0.0
    %v308 = vand.u32 %v127, 4294901760
    %v309 = vsub.f32 %v127, %v308
    %v310 = vand.u32 %v309, 4294901760
    %v311 = vsub.f32 %v309, %v310
    %v312 = vand.u32 %v311, 4294901760
    %313 = vmatpush1.xpose.msra.mxu0 %v312
    %314 = vmatprep.subr.mxu0 0.0
    %v315 = vand.u32 %v130, 4294901760
    %v316 = vsub.f32 %v130, %v315
    %v317 = vand.u32 %v316, 4294901760
    %v318 = vsub.f32 %v316, %v317
    %v319 = vand.u32 %v318, 4294901760
    %320 = vmatpush1.xpose.msra.mxu0 %v319
    %321 = vmatprep.subr.mxu0 0.0
    %v322 = vand.u32 %v133, 4294901760
    %v323 = vsub.f32 %v133, %v322
    %v324 = vand.u32 %v323, 4294901760
    %v325 = vsub.f32 %v323, %v324
    %v326 = vand.u32 %v325, 4294901760
    %327 = vmatpush1.xpose.msra.mxu0 %v326
    %328 = vmatprep.subr.mxu0 0.0
    %v329 = vand.u32 %v136, 4294901760
    %v330 = vsub.f32 %v136, %v329
    %v331 = vand.u32 %v330, 4294901760
    %v332 = vsub.f32 %v330, %v331
    %v333 = vand.u32 %v332, 4294901760
    %334 = vmatpush1.xpose.msra.mxu0 %v333
    %335 = vmatprep.subr.mxu0 0.0
    %v336 = vand.u32 %v139, 4294901760
    %v337 = vsub.f32 %v139, %v336
    %v338 = vand.u32 %v337, 4294901760
    %v339 = vsub.f32 %v337, %v338
    %v340 = vand.u32 %v339, 4294901760
    %341 = vmatpush1.xpose.msra.mxu0 %v340
    %342 = vmatprep.subr.mxu0 0.0
    %v343 = vand.u32 %v142, 4294901760
    %v344 = vsub.f32 %v142, %v343
    %v345 = vand.u32 %v344, 4294901760
    %v346 = vsub.f32 %v344, %v345
    %v347 = vand.u32 %v346, 4294901760
    %348 = vmatpush1.xpose.msra.mxu0 %v347
    %349 = vmatprep.subr.mxu0 0.0
    %v350 = vand.u32 %v145, 4294901760
    %v351 = vsub.f32 %v145, %v350
    %v352 = vand.u32 %v351, 4294901760
    %v353 = vsub.f32 %v351, %v352
    %v354 = vand.u32 %v353, 4294901760
    %355 = vmatpush1.xpose.msra.mxu0 %v354
    %356 = vmatprep.subr.mxu0 0.0
    %v357 = vand.u32 %v148, 4294901760
    %v358 = vsub.f32 %v148, %v357
    %v359 = vand.u32 %v358, 4294901760
    %v360 = vsub.f32 %v358, %v359
    %v361 = vand.u32 %v360, 4294901760
    %362 = vmatpush1.xpose.msra.mxu0 %v361
    %363 = vmatprep.subr.mxu0 0.0
    %364 = vmatpush1.xpose.msra.mxu0 0.0
    %365 = vmatprep.subr.mxu0 0.0
    %366 = vmatpush1.xpose.msra.mxu0 0.0
    %367 = vmatprep.subr.mxu0 0.0
    %368 = vmatpush1.xpose.msra.mxu0 0.0
    %369 = vmatprep.subr.mxu0 0.0
    %370 = vmatpush1.xpose.msra.mxu0 0.0
    %371 = vmatprep.subr.mxu0 0.0
    %372 = vmatpush1.xpose.msra.mxu0 0.0
    %373 = vmatprep.subr.mxu0 0.0
    %374 = vmatpush1.xpose.msra.mxu0 0.0
    %375 = vmatprep.subr.mxu0 0.0
    %376 = vmatpush1.xpose.msra.mxu0 0.0
    %377 = vmatprep.subr.mxu0 0.0
    %378 = vmatpush1.xpose.msra.mxu0 0.0
    %379 = vmatprep.subr.mxu0 0.0
    %380 = vmatpush1.xpose.msra.mxu0 0.0
    %381 = vmatprep.subr.mxu0 0.0
    %382 = vmatpush1.xpose.msra.mxu0 0.0
    %383 = vmatprep.subr.mxu0 0.0
    %384 = vmatpush1.xpose.msra.mxu0 0.0
    %385 = vmatprep.subr.mxu0 0.0
    %386 = vmatpush1.xpose.msra.mxu0 0.0
    %387 = vmatprep.subr.mxu0 0.0
    %388 = vmatpush1.xpose.msra.mxu0 0.0
    %389 = vmatprep.subr.mxu0 0.0
    %390 = vmatpush1.xpose.msra.mxu0 0.0
    %391 = vmatprep.subr.mxu0 0.0
    %392 = vmatpush1.xpose.msra.mxu0 0.0
    %393 = vmatprep.subr.mxu0 0.0
    %394 = vmatpush1.xpose.msra.mxu0 0.0
    %395 = vmatprep.mubr.f32.mxu0 0.0
    %v396 = vand.u32 %v97, 4294901760
    %397 = vmatmul.mubr.f32.gmra.mrb[0].mxu0 %v396
    %v398 = vpop.f32.mrb[0].mxu0
    %v399 = vadd.f32 %v238, %v398
    %v400 = vpop.f32.mrb[0].mxu0
    %401 = vmatprep.mubr.f32.mxu0 0.0
    %v402 = vand.u32 %v100, 4294901760
    %403 = vmatmul.mubr.f32.gmra.mrb[0].mxu0 %v402
    %v404 = vpop.f32.mrb[0].mxu0
    %v405 = vadd.f32 %v248, %v404
    %v406 = vpop.f32.mrb[0].mxu0
    %407 = vdwg.mxu0
    %408 = vmatprep.subr.mxu0 0.0
    %v409 = vand.u32 %v103, 4294901760
    %v410 = vsub.f32 %v103, %v409
    %411 = vmatpush1.xpose.msra.mxu0 %v410
    %412 = vmatprep.subr.mxu0 0.0
    %v413 = vand.u32 %v106, 4294901760
    %v414 = vsub.f32 %v106, %v413
    %415 = vmatpush1.xpose.msra.mxu0 %v414
    %416 = vmatprep.subr.mxu0 0.0
    %v417 = vand.u32 %v109, 4294901760
    %v418 = vsub.f32 %v109, %v417
    %419 = vmatpush1.xpose.msra.mxu0 %v418
    %420 = vmatprep.subr.mxu0 0.0
    %v421 = vand.u32 %v112, 4294901760
    %v422 = vsub.f32 %v112, %v421
    %423 = vmatpush1.xpose.msra.mxu0 %v422
    %424 = vmatprep.subr.mxu0 0.0
    %v425 = vand.u32 %v115, 4294901760
    %v426 = vsub.f32 %v115, %v425
    %427 = vmatpush1.xpose.msra.mxu0 %v426
    %428 = vmatprep.subr.mxu0 0.0
    %v429 = vand.u32 %v118, 4294901760
    %v430 = vsub.f32 %v118, %v429
    %431 = vmatpush1.xpose.msra.mxu0 %v430
    %432 = vmatprep.subr.mxu0 0.0
    %v433 = vand.u32 %v121, 4294901760
    %v434 = vsub.f32 %v121, %v433
    %435 = vmatpush1.xpose.msra.mxu0 %v434
    %436 = vmatprep.subr.mxu0 0.0
    %v437 = vand.u32 %v124, 4294901760
    %v438 = vsub.f32 %v124, %v437
    %439 = vmatpush1.xpose.msra.mxu0 %v438
    %440 = vmatprep.subr.mxu0 0.0
    %v441 = vand.u32 %v127, 4294901760
    %v442 = vsub.f32 %v127, %v441
    %443 = vmatpush1.xpose.msra.mxu0 %v442
    %444 = vmatprep.subr.mxu0 0.0
    %v445 = vand.u32 %v130, 4294901760
    %v446 = vsub.f32 %v130, %v445
    %447 = vmatpush1.xpose.msra.mxu0 %v446
    %448 = vmatprep.subr.mxu0 0.0
    %v449 = vand.u32 %v133, 4294901760
    %v450 = vsub.f32 %v133, %v449
    %451 = vmatpush1.xpose.msra.mxu0 %v450
    %452 = vmatprep.subr.mxu0 0.0
    %v453 = vand.u32 %v136, 4294901760
    %v454 = vsub.f32 %v136, %v453
    %455 = vmatpush1.xpose.msra.mxu0 %v454
    %456 = vmatprep.subr.mxu0 0.0
    %v457 = vand.u32 %v139, 4294901760
    %v458 = vsub.f32 %v139, %v457
    %459 = vmatpush1.xpose.msra.mxu0 %v458
    %460 = vmatprep.subr.mxu0 0.0
    %v461 = vand.u32 %v142, 4294901760
    %v462 = vsub.f32 %v142, %v461
    %463 = vmatpush1.xpose.msra.mxu0 %v462
    %464 = vmatprep.subr.mxu0 0.0
    %v465 = vand.u32 %v145, 4294901760
    %v466 = vsub.f32 %v145, %v465
    %467 = vmatpush1.xpose.msra.mxu0 %v466
    %468 = vmatprep.subr.mxu0 0.0
    %v469 = vand.u32 %v148, 4294901760
    %v470 = vsub.f32 %v148, %v469
    %471 = vmatpush1.xpose.msra.mxu0 %v470
    %472 = vmatprep.subr.mxu0 0.0
    %473 = vmatpush1.xpose.msra.mxu0 0.0
    %474 = vmatprep.subr.mxu0 0.0
    %475 = vmatpush1.xpose.msra.mxu0 0.0
    %476 = vmatprep.subr.mxu0 0.0
    %477 = vmatpush1.xpose.msra.mxu0 0.0
    %478 = vmatprep.subr.mxu0 0.0
    %479 = vmatpush1.xpose.msra.mxu0 0.0
    %480 = vmatprep.subr.mxu0 0.0
    %481 = vmatpush1.xpose.msra.mxu0 0.0
    %482 = vmatprep.subr.mxu0 0.0
    %483 = vmatpush1.xpose.msra.mxu0 0.0
    %484 = vmatprep.subr.mxu0 0.0
    %485 = vmatpush1.xpose.msra.mxu0 0.0
    %486 = vmatprep.subr.mxu0 0.0
    %487 = vmatpush1.xpose.msra.mxu0 0.0
    %488 = vmatprep.subr.mxu0 0.0
    %489 = vmatpush1.xpose.msra.mxu0 0.0
    %490 = vmatprep.subr.mxu0 0.0
    %491 = vmatpush1.xpose.msra.mxu0 0.0
    %492 = vmatprep.subr.mxu0 0.0
    %493 = vmatpush1.xpose.msra.mxu0 0.0
    %494 = vmatprep.subr.mxu0 0.0
    %495 = vmatpush1.xpose.msra.mxu0 0.0
    %496 = vmatprep.subr.mxu0 0.0
    %497 = vmatpush1.xpose.msra.mxu0 0.0
    %498 = vmatprep.subr.mxu0 0.0
    %499 = vmatpush1.xpose.msra.mxu0 0.0
    %500 = vmatprep.subr.mxu0 0.0
    %501 = vmatpush1.xpose.msra.mxu0 0.0
    %502 = vmatprep.subr.mxu0 0.0
    %503 = vmatpush1.xpose.msra.mxu0 0.0
    %504 = vmatprep.mubr.f32.mxu0 0.0
    %v505 = vand.u32 %v97, 4294901760
    %v506 = vsub.f32 %v97, %v505
    %507 = vmatmul.mubr.f32.gmra.mrb[0].mxu0 %v506
    %v508 = vpop.f32.mrb[0].mxu0
    %v509 = vadd.f32 %v399, %v508
    %v510 = vpop.f32.mrb[0].mxu0
    %511 = vmatprep.mubr.f32.mxu0 0.0
    %v512 = vand.u32 %v100, 4294901760
    %v513 = vsub.f32 %v100, %v512
    %514 = vmatmul.mubr.f32.gmra.mrb[0].mxu0 %v513
    %v515 = vpop.f32.mrb[0].mxu0
    %v516 = vadd.f32 %v405, %v515
    %v517 = vpop.f32.mrb[0].mxu0
    %518 = vdwg.mxu0
    %519 = vmatprep.subr.mxu0 0.0
    %v520 = vand.u32 %v103, 4294901760
    %521 = vmatpush1.xpose.msra.mxu0 %v520
    %522 = vmatprep.subr.mxu0 0.0
    %v523 = vand.u32 %v106, 4294901760
    %524 = vmatpush1.xpose.msra.mxu0 %v523
    %525 = vmatprep.subr.mxu0 0.0
    %v526 = vand.u32 %v109, 4294901760
    %527 = vmatpush1.xpose.msra.mxu0 %v526
    %528 = vmatprep.subr.mxu0 0.0
    %v529 = vand.u32 %v112, 4294901760
    %530 = vmatpush1.xpose.msra.mxu0 %v529
    %531 = vmatprep.subr.mxu0 0.0
    %v532 = vand.u32 %v115, 4294901760
    %533 = vmatpush1.xpose.msra.mxu0 %v532
    %534 = vmatprep.subr.mxu0 0.0
    %v535 = vand.u32 %v118, 4294901760
    %536 = vmatpush1.xpose.msra.mxu0 %v535
    %537 = vmatprep.subr.mxu0 0.0
    %v538 = vand.u32 %v121, 4294901760
    %539 = vmatpush1.xpose.msra.mxu0 %v538
    %540 = vmatprep.subr.mxu0 0.0
    %v541 = vand.u32 %v124, 4294901760
    %542 = vmatpush1.xpose.msra.mxu0 %v541
    %543 = vmatprep.subr.mxu0 0.0
    %v544 = vand.u32 %v127, 4294901760
    %545 = vmatpush1.xpose.msra.mxu0 %v544
    %546 = vmatprep.subr.mxu0 0.0
    %v547 = vand.u32 %v130, 4294901760
    %548 = vmatpush1.xpose.msra.mxu0 %v547
    %549 = vmatprep.subr.mxu0 0.0
    %v550 = vand.u32 %v133, 4294901760
    %551 = vmatpush1.xpose.msra.mxu0 %v550
    %552 = vmatprep.subr.mxu0 0.0
    %v553 = vand.u32 %v136, 4294901760
    %554 = vmatpush1.xpose.msra.mxu0 %v553
    %555 = vmatprep.subr.mxu0 0.0
    %v556 = vand.u32 %v139, 4294901760
    %557 = vmatpush1.xpose.msra.mxu0 %v556
    %558 = vmatprep.subr.mxu0 0.0
    %v559 = vand.u32 %v142, 4294901760
    %560 = vmatpush1.xpose.msra.mxu0 %v559
    %561 = vmatprep.subr.mxu0 0.0
    %v562 = vand.u32 %v145, 4294901760
    %563 = vmatpush1.xpose.msra.mxu0 %v562
    %564 = vmatprep.subr.mxu0 0.0
    %v565 = vand.u32 %v148, 4294901760
    %566 = vmatpush1.xpose.msra.mxu0 %v565
    %567 = vmatprep.subr.mxu0 0.0
    %568 = vmatpush1.xpose.msra.mxu0 0.0
    %569 = vmatprep.subr.mxu0 0.0
    %570 = vmatpush1.xpose.msra.mxu0 0.0
    %571 = vmatprep.subr.mxu0 0.0
    %572 = vmatpush1.xpose.msra.mxu0 0.0
    %573 = vmatprep.subr.mxu0 0.0
    %574 = vmatpush1.xpose.msra.mxu0 0.0
    %575 = vmatprep.subr.mxu0 0.0
    %576 = vmatpush1.xpose.msra.mxu0 0.0
    %577 = vmatprep.subr.mxu0 0.0
    %578 = vmatpush1.xpose.msra.mxu0 0.0
    %579 = vmatprep.subr.mxu0 0.0
    %580 = vmatpush1.xpose.msra.mxu0 0.0
    %581 = vmatprep.subr.mxu0 0.0
    %582 = vmatpush1.xpose.msra.mxu0 0.0
    %583 = vmatprep.subr.mxu0 0.0
    %584 = vmatpush1.xpose.msra.mxu0 0.0
    %585 = vmatprep.subr.mxu0 0.0
    %586 = vmatpush1.xpose.msra.mxu0 0.0
    %587 = vmatprep.subr.mxu0 0.0
    %588 = vmatpush1.xpose.msra.mxu0 0.0
    %589 = vmatprep.subr.mxu0 0.0
    %590 = vmatpush1.xpose.msra.mxu0 0.0
    %591 = vmatprep.subr.mxu0 0.0
    %592 = vmatpush1.xpose.msra.mxu0 0.0
    %593 = vmatprep.subr.mxu0 0.0
    %594 = vmatpush1.xpose.msra.mxu0 0.0
    %595 = vmatprep.subr.mxu0 0.0
    %596 = vmatpush1.xpose.msra.mxu0 0.0
    %597 = vmatprep.subr.mxu0 0.0
    %598 = vmatpush1.xpose.msra.mxu0 0.0
    %599 = vmatprep.mubr.f32.mxu0 0.0
    %v600 = vand.u32 %v97, 4294901760
    %v601 = vsub.f32 %v97, %v600
    %v602 = vand.u32 %v601, 4294901760
    %603 = vmatmul.mubr.f32.gmra.mrb[0].mxu0 %v602
    %v604 = vpop.f32.mrb[0].mxu0
    %v605 = vadd.f32 %v509, %v604
    %v606 = vpop.f32.mrb[0].mxu0
    %607 = vmatprep.mubr.f32.mxu0 0.0
    %v608 = vand.u32 %v100, 4294901760
    %v609 = vsub.f32 %v100, %v608
    %v610 = vand.u32 %v609, 4294901760
    %611 = vmatmul.mubr.f32.gmra.mrb[0].mxu0 %v610
    %v612 = vpop.f32.mrb[0].mxu0
    %v613 = vadd.f32 %v516, %v612
    %v614 = vpop.f32.mrb[0].mxu0
    %615 = vdwg.mxu0
    %616 = vmatprep.subr.mxu0 0.0
    %v617 = vand.u32 %v103, 4294901760
    %v618 = vsub.f32 %v103, %v617
    %v619 = vand.u32 %v618, 4294901760
    %620 = vmatpush1.xpose.msra.mxu0 %v619
    %621 = vmatprep.subr.mxu0 0.0
    %v622 = vand.u32 %v106, 4294901760
    %v623 = vsub.f32 %v106, %v622
    %v624 = vand.u32 %v623, 4294901760
    %625 = vmatpush1.xpose.msra.mxu0 %v624
    %626 = vmatprep.subr.mxu0 0.0
    %v627 = vand.u32 %v109, 4294901760
    %v628 = vsub.f32 %v109, %v627
    %v629 = vand.u32 %v628, 4294901760
    %630 = vmatpush1.xpose.msra.mxu0 %v629
    %631 = vmatprep.subr.mxu0 0.0
    %v632 = vand.u32 %v112, 4294901760
    %v633 = vsub.f32 %v112, %v632
    %v634 = vand.u32 %v633, 4294901760
    %635 = vmatpush1.xpose.msra.mxu0 %v634
    %636 = vmatprep.subr.mxu0 0.0
    %v637 = vand.u32 %v115, 4294901760
    %v638 = vsub.f32 %v115, %v637
    %v639 = vand.u32 %v638, 4294901760
    %640 = vmatpush1.xpose.msra.mxu0 %v639
    %641 = vmatprep.subr.mxu0 0.0
    %v642 = vand.u32 %v118, 4294901760
    %v643 = vsub.f32 %v118, %v642
    %v644 = vand.u32 %v643, 4294901760
    %645 = vmatpush1.xpose.msra.mxu0 %v644
    %646 = vmatprep.subr.mxu0 0.0
    %v647 = vand.u32 %v121, 4294901760
    %v648 = vsub.f32 %v121, %v647
    %v649 = vand.u32 %v648, 4294901760
    %650 = vmatpush1.xpose.msra.mxu0 %v649
    %651 = vmatprep.subr.mxu0 0.0
    %v652 = vand.u32 %v124, 4294901760
    %v653 = vsub.f32 %v124, %v652
    %v654 = vand.u32 %v653, 4294901760
    %655 = vmatpush1.xpose.msra.mxu0 %v654
    %656 = vmatprep.subr.mxu0 0.0
    %v657 = vand.u32 %v127, 4294901760
    %v658 = vsub.f32 %v127, %v657
    %v659 = vand.u32 %v658, 4294901760
    %660 = vmatpush1.xpose.msra.mxu0 %v659
    %661 = vmatprep.subr.mxu0 0.0
    %v662 = vand.u32 %v130, 4294901760
    %v663 = vsub.f32 %v130, %v662
    %v664 = vand.u32 %v663, 4294901760
    %665 = vmatpush1.xpose.msra.mxu0 %v664
    %666 = vmatprep.subr.mxu0 0.0
    %v667 = vand.u32 %v133, 4294901760
    %v668 = vsub.f32 %v133, %v667
    %v669 = vand.u32 %v668, 4294901760
    %670 = vmatpush1.xpose.msra.mxu0 %v669
    %671 = vmatprep.subr.mxu0 0.0
    %v672 = vand.u32 %v136, 4294901760
    %v673 = vsub.f32 %v136, %v672
    %v674 = vand.u32 %v673, 4294901760
    %675 = vmatpush1.xpose.msra.mxu0 %v674
    %676 = vmatprep.subr.mxu0 0.0
    %v677 = vand.u32 %v139, 4294901760
    %v678 = vsub.f32 %v139, %v677
    %v679 = vand.u32 %v678, 4294901760
    %680 = vmatpush1.xpose.msra.mxu0 %v679
    %681 = vmatprep.subr.mxu0 0.0
    %v682 = vand.u32 %v142, 4294901760
    %v683 = vsub.f32 %v142, %v682
    %v684 = vand.u32 %v683, 4294901760
    %685 = vmatpush1.xpose.msra.mxu0 %v684
    %686 = vmatprep.subr.mxu0 0.0
    %v687 = vand.u32 %v145, 4294901760
    %v688 = vsub.f32 %v145, %v687
    %v689 = vand.u32 %v688, 4294901760
    %690 = vmatpush1.xpose.msra.mxu0 %v689
    %691 = vmatprep.subr.mxu0 0.0
    %v692 = vand.u32 %v148, 4294901760
    %v693 = vsub.f32 %v148, %v692
    %v694 = vand.u32 %v693, 4294901760
    %695 = vmatpush1.xpose.msra.mxu0 %v694
    %696 = vmatprep.subr.mxu0 0.0
    %697 = vmatpush1.xpose.msra.mxu0 0.0
    %698 = vmatprep.subr.mxu0 0.0
    %699 = vmatpush1.xpose.msra.mxu0 0.0
    %700 = vmatprep.subr.mxu0 0.0
    %701 = vmatpush1.xpose.msra.mxu0 0.0
    %702 = vmatprep.subr.mxu0 0.0
    %703 = vmatpush1.xpose.msra.mxu0 0.0
    %704 = vmatprep.subr.mxu0 0.0
    %705 = vmatpush1.xpose.msra.mxu0 0.0
    %706 = vmatprep.subr.mxu0 0.0
    %707 = vmatpush1.xpose.msra.mxu0 0.0
    %708 = vmatprep.subr.mxu0 0.0
    %709 = vmatpush1.xpose.msra.mxu0 0.0
    %710 = vmatprep.subr.mxu0 0.0
    %711 = vmatpush1.xpose.msra.mxu0 0.0
    %712 = vmatprep.subr.mxu0 0.0
    %713 = vmatpush1.xpose.msra.mxu0 0.0
    %714 = vmatprep.subr.mxu0 0.0
    %715 = vmatpush1.xpose.msra.mxu0 0.0
    %716 = vmatprep.subr.mxu0 0.0
    %717 = vmatpush1.xpose.msra.mxu0 0.0
    %718 = vmatprep.subr.mxu0 0.0
    %719 = vmatpush1.xpose.msra.mxu0 0.0
    %720 = vmatprep.subr.mxu0 0.0
    %721 = vmatpush1.xpose.msra.mxu0 0.0
    %722 = vmatprep.subr.mxu0 0.0
    %723 = vmatpush1.xpose.msra.mxu0 0.0
    %724 = vmatprep.subr.mxu0 0.0
    %725 = vmatpush1.xpose.msra.mxu0 0.0
    %726 = vmatprep.subr.mxu0 0.0
    %727 = vmatpush1.xpose.msra.mxu0 0.0
    %728 = vmatprep.mubr.f32.mxu0 0.0
    %v729 = vand.u32 %v97, 4294901760
    %730 = vmatmul.mubr.f32.gmra.mrb[0].mxu0 %v729
    %v731 = vpop.f32.mrb[0].mxu0
    %v732 = vadd.f32 %v605, %v731
    %v733 = vpop.f32.mrb[0].mxu0
    %734 = vmatprep.mubr.f32.mxu0 0.0
    %v735 = vand.u32 %v100, 4294901760
    %736 = vmatmul.mubr.f32.gmra.mrb[0].mxu0 %v735
    %v737 = vpop.f32.mrb[0].mxu0
    %v738 = vadd.f32 %v613, %v737
    %v739 = vpop.f32.mrb[0].mxu0
    %740 = vdwg.mxu0
    %741 = vmatprep.subr.mxu0 0.0
    %v742 = vand.u32 %v103, 4294901760
    %743 = vmatpush1.xpose.msra.mxu0 %v742
    %744 = vmatprep.subr.mxu0 0.0
    %v745 = vand.u32 %v106, 4294901760
    %746 = vmatpush1.xpose.msra.mxu0 %v745
    %747 = vmatprep.subr.mxu0 0.0
    %v748 = vand.u32 %v109, 4294901760
    %749 = vmatpush1.xpose.msra.mxu0 %v748
    %750 = vmatprep.subr.mxu0 0.0
    %v751 = vand.u32 %v112, 4294901760
    %752 = vmatpush1.xpose.msra.mxu0 %v751
    %753 = vmatprep.subr.mxu0 0.0
    %v754 = vand.u32 %v115, 4294901760
    %755 = vmatpush1.xpose.msra.mxu0 %v754
    %756 = vmatprep.subr.mxu0 0.0
    %v757 = vand.u32 %v118, 4294901760
    %758 = vmatpush1.xpose.msra.mxu0 %v757
    %759 = vmatprep.subr.mxu0 0.0
    %v760 = vand.u32 %v121, 4294901760
    %761 = vmatpush1.xpose.msra.mxu0 %v760
    %762 = vmatprep.subr.mxu0 0.0
    %v763 = vand.u32 %v124, 4294901760
    %764 = vmatpush1.xpose.msra.mxu0 %v763
    %765 = vmatprep.subr.mxu0 0.0
    %v766 = vand.u32 %v127, 4294901760
    %767 = vmatpush1.xpose.msra.mxu0 %v766
    %768 = vmatprep.subr.mxu0 0.0
    %v769 = vand.u32 %v130, 4294901760
    %770 = vmatpush1.xpose.msra.mxu0 %v769
    %771 = vmatprep.subr.mxu0 0.0
    %v772 = vand.u32 %v133, 4294901760
    %773 = vmatpush1.xpose.msra.mxu0 %v772
    %774 = vmatprep.subr.mxu0 0.0
    %v775 = vand.u32 %v136, 4294901760
    %776 = vmatpush1.xpose.msra.mxu0 %v775
    %777 = vmatprep.subr.mxu0 0.0
    %v778 = vand.u32 %v139, 4294901760
    %779 = vmatpush1.xpose.msra.mxu0 %v778
    %780 = vmatprep.subr.mxu0 0.0
    %v781 = vand.u32 %v142, 4294901760
    %782 = vmatpush1.xpose.msra.mxu0 %v781
    %783 = vmatprep.subr.mxu0 0.0
    %v784 = vand.u32 %v145, 4294901760
    %785 = vmatpush1.xpose.msra.mxu0 %v784
    %786 = vmatprep.subr.mxu0 0.0
    %v787 = vand.u32 %v148, 4294901760
    %788 = vmatpush1.xpose.msra.mxu0 %v787
    %789 = vmatprep.subr.mxu0 0.0
    %790 = vmatpush1.xpose.msra.mxu0 0.0
    %791 = vmatprep.subr.mxu0 0.0
    %792 = vmatpush1.xpose.msra.mxu0 0.0
    %793 = vmatprep.subr.mxu0 0.0
    %794 = vmatpush1.xpose.msra.mxu0 0.0
    %795 = vmatprep.subr.mxu0 0.0
    %796 = vmatpush1.xpose.msra.mxu0 0.0
    %797 = vmatprep.subr.mxu0 0.0
    %798 = vmatpush1.xpose.msra.mxu0 0.0
    %799 = vmatprep.subr.mxu0 0.0
    %800 = vmatpush1.xpose.msra.mxu0 0.0
    %801 = vmatprep.subr.mxu0 0.0
    %802 = vmatpush1.xpose.msra.mxu0 0.0
    %803 = vmatprep.subr.mxu0 0.0
    %804 = vmatpush1.xpose.msra.mxu0 0.0
    %805 = vmatprep.subr.mxu0 0.0
    %806 = vmatpush1.xpose.msra.mxu0 0.0
    %807 = vmatprep.subr.mxu0 0.0
    %808 = vmatpush1.xpose.msra.mxu0 0.0
    %809 = vmatprep.subr.mxu0 0.0
    %810 = vmatpush1.xpose.msra.mxu0 0.0
    %811 = vmatprep.subr.mxu0 0.0
    %812 = vmatpush1.xpose.msra.mxu0 0.0
    %813 = vmatprep.subr.mxu0 0.0
    %814 = vmatpush1.xpose.msra.mxu0 0.0
    %815 = vmatprep.subr.mxu0 0.0
    %816 = vmatpush1.xpose.msra.mxu0 0.0
    %817 = vmatprep.subr.mxu0 0.0
    %818 = vmatpush1.xpose.msra.mxu0 0.0
    %819 = vmatprep.subr.mxu0 0.0
    %820 = vmatpush1.xpose.msra.mxu0 0.0
    %821 = vmatprep.mubr.f32.mxu0 0.0
    %v822 = vand.u32 %v97, 4294901760
    %823 = vmatmul.mubr.f32.gmra.mrb[0].mxu0 %v822
    %v824 = vpop.f32.mrb[0].mxu0
    %v825 = vadd.f32 %v732, %v824
    %v826 = vpop.f32.mrb[0].mxu0
    %827 = vmatprep.mubr.f32.mxu0 0.0
    %v828 = vand.u32 %v100, 4294901760
    %829 = vmatmul.mubr.f32.gmra.mrb[0].mxu0 %v828
    %v830 = vpop.f32.mrb[0].mxu0
    %v831 = vadd.f32 %v738, %v830
    %v832 = vpop.f32.mrb[0].mxu0
    %833 = vdwg.mxu0
    %v834 = vmax.f32 %v825, 0.0
    %v835 = vmax.f32 %v831, 0.0
    %837 = vset.pattern.permute.xlu0 0
    %838 = vperm.xlu0 %837, %v80
    %v839 = vpop.permute.xlu0 %838
    %v842 = vsel %vm95, %v73, 0
    %844 = vmatprep.subr.mxu0 0.0
    %v845 = vand.u32 %v834, 4294901760
    %846 = vmatpush1.msra.mxu0 %v845
    %847 = vmatprep.subr.mxu0 0.0
    %v848 = vand.u32 %v835, 4294901760
    %849 = vmatpush1.msra.mxu0 %v848
    %850 = vmatprep.subr.mxu0 0.0
    %851 = vmatpush1.msra.mxu0 0.0
    %852 = vmatprep.subr.mxu0 0.0
    %853 = vmatpush1.msra.mxu0 0.0
    %854 = vmatprep.subr.mxu0 0.0
    %855 = vmatpush1.msra.mxu0 0.0
    %856 = vmatprep.subr.mxu0 0.0
    %857 = vmatpush1.msra.mxu0 0.0
    %858 = vmatprep.subr.mxu0 0.0
    %859 = vmatpush1.msra.mxu0 0.0
    %860 = vmatprep.subr.mxu0 0.0
    %861 = vmatpush1.msra.mxu0 0.0
    %862 = vmatprep.subr.mxu0 0.0
    %863 = vmatpush1.msra.mxu0 0.0
    %864 = vmatprep.subr.mxu0 0.0
    %865 = vmatpush1.msra.mxu0 0.0
    %866 = vmatprep.subr.mxu0 0.0
    %867 = vmatpush1.msra.mxu0 0.0
    %868 = vmatprep.subr.mxu0 0.0
    %869 = vmatpush1.msra.mxu0 0.0
    %870 = vmatprep.subr.mxu0 0.0
    %871 = vmatpush1.msra.mxu0 0.0
    %872 = vmatprep.subr.mxu0 0.0
    %873 = vmatpush1.msra.mxu0 0.0
    %874 = vmatprep.subr.mxu0 0.0
    %875 = vmatpush1.msra.mxu0 0.0
    %876 = vmatprep.subr.mxu0 0.0
    %877 = vmatpush1.msra.mxu0 0.0
    %878 = vmatprep.subr.mxu0 0.0
    %879 = vmatpush1.msra.mxu0 0.0
    %880 = vmatprep.subr.mxu0 0.0
    %881 = vmatpush1.msra.mxu0 0.0
    %882 = vmatprep.subr.mxu0 0.0
    %883 = vmatpush1.msra.mxu0 0.0
    %884 = vmatprep.subr.mxu0 0.0
    %885 = vmatpush1.msra.mxu0 0.0
    %886 = vmatprep.subr.mxu0 0.0
    %887 = vmatpush1.msra.mxu0 0.0
    %888 = vmatprep.subr.mxu0 0.0
    %889 = vmatpush1.msra.mxu0 0.0
    %890 = vmatprep.subr.mxu0 0.0
    %891 = vmatpush1.msra.mxu0 0.0
    %892 = vmatprep.subr.mxu0 0.0
    %893 = vmatpush1.msra.mxu0 0.0
    %894 = vmatprep.subr.mxu0 0.0
    %895 = vmatpush1.msra.mxu0 0.0
    %896 = vmatprep.subr.mxu0 0.0
    %897 = vmatpush1.msra.mxu0 0.0
    %898 = vmatprep.subr.mxu0 0.0
    %899 = vmatpush1.msra.mxu0 0.0
    %900 = vmatprep.subr.mxu0 0.0
    %901 = vmatpush1.msra.mxu0 0.0
    %902 = vmatprep.subr.mxu0 0.0
    %903 = vmatpush1.msra.mxu0 0.0
    %904 = vmatprep.subr.mxu0 0.0
    %905 = vmatpush1.msra.mxu0 0.0
    %906 = vmatprep.subr.mxu0 0.0
    %907 = vmatpush1.msra.mxu0 0.0
    %908 = vmatprep.subr.mxu0 0.0
    %909 = vmatpush1.msra.mxu0 0.0
    %910 = vmatprep.mubr.f32.mxu0 0.0
    %v911 = vand.u32 %v842, 4294901760
    %v912 = vsub.f32 %v842, %v911
    %v913 = vand.u32 %v912, 4294901760
    %v914 = vsub.f32 %v912, %v913
    %v915 = vand.u32 %v914, 4294901760
    %916 = vmatmul.mubr.f32.gmra.mrb[0].mxu0 %v915
    %v917 = vpop.f32.mrb[0].mxu0
    %v918 = vadd.f32 %v839, %v917
    %v919 = vpop.f32.mrb[0].mxu0
    %920 = vdwg.mxu0
    %921 = vmatprep.subr.mxu0 0.0
    %v922 = vand.u32 %v834, 4294901760
    %v923 = vsub.f32 %v834, %v922
    %v924 = vand.u32 %v923, 4294901760
    %v925 = vsub.f32 %v923, %v924
    %v926 = vand.u32 %v925, 4294901760
    %927 = vmatpush1.msra.mxu0 %v926
    %928 = vmatprep.subr.mxu0 0.0
    %v929 = vand.u32 %v835, 4294901760
    %v930 = vsub.f32 %v835, %v929
    %v931 = vand.u32 %v930, 4294901760
    %v932 = vsub.f32 %v930, %v931
    %v933 = vand.u32 %v932, 4294901760
    %934 = vmatpush1.msra.mxu0 %v933
    %935 = vmatprep.subr.mxu0 0.0
    %936 = vmatpush1.msra.mxu0 0.0
    %937 = vmatprep.subr.mxu0 0.0
    %938 = vmatpush1.msra.mxu0 0.0
    %939 = vmatprep.subr.mxu0 0.0
    %940 = vmatpush1.msra.mxu0 0.0
    %941 = vmatprep.subr.mxu0 0.0
    %942 = vmatpush1.msra.mxu0 0.0
    %943 = vmatprep.subr.mxu0 0.0
    %944 = vmatpush1.msra.mxu0 0.0
    %945 = vmatprep.subr.mxu0 0.0
    %946 = vmatpush1.msra.mxu0 0.0
    %947 = vmatprep.subr.mxu0 0.0
    %948 = vmatpush1.msra.mxu0 0.0
    %949 = vmatprep.subr.mxu0 0.0
    %950 = vmatpush1.msra.mxu0 0.0
    %951 = vmatprep.subr.mxu0 0.0
    %952 = vmatpush1.msra.mxu0 0.0
    %953 = vmatprep.subr.mxu0 0.0
    %954 = vmatpush1.msra.mxu0 0.0
    %955 = vmatprep.subr.mxu0 0.0
    %956 = vmatpush1.msra.mxu0 0.0
    %957 = vmatprep.subr.mxu0 0.0
    %958 = vmatpush1.msra.mxu0 0.0
    %959 = vmatprep.subr.mxu0 0.0
    %960 = vmatpush1.msra.mxu0 0.0
    %961 = vmatprep.subr.mxu0 0.0
    %962 = vmatpush1.msra.mxu0 0.0
    %963 = vmatprep.subr.mxu0 0.0
    %964 = vmatpush1.msra.mxu0 0.0
    %965 = vmatprep.subr.mxu0 0.0
    %966 = vmatpush1.msra.mxu0 0.0
    %967 = vmatprep.subr.mxu0 0.0
    %968 = vmatpush1.msra.mxu0 0.0
    %969 = vmatprep.subr.mxu0 0.0
    %970 = vmatpush1.msra.mxu0 0.0
    %971 = vmatprep.subr.mxu0 0.0
    %972 = vmatpush1.msra.mxu0 0.0
    %973 = vmatprep.subr.mxu0 0.0
    %974 = vmatpush1.msra.mxu0 0.0
    %975 = vmatprep.subr.mxu0 0.0
    %976 = vmatpush1.msra.mxu0 0.0
    %977 = vmatprep.subr.mxu0 0.0
    %978 = vmatpush1.msra.mxu0 0.0
    %979 = vmatprep.subr.mxu0 0.0
    %980 = vmatpush1.msra.mxu0 0.0
    %981 = vmatprep.subr.mxu0 0.0
    %982 = vmatpush1.msra.mxu0 0.0
    %983 = vmatprep.subr.mxu0 0.0
    %984 = vmatpush1.msra.mxu0 0.0
    %985 = vmatprep.subr.mxu0 0.0
    %986 = vmatpush1.msra.mxu0 0.0
    %987 = vmatprep.subr.mxu0 0.0
    %988 = vmatpush1.msra.mxu0 0.0
    %989 = vmatprep.subr.mxu0 0.0
    %990 = vmatpush1.msra.mxu0 0.0
    %991 = vmatprep.subr.mxu0 0.0
    %992 = vmatpush1.msra.mxu0 0.0
    %993 = vmatprep.subr.mxu0 0.0
    %994 = vmatpush1.msra.mxu0 0.0
    %995 = vmatprep.mubr.f32.mxu0 0.0
    %v996 = vand.u32 %v842, 4294901760
    %997 = vmatmul.mubr.f32.gmra.mrb[0].mxu0 %v996
    %v998 = vpop.f32.mrb[0].mxu0
    %v999 = vadd.f32 %v918, %v998
    %v1000 = vpop.f32.mrb[0].mxu0
    %1001 = vdwg.mxu0
    %1002 = vmatprep.subr.mxu0 0.0
    %v1003 = vand.u32 %v834, 4294901760
    %v1004 = vsub.f32 %v834, %v1003
    %1005 = vmatpush1.msra.mxu0 %v1004
    %1006 = vmatprep.subr.mxu0 0.0
    %v1007 = vand.u32 %v835, 4294901760
    %v1008 = vsub.f32 %v835, %v1007
    %1009 = vmatpush1.msra.mxu0 %v1008
    %1010 = vmatprep.subr.mxu0 0.0
    %1011 = vmatpush1.msra.mxu0 0.0
    %1012 = vmatprep.subr.mxu0 0.0
    %1013 = vmatpush1.msra.mxu0 0.0
    %1014 = vmatprep.subr.mxu0 0.0
    %1015 = vmatpush1.msra.mxu0 0.0
    %1016 = vmatprep.subr.mxu0 0.0
    %1017 = vmatpush1.msra.mxu0 0.0
    %1018 = vmatprep.subr.mxu0 0.0
    %1019 = vmatpush1.msra.mxu0 0.0
    %1020 = vmatprep.subr.mxu0 0.0
    %1021 = vmatpush1.msra.mxu0 0.0
    %1022 = vmatprep.subr.mxu0 0.0
    %1023 = vmatpush1.msra.mxu0 0.0
    %1024 = vmatprep.subr.mxu0 0.0
    %1025 = vmatpush1.msra.mxu0 0.0
    %1026 = vmatprep.subr.mxu0 0.0
    %1027 = vmatpush1.msra.mxu0 0.0
    %1028 = vmatprep.subr.mxu0 0.0
    %1029 = vmatpush1.msra.mxu0 0.0
    %1030 = vmatprep.subr.mxu0 0.0
    %1031 = vmatpush1.msra.mxu0 0.0
    %1032 = vmatprep.subr.mxu0 0.0
    %1033 = vmatpush1.msra.mxu0 0.0
    %1034 = vmatprep.subr.mxu0 0.0
    %1035 = vmatpush1.msra.mxu0 0.0
    %1036 = vmatprep.subr.mxu0 0.0
    %1037 = vmatpush1.msra.mxu0 0.0
    %1038 = vmatprep.subr.mxu0 0.0
    %1039 = vmatpush1.msra.mxu0 0.0
    %1040 = vmatprep.subr.mxu0 0.0
    %1041 = vmatpush1.msra.mxu0 0.0
    %1042 = vmatprep.subr.mxu0 0.0
    %1043 = vmatpush1.msra.mxu0 0.0
    %1044 = vmatprep.subr.mxu0 0.0
    %1045 = vmatpush1.msra.mxu0 0.0
    %1046 = vmatprep.subr.mxu0 0.0
    %1047 = vmatpush1.msra.mxu0 0.0
    %1048 = vmatprep.subr.mxu0 0.0
    %1049 = vmatpush1.msra.mxu0 0.0
    %1050 = vmatprep.subr.mxu0 0.0
    %1051 = vmatpush1.msra.mxu0 0.0
    %1052 = vmatprep.subr.mxu0 0.0
    %1053 = vmatpush1.msra.mxu0 0.0
    %1054 = vmatprep.subr.mxu0 0.0
    %1055 = vmatpush1.msra.mxu0 0.0
    %1056 = vmatprep.subr.mxu0 0.0
    %1057 = vmatpush1.msra.mxu0 0.0
    %1058 = vmatprep.subr.mxu0 0.0
    %1059 = vmatpush1.msra.mxu0 0.0
    %1060 = vmatprep.subr.mxu0 0.0
    %1061 = vmatpush1.msra.mxu0 0.0
    %1062 = vmatprep.subr.mxu0 0.0
    %1063 = vmatpush1.msra.mxu0 0.0
    %1064 = vmatprep.subr.mxu0 0.0
    %1065 = vmatpush1.msra.mxu0 0.0
    %1066 = vmatprep.subr.mxu0 0.0
    %1067 = vmatpush1.msra.mxu0 0.0
    %1068 = vmatprep.subr.mxu0 0.0
    %1069 = vmatpush1.msra.mxu0 0.0
    %1070 = vmatprep.mubr.f32.mxu0 0.0
    %v1071 = vand.u32 %v842, 4294901760
    %v1072 = vsub.f32 %v842, %v1071
    %1073 = vmatmul.mubr.f32.gmra.mrb[0].mxu0 %v1072
    %v1074 = vpop.f32.mrb[0].mxu0
    %v1075 = vadd.f32 %v999, %v1074
    %v1076 = vpop.f32.mrb[0].mxu0
    %1077 = vdwg.mxu0
    %1078 = vmatprep.subr.mxu0 0.0
    %v1079 = vand.u32 %v834, 4294901760
    %1080 = vmatpush1.msra.mxu0 %v1079
    %1081 = vmatprep.subr.mxu0 0.0
    %v1082 = vand.u32 %v835, 4294901760
    %1083 = vmatpush1.msra.mxu0 %v1082
    %1084 = vmatprep.subr.mxu0 0.0
    %1085 = vmatpush1.msra.mxu0 0.0
    %1086 = vmatprep.subr.mxu0 0.0
    %1087 = vmatpush1.msra.mxu0 0.0
    %1088 = vmatprep.subr.mxu0 0.0
    %1089 = vmatpush1.msra.mxu0 0.0
    %1090 = vmatprep.subr.mxu0 0.0
    %1091 = vmatpush1.msra.mxu0 0.0
    %1092 = vmatprep.subr.mxu0 0.0
    %1093 = vmatpush1.msra.mxu0 0.0
    %1094 = vmatprep.subr.mxu0 0.0
    %1095 = vmatpush1.msra.mxu0 0.0
    %1096 = vmatprep.subr.mxu0 0.0
    %1097 = vmatpush1.msra.mxu0 0.0
    %1098 = vmatprep.subr.mxu0 0.0
    %1099 = vmatpush1.msra.mxu0 0.0
    %1100 = vmatprep.subr.mxu0 0.0
    %1101 = vmatpush1.msra.mxu0 0.0
    %1102 = vmatprep.subr.mxu0 0.0
    %1103 = vmatpush1.msra.mxu0 0.0
    %1104 = vmatprep.subr.mxu0 0.0
    %1105 = vmatpush1.msra.mxu0 0.0
    %1106 = vmatprep.subr.mxu0 0.0
    %1107 = vmatpush1.msra.mxu0 0.0
    %1108 = vmatprep.subr.mxu0 0.0
    %1109 = vmatpush1.msra.mxu0 0.0
    %1110 = vmatprep.subr.mxu0 0.0
    %1111 = vmatpush1.msra.mxu0 0.0
    %1112 = vmatprep.subr.mxu0 0.0
    %1113 = vmatpush1.msra.mxu0 0.0
    %1114 = vmatprep.subr.mxu0 0.0
    %1115 = vmatpush1.msra.mxu0 0.0
    %1116 = vmatprep.subr.mxu0 0.0
    %1117 = vmatpush1.msra.mxu0 0.0
    %1118 = vmatprep.subr.mxu0 0.0
    %1119 = vmatpush1.msra.mxu0 0.0
    %1120 = vmatprep.subr.mxu0 0.0
    %1121 = vmatpush1.msra.mxu0 0.0
    %1122 = vmatprep.subr.mxu0 0.0
    %1123 = vmatpush1.msra.mxu0 0.0
    %1124 = vmatprep.subr.mxu0 0.0
    %1125 = vmatpush1.msra.mxu0 0.0
    %1126 = vmatprep.subr.mxu0 0.0
    %1127 = vmatpush1.msra.mxu0 0.0
    %1128 = vmatprep.subr.mxu0 0.0
    %1129 = vmatpush1.msra.mxu0 0.0
    %1130 = vmatprep.subr.mxu0 0.0
    %1131 = vmatpush1.msra.mxu0 0.0
    %1132 = vmatprep.subr.mxu0 0.0
    %1133 = vmatpush1.msra.mxu0 0.0
    %1134 = vmatprep.subr.mxu0 0.0
    %1135 = vmatpush1.msra.mxu0 0.0
    %1136 = vmatprep.subr.mxu0 0.0
    %1137 = vmatpush1.msra.mxu0 0.0
    %1138 = vmatprep.subr.mxu0 0.0
    %1139 = vmatpush1.msra.mxu0 0.0
    %1140 = vmatprep.subr.mxu0 0.0
    %1141 = vmatpush1.msra.mxu0 0.0
    %1142 = vmatprep.subr.mxu0 0.0
    %1143 = vmatpush1.msra.mxu0 0.0
    %1144 = vmatprep.mubr.f32.mxu0 0.0
    %v1145 = vand.u32 %v842, 4294901760
    %v1146 = vsub.f32 %v842, %v1145
    %v1147 = vand.u32 %v1146, 4294901760
    %1148 = vmatmul.mubr.f32.gmra.mrb[0].mxu0 %v1147
    %v1149 = vpop.f32.mrb[0].mxu0
    %v1150 = vadd.f32 %v1075, %v1149
    %v1151 = vpop.f32.mrb[0].mxu0
    %1152 = vdwg.mxu0
    %1153 = vmatprep.subr.mxu0 0.0
    %v1154 = vand.u32 %v834, 4294901760
    %v1155 = vsub.f32 %v834, %v1154
    %v1156 = vand.u32 %v1155, 4294901760
    %1157 = vmatpush1.msra.mxu0 %v1156
    %1158 = vmatprep.subr.mxu0 0.0
    %v1159 = vand.u32 %v835, 4294901760
    %v1160 = vsub.f32 %v835, %v1159
    %v1161 = vand.u32 %v1160, 4294901760
    %1162 = vmatpush1.msra.mxu0 %v1161
    %1163 = vmatprep.subr.mxu0 0.0
    %1164 = vmatpush1.msra.mxu0 0.0
    %1165 = vmatprep.subr.mxu0 0.0
    %1166 = vmatpush1.msra.mxu0 0.0
    %1167 = vmatprep.subr.mxu0 0.0
    %1168 = vmatpush1.msra.mxu0 0.0
    %1169 = vmatprep.subr.mxu0 0.0
    %1170 = vmatpush1.msra.mxu0 0.0
    %1171 = vmatprep.subr.mxu0 0.0
    %1172 = vmatpush1.msra.mxu0 0.0
    %1173 = vmatprep.subr.mxu0 0.0
    %1174 = vmatpush1.msra.mxu0 0.0
    %1175 = vmatprep.subr.mxu0 0.0
    %1176 = vmatpush1.msra.mxu0 0.0
    %1177 = vmatprep.subr.mxu0 0.0
    %1178 = vmatpush1.msra.mxu0 0.0
    %1179 = vmatprep.subr.mxu0 0.0
    %1180 = vmatpush1.msra.mxu0 0.0
    %1181 = vmatprep.subr.mxu0 0.0
    %1182 = vmatpush1.msra.mxu0 0.0
    %1183 = vmatprep.subr.mxu0 0.0
    %1184 = vmatpush1.msra.mxu0 0.0
    %1185 = vmatprep.subr.mxu0 0.0
    %1186 = vmatpush1.msra.mxu0 0.0
    %1187 = vmatprep.subr.mxu0 0.0
    %1188 = vmatpush1.msra.mxu0 0.0
    %1189 = vmatprep.subr.mxu0 0.0
    %1190 = vmatpush1.msra.mxu0 0.0
    %1191 = vmatprep.subr.mxu0 0.0
    %1192 = vmatpush1.msra.mxu0 0.0
    %1193 = vmatprep.subr.mxu0 0.0
    %1194 = vmatpush1.msra.mxu0 0.0
    %1195 = vmatprep.subr.mxu0 0.0
    %1196 = vmatpush1.msra.mxu0 0.0
    %1197 = vmatprep.subr.mxu0 0.0
    %1198 = vmatpush1.msra.mxu0 0.0
    %1199 = vmatprep.subr.mxu0 0.0
    %1200 = vmatpush1.msra.mxu0 0.0
    %1201 = vmatprep.subr.mxu0 0.0
    %1202 = vmatpush1.msra.mxu0 0.0
    %1203 = vmatprep.subr.mxu0 0.0
    %1204 = vmatpush1.msra.mxu0 0.0
    %1205 = vmatprep.subr.mxu0 0.0
    %1206 = vmatpush1.msra.mxu0 0.0
    %1207 = vmatprep.subr.mxu0 0.0
    %1208 = vmatpush1.msra.mxu0 0.0
    %1209 = vmatprep.subr.mxu0 0.0
    %1210 = vmatpush1.msra.mxu0 0.0
    %1211 = vmatprep.subr.mxu0 0.0
    %1212 = vmatpush1.msra.mxu0 0.0
    %1213 = vmatprep.subr.mxu0 0.0
    %1214 = vmatpush1.msra.mxu0 0.0
    %1215 = vmatprep.subr.mxu0 0.0
    %1216 = vmatpush1.msra.mxu0 0.0
    %1217 = vmatprep.subr.mxu0 0.0
    %1218 = vmatpush1.msra.mxu0 0.0
    %1219 = vmatprep.subr.mxu0 0.0
    %1220 = vmatpush1.msra.mxu0 0.0
    %1221 = vmatprep.subr.mxu0 0.0
    %1222 = vmatpush1.msra.mxu0 0.0
    %1223 = vmatprep.mubr.f32.mxu0 0.0
    %v1224 = vand.u32 %v842, 4294901760
    %1225 = vmatmul.mubr.f32.gmra.mrb[0].mxu0 %v1224
    %v1226 = vpop.f32.mrb[0].mxu0
    %v1227 = vadd.f32 %v1150, %v1226
    %v1228 = vpop.f32.mrb[0].mxu0
    %1229 = vdwg.mxu0
    %1230 = vmatprep.subr.mxu0 0.0
    %v1231 = vand.u32 %v834, 4294901760
    %1232 = vmatpush1.msra.mxu0 %v1231
    %1233 = vmatprep.subr.mxu0 0.0
    %v1234 = vand.u32 %v835, 4294901760
    %1235 = vmatpush1.msra.mxu0 %v1234
    %1236 = vmatprep.subr.mxu0 0.0
    %1237 = vmatpush1.msra.mxu0 0.0
    %1238 = vmatprep.subr.mxu0 0.0
    %1239 = vmatpush1.msra.mxu0 0.0
    %1240 = vmatprep.subr.mxu0 0.0
    %1241 = vmatpush1.msra.mxu0 0.0
    %1242 = vmatprep.subr.mxu0 0.0
    %1243 = vmatpush1.msra.mxu0 0.0
    %1244 = vmatprep.subr.mxu0 0.0
    %1245 = vmatpush1.msra.mxu0 0.0
    %1246 = vmatprep.subr.mxu0 0.0
    %1247 = vmatpush1.msra.mxu0 0.0
    %1248 = vmatprep.subr.mxu0 0.0
    %1249 = vmatpush1.msra.mxu0 0.0
    %1250 = vmatprep.subr.mxu0 0.0
    %1251 = vmatpush1.msra.mxu0 0.0
    %1252 = vmatprep.subr.mxu0 0.0
    %1253 = vmatpush1.msra.mxu0 0.0
    %1254 = vmatprep.subr.mxu0 0.0
    %1255 = vmatpush1.msra.mxu0 0.0
    %1256 = vmatprep.subr.mxu0 0.0
    %1257 = vmatpush1.msra.mxu0 0.0
    %1258 = vmatprep.subr.mxu0 0.0
    %1259 = vmatpush1.msra.mxu0 0.0
    %1260 = vmatprep.subr.mxu0 0.0
    %1261 = vmatpush1.msra.mxu0 0.0
    %1262 = vmatprep.subr.mxu0 0.0
    %1263 = vmatpush1.msra.mxu0 0.0
    %1264 = vmatprep.subr.mxu0 0.0
    %1265 = vmatpush1.msra.mxu0 0.0
    %1266 = vmatprep.subr.mxu0 0.0
    %1267 = vmatpush1.msra.mxu0 0.0
    %1268 = vmatprep.subr.mxu0 0.0
    %1269 = vmatpush1.msra.mxu0 0.0
    %1270 = vmatprep.subr.mxu0 0.0
    %1271 = vmatpush1.msra.mxu0 0.0
    %1272 = vmatprep.subr.mxu0 0.0
    %1273 = vmatpush1.msra.mxu0 0.0
    %1274 = vmatprep.subr.mxu0 0.0
    %1275 = vmatpush1.msra.mxu0 0.0
    %1276 = vmatprep.subr.mxu0 0.0
    %1277 = vmatpush1.msra.mxu0 0.0
    %1278 = vmatprep.subr.mxu0 0.0
    %1279 = vmatpush1.msra.mxu0 0.0
    %1280 = vmatprep.subr.mxu0 0.0
    %1281 = vmatpush1.msra.mxu0 0.0
    %1282 = vmatprep.subr.mxu0 0.0
    %1283 = vmatpush1.msra.mxu0 0.0
    %1284 = vmatprep.subr.mxu0 0.0
    %1285 = vmatpush1.msra.mxu0 0.0
    %1286 = vmatprep.subr.mxu0 0.0
    %1287 = vmatpush1.msra.mxu0 0.0
    %1288 = vmatprep.subr.mxu0 0.0
    %1289 = vmatpush1.msra.mxu0 0.0
    %1290 = vmatprep.subr.mxu0 0.0
    %1291 = vmatpush1.msra.mxu0 0.0
    %1292 = vmatprep.subr.mxu0 0.0
    %1293 = vmatpush1.msra.mxu0 0.0
    %1294 = vmatprep.subr.mxu0 0.0
    %1295 = vmatpush1.msra.mxu0 0.0
    %1296 = vmatprep.mubr.f32.mxu0 0.0
    %v1297 = vand.u32 %v842, 4294901760
    %1298 = vmatmul.mubr.f32.gmra.mrb[0].mxu0 %v1297
    %v1299 = vpop.f32.mrb[0].mxu0
    %v1300 = vadd.f32 %v1227, %v1299
    %v1301 = vpop.f32.mrb[0].mxu0
    %1302 = vdwg.mxu0
    %v1303 = vmax.f32 %v1300, 0.0
    %1305 = vset.pattern.permute.xlu0 0
    %1306 = vperm.xlu0 %1305, %v81
    %v1307 = vpop.permute.xlu0 %1306
    %vm1309 = vcmask 64512
    %v1311 = vsel %vm1309, %v74, 0
    %1313 = vmatprep.subr.mxu0 0.0
    %v1314 = vand.u32 %v1303, 4294901760
    %1315 = vmatpush1.msra.mxu0 %v1314
    %1316 = vmatprep.subr.mxu0 0.0
    %1317 = vmatpush1.msra.mxu0 0.0
    %1318 = vmatprep.subr.mxu0 0.0
    %1319 = vmatpush1.msra.mxu0 0.0
    %1320 = vmatprep.subr.mxu0 0.0
    %1321 = vmatpush1.msra.mxu0 0.0
    %1322 = vmatprep.subr.mxu0 0.0
    %1323 = vmatpush1.msra.mxu0 0.0
    %1324 = vmatprep.subr.mxu0 0.0
    %1325 = vmatpush1.msra.mxu0 0.0
    %1326 = vmatprep.subr.mxu0 0.0
    %1327 = vmatpush1.msra.mxu0 0.0
    %1328 = vmatprep.subr.mxu0 0.0
    %1329 = vmatpush1.msra.mxu0 0.0
    %1330 = vmatprep.subr.mxu0 0.0
    %1331 = vmatpush1.msra.mxu0 0.0
    %1332 = vmatprep.subr.mxu0 0.0
    %1333 = vmatpush1.msra.mxu0 0.0
    %1334 = vmatprep.subr.mxu0 0.0
    %1335 = vmatpush1.msra.mxu0 0.0
    %1336 = vmatprep.subr.mxu0 0.0
    %1337 = vmatpush1.msra.mxu0 0.0
    %1338 = vmatprep.subr.mxu0 0.0
    %1339 = vmatpush1.msra.mxu0 0.0
    %1340 = vmatprep.subr.mxu0 0.0
    %1341 = vmatpush1.msra.mxu0 0.0
    %1342 = vmatprep.subr.mxu0 0.0
    %1343 = vmatpush1.msra.mxu0 0.0
    %1344 = vmatprep.subr.mxu0 0.0
    %1345 = vmatpush1.msra.mxu0 0.0
    %1346 = vmatprep.subr.mxu0 0.0
    %1347 = vmatpush1.msra.mxu0 0.0
    %1348 = vmatprep.subr.mxu0 0.0
    %1349 = vmatpush1.msra.mxu0 0.0
    %1350 = vmatprep.subr.mxu0 0.0
    %1351 = vmatpush1.msra.mxu0 0.0
    %1352 = vmatprep.subr.mxu0 0.0
    %1353 = vmatpush1.msra.mxu0 0.0
    %1354 = vmatprep.subr.mxu0 0.0
    %1355 = vmatpush1.msra.mxu0 0.0
    %1356 = vmatprep.subr.mxu0 0.0
    %1357 = vmatpush1.msra.mxu0 0.0
    %1358 = vmatprep.subr.mxu0 0.0
    %1359 = vmatpush1.msra.mxu0 0.0
    %1360 = vmatprep.subr.mxu0 0.0
    %1361 = vmatpush1.msra.mxu0 0.0
    %1362 = vmatprep.subr.mxu0 0.0
    %1363 = vmatpush1.msra.mxu0 0.0
    %1364 = vmatprep.subr.mxu0 0.0
    %1365 = vmatpush1.msra.mxu0 0.0
    %1366 = vmatprep.subr.mxu0 0.0
    %1367 = vmatpush1.msra.mxu0 0.0
    %1368 = vmatprep.subr.mxu0 0.0
    %1369 = vmatpush1.msra.mxu0 0.0
    %1370 = vmatprep.subr.mxu0 0.0
    %1371 = vmatpush1.msra.mxu0 0.0
    %1372 = vmatprep.subr.mxu0 0.0
    %1373 = vmatpush1.msra.mxu0 0.0
    %1374 = vmatprep.subr.mxu0 0.0
    %1375 = vmatpush1.msra.mxu0 0.0
    %1376 = vmatprep.subr.mxu0 0.0
    %1377 = vmatpush1.msra.mxu0 0.0
    %1378 = vmatprep.mubr.f32.mxu0 0.0
    %v1379 = vand.u32 %v1311, 4294901760
    %v1380 = vsub.f32 %v1311, %v1379
    %v1381 = vand.u32 %v1380, 4294901760
    %v1382 = vsub.f32 %v1380, %v1381
    %v1383 = vand.u32 %v1382, 4294901760
    %1384 = vmatmul.mubr.f32.gmra.mrb[0].mxu0 %v1383
    %v1385 = vpop.f32.mrb[0].mxu0
    %v1386 = vadd.f32 %v1307, %v1385
    %v1387 = vpop.f32.mrb[0].mxu0
    %1388 = vdwg.mxu0
    %1389 = vmatprep.subr.mxu0 0.0
    %v1390 = vand.u32 %v1303, 4294901760
    %v1391 = vsub.f32 %v1303, %v1390
    %v1392 = vand.u32 %v1391, 4294901760
    %v1393 = vsub.f32 %v1391, %v1392
    %v1394 = vand.u32 %v1393, 4294901760
    %1395 = vmatpush1.msra.mxu0 %v1394
    %1396 = vmatprep.subr.mxu0 0.0
    %1397 = vmatpush1.msra.mxu0 0.0
    %1398 = vmatprep.subr.mxu0 0.0
    %1399 = vmatpush1.msra.mxu0 0.0
    %1400 = vmatprep.subr.mxu0 0.0
    %1401 = vmatpush1.msra.mxu0 0.0
    %1402 = vmatprep.subr.mxu0 0.0
    %1403 = vmatpush1.msra.mxu0 0.0
    %1404 = vmatprep.subr.mxu0 0.0
    %1405 = vmatpush1.msra.mxu0 0.0
    %1406 = vmatprep.subr.mxu0 0.0
    %1407 = vmatpush1.msra.mxu0 0.0
    %1408 = vmatprep.subr.mxu0 0.0
    %1409 = vmatpush1.msra.mxu0 0.0
    %1410 = vmatprep.subr.mxu0 0.0
    %1411 = vmatpush1.msra.mxu0 0.0
    %1412 = vmatprep.subr.mxu0 0.0
    %1413 = vmatpush1.msra.mxu0 0.0
    %1414 = vmatprep.subr.mxu0 0.0
    %1415 = vmatpush1.msra.mxu0 0.0
    %1416 = vmatprep.subr.mxu0 0.0
    %1417 = vmatpush1.msra.mxu0 0.0
    %1418 = vmatprep.subr.mxu0 0.0
    %1419 = vmatpush1.msra.mxu0 0.0
    %1420 = vmatprep.subr.mxu0 0.0
    %1421 = vmatpush1.msra.mxu0 0.0
    %1422 = vmatprep.subr.mxu0 0.0
    %1423 = vmatpush1.msra.mxu0 0.0
    %1424 = vmatprep.subr.mxu0 0.0
    %1425 = vmatpush1.msra.mxu0 0.0
    %1426 = vmatprep.subr.mxu0 0.0
    %1427 = vmatpush1.msra.mxu0 0.0
    %1428 = vmatprep.subr.mxu0 0.0
    %1429 = vmatpush1.msra.mxu0 0.0
    %1430 = vmatprep.subr.mxu0 0.0
    %1431 = vmatpush1.msra.mxu0 0.0
    %1432 = vmatprep.subr.mxu0 0.0
    %1433 = vmatpush1.msra.mxu0 0.0
    %1434 = vmatprep.subr.mxu0 0.0
    %1435 = vmatpush1.msra.mxu0 0.0
    %1436 = vmatprep.subr.mxu0 0.0
    %1437 = vmatpush1.msra.mxu0 0.0
    %1438 = vmatprep.subr.mxu0 0.0
    %1439 = vmatpush1.msra.mxu0 0.0
    %1440 = vmatprep.subr.mxu0 0.0
    %1441 = vmatpush1.msra.mxu0 0.0
    %1442 = vmatprep.subr.mxu0 0.0
    %1443 = vmatpush1.msra.mxu0 0.0
    %1444 = vmatprep.subr.mxu0 0.0
    %1445 = vmatpush1.msra.mxu0 0.0
    %1446 = vmatprep.subr.mxu0 0.0
    %1447 = vmatpush1.msra.mxu0 0.0
    %1448 = vmatprep.subr.mxu0 0.0
    %1449 = vmatpush1.msra.mxu0 0.0
    %1450 = vmatprep.subr.mxu0 0.0
    %1451 = vmatpush1.msra.mxu0 0.0
    %1452 = vmatprep.subr.mxu0 0.0
    %1453 = vmatpush1.msra.mxu0 0.0
    %1454 = vmatprep.subr.mxu0 0.0
    %1455 = vmatpush1.msra.mxu0 0.0
    %1456 = vmatprep.subr.mxu0 0.0
    %1457 = vmatpush1.msra.mxu0 0.0
    %1458 = vmatprep.mubr.f32.mxu0 0.0
    %v1459 = vand.u32 %v1311, 4294901760
    %1460 = vmatmul.mubr.f32.gmra.mrb[0].mxu0 %v1459
    %v1461 = vpop.f32.mrb[0].mxu0
    %v1462 = vadd.f32 %v1386, %v1461
    %v1463 = vpop.f32.mrb[0].mxu0
    %1464 = vdwg.mxu0
    %1465 = vmatprep.subr.mxu0 0.0
    %v1466 = vand.u32 %v1303, 4294901760
    %v1467 = vsub.f32 %v1303, %v1466
    %1468 = vmatpush1.msra.mxu0 %v1467
    %1469 = vmatprep.subr.mxu0 0.0
    %1470 = vmatpush1.msra.mxu0 0.0
    %1471 = vmatprep.subr.mxu0 0.0
    %1472 = vmatpush1.msra.mxu0 0.0
    %1473 = vmatprep.subr.mxu0 0.0
    %1474 = vmatpush1.msra.mxu0 0.0
    %1475 = vmatprep.subr.mxu0 0.0
    %1476 = vmatpush1.msra.mxu0 0.0
    %1477 = vmatprep.subr.mxu0 0.0
    %1478 = vmatpush1.msra.mxu0 0.0
    %1479 = vmatprep.subr.mxu0 0.0
    %1480 = vmatpush1.msra.mxu0 0.0
    %1481 = vmatprep.subr.mxu0 0.0
    %1482 = vmatpush1.msra.mxu0 0.0
    %1483 = vmatprep.subr.mxu0 0.0
    %1484 = vmatpush1.msra.mxu0 0.0
    %1485 = vmatprep.subr.mxu0 0.0
    %1486 = vmatpush1.msra.mxu0 0.0
    %1487 = vmatprep.subr.mxu0 0.0
    %1488 = vmatpush1.msra.mxu0 0.0
    %1489 = vmatprep.subr.mxu0 0.0
    %1490 = vmatpush1.msra.mxu0 0.0
    %1491 = vmatprep.subr.mxu0 0.0
    %1492 = vmatpush1.msra.mxu0 0.0
    %1493 = vmatprep.subr.mxu0 0.0
    %1494 = vmatpush1.msra.mxu0 0.0
    %1495 = vmatprep.subr.mxu0 0.0
    %1496 = vmatpush1.msra.mxu0 0.0
    %1497 = vmatprep.subr.mxu0 0.0
    %1498 = vmatpush1.msra.mxu0 0.0
    %1499 = vmatprep.subr.mxu0 0.0
    %1500 = vmatpush1.msra.mxu0 0.0
    %1501 = vmatprep.subr.mxu0 0.0
    %1502 = vmatpush1.msra.mxu0 0.0
    %1503 = vmatprep.subr.mxu0 0.0
    %1504 = vmatpush1.msra.mxu0 0.0
    %1505 = vmatprep.subr.mxu0 0.0
    %1506 = vmatpush1.msra.mxu0 0.0
    %1507 = vmatprep.subr.mxu0 0.0
    %1508 = vmatpush1.msra.mxu0 0.0
    %1509 = vmatprep.subr.mxu0 0.0
    %1510 = vmatpush1.msra.mxu0 0.0
    %1511 = vmatprep.subr.mxu0 0.0
    %1512 = vmatpush1.msra.mxu0 0.0
    %1513 = vmatprep.subr.mxu0 0.0
    %1514 = vmatpush1.msra.mxu0 0.0
    %1515 = vmatprep.subr.mxu0 0.0
    %1516 = vmatpush1.msra.mxu0 0.0
    %1517 = vmatprep.subr.mxu0 0.0
    %1518 = vmatpush1.msra.mxu0 0.0
    %1519 = vmatprep.subr.mxu0 0.0
    %1520 = vmatpush1.msra.mxu0 0.0
    %1521 = vmatprep.subr.mxu0 0.0
    %1522 = vmatpush1.msra.mxu0 0.0
    %1523 = vmatprep.subr.mxu0 0.0
    %1524 = vmatpush1.msra.mxu0 0.0
    %1525 = vmatprep.subr.mxu0 0.0
    %1526 = vmatpush1.msra.mxu0 0.0
    %1527 = vmatprep.subr.mxu0 0.0
    %1528 = vmatpush1.msra.mxu0 0.0
    %1529 = vmatprep.subr.mxu0 0.0
    %1530 = vmatpush1.msra.mxu0 0.0
    %1531 = vmatprep.mubr.f32.mxu0 0.0
    %v1532 = vand.u32 %v1311, 4294901760
    %v1533 = vsub.f32 %v1311, %v1532
    %1534 = vmatmul.mubr.f32.gmra.mrb[0].mxu0 %v1533
    %v1535 = vpop.f32.mrb[0].mxu0
    %v1536 = vadd.f32 %v1462, %v1535
    %v1537 = vpop.f32.mrb[0].mxu0
    %1538 = vdwg.mxu0
    %1539 = vmatprep.subr.mxu0 0.0
    %v1540 = vand.u32 %v1303, 4294901760
    %1541 = vmatpush1.msra.mxu0 %v1540
    %1542 = vmatprep.subr.mxu0 0.0
    %1543 = vmatpush1.msra.mxu0 0.0
    %1544 = vmatprep.subr.mxu0 0.0
    %1545 = vmatpush1.msra.mxu0 0.0
    %1546 = vmatprep.subr.mxu0 0.0
    %1547 = vmatpush1.msra.mxu0 0.0
    %1548 = vmatprep.subr.mxu0 0.0
    %1549 = vmatpush1.msra.mxu0 0.0
    %1550 = vmatprep.subr.mxu0 0.0
    %1551 = vmatpush1.msra.mxu0 0.0
    %1552 = vmatprep.subr.mxu0 0.0
    %1553 = vmatpush1.msra.mxu0 0.0
    %1554 = vmatprep.subr.mxu0 0.0
    %1555 = vmatpush1.msra.mxu0 0.0
    %1556 = vmatprep.subr.mxu0 0.0
    %1557 = vmatpush1.msra.mxu0 0.0
    %1558 = vmatprep.subr.mxu0 0.0
    %1559 = vmatpush1.msra.mxu0 0.0
    %1560 = vmatprep.subr.mxu0 0.0
    %1561 = vmatpush1.msra.mxu0 0.0
    %1562 = vmatprep.subr.mxu0 0.0
    %1563 = vmatpush1.msra.mxu0 0.0
    %1564 = vmatprep.subr.mxu0 0.0
    %1565 = vmatpush1.msra.mxu0 0.0
    %1566 = vmatprep.subr.mxu0 0.0
    %1567 = vmatpush1.msra.mxu0 0.0
    %1568 = vmatprep.subr.mxu0 0.0
    %1569 = vmatpush1.msra.mxu0 0.0
    %1570 = vmatprep.subr.mxu0 0.0
    %1571 = vmatpush1.msra.mxu0 0.0
    %1572 = vmatprep.subr.mxu0 0.0
    %1573 = vmatpush1.msra.mxu0 0.0
    %1574 = vmatprep.subr.mxu0 0.0
    %1575 = vmatpush1.msra.mxu0 0.0
    %1576 = vmatprep.subr.mxu0 0.0
    %1577 = vmatpush1.msra.mxu0 0.0
    %1578 = vmatprep.subr.mxu0 0.0
    %1579 = vmatpush1.msra.mxu0 0.0
    %1580 = vmatprep.subr.mxu0 0.0
    %1581 = vmatpush1.msra.mxu0 0.0
    %1582 = vmatprep.subr.mxu0 0.0
    %1583 = vmatpush1.msra.mxu0 0.0
    %1584 = vmatprep.subr.mxu0 0.0
    %1585 = vmatpush1.msra.mxu0 0.0
    %1586 = vmatprep.subr.mxu0 0.0
    %1587 = vmatpush1.msra.mxu0 0.0
    %1588 = vmatprep.subr.mxu0 0.0
    %1589 = vmatpush1.msra.mxu0 0.0
    %1590 = vmatprep.subr.mxu0 0.0
    %1591 = vmatpush1.msra.mxu0 0.0
    %1592 = vmatprep.subr.mxu0 0.0
    %1593 = vmatpush1.msra.mxu0 0.0
    %1594 = vmatprep.subr.mxu0 0.0
    %1595 = vmatpush1.msra.mxu0 0.0
    %1596 = vmatprep.subr.mxu0 0.0
    %1597 = vmatpush1.msra.mxu0 0.0
    %1598 = vmatprep.subr.mxu0 0.0
    %1599 = vmatpush1.msra.mxu0 0.0
    %1600 = vmatprep.subr.mxu0 0.0
    %1601 = vmatpush1.msra.mxu0 0.0
    %1602 = vmatprep.subr.mxu0 0.0
    %1603 = vmatpush1.msra.mxu0 0.0
    %1604 = vmatprep.mubr.f32.mxu0 0.0
    %v1605 = vand.u32 %v1311, 4294901760
    %v1606 = vsub.f32 %v1311, %v1605
    %v1607 = vand.u32 %v1606, 4294901760
    %1608 = vmatmul.mubr.f32.gmra.mrb[0].mxu0 %v1607
    %v1609 = vpop.f32.mrb[0].mxu0
    %v1610 = vadd.f32 %v1536, %v1609
    %v1611 = vpop.f32.mrb[0].mxu0
    %1612 = vdwg.mxu0
    %1613 = vmatprep.subr.mxu0 0.0
    %v1614 = vand.u32 %v1303, 4294901760
    %v1615 = vsub.f32 %v1303, %v1614
    %v1616 = vand.u32 %v1615, 4294901760
    %1617 = vmatpush1.msra.mxu0 %v1616
    %1618 = vmatprep.subr.mxu0 0.0
    %1619 = vmatpush1.msra.mxu0 0.0
    %1620 = vmatprep.subr.mxu0 0.0
    %1621 = vmatpush1.msra.mxu0 0.0
    %1622 = vmatprep.subr.mxu0 0.0
    %1623 = vmatpush1.msra.mxu0 0.0
    %1624 = vmatprep.subr.mxu0 0.0
    %1625 = vmatpush1.msra.mxu0 0.0
    %1626 = vmatprep.subr.mxu0 0.0
    %1627 = vmatpush1.msra.mxu0 0.0
    %1628 = vmatprep.subr.mxu0 0.0
    %1629 = vmatpush1.msra.mxu0 0.0
    %1630 = vmatprep.subr.mxu0 0.0
    %1631 = vmatpush1.msra.mxu0 0.0
    %1632 = vmatprep.subr.mxu0 0.0
    %1633 = vmatpush1.msra.mxu0 0.0
    %1634 = vmatprep.subr.mxu0 0.0
    %1635 = vmatpush1.msra.mxu0 0.0
    %1636 = vmatprep.subr.mxu0 0.0
    %1637 = vmatpush1.msra.mxu0 0.0
    %1638 = vmatprep.subr.mxu0 0.0
    %1639 = vmatpush1.msra.mxu0 0.0
    %1640 = vmatprep.subr.mxu0 0.0
    %1641 = vmatpush1.msra.mxu0 0.0
    %1642 = vmatprep.subr.mxu0 0.0
    %1643 = vmatpush1.msra.mxu0 0.0
    %1644 = vmatprep.subr.mxu0 0.0
    %1645 = vmatpush1.msra.mxu0 0.0
    %1646 = vmatprep.subr.mxu0 0.0
    %1647 = vmatpush1.msra.mxu0 0.0
    %1648 = vmatprep.subr.mxu0 0.0
    %1649 = vmatpush1.msra.mxu0 0.0
    %1650 = vmatprep.subr.mxu0 0.0
    %1651 = vmatpush1.msra.mxu0 0.0
    %1652 = vmatprep.subr.mxu0 0.0
    %1653 = vmatpush1.msra.mxu0 0.0
    %1654 = vmatprep.subr.mxu0 0.0
    %1655 = vmatpush1.msra.mxu0 0.0
    %1656 = vmatprep.subr.mxu0 0.0
    %1657 = vmatpush1.msra.mxu0 0.0
    %1658 = vmatprep.subr.mxu0 0.0
    %1659 = vmatpush1.msra.mxu0 0.0
    %1660 = vmatprep.subr.mxu0 0.0
    %1661 = vmatpush1.msra.mxu0 0.0
    %1662 = vmatprep.subr.mxu0 0.0
    %1663 = vmatpush1.msra.mxu0 0.0
    %1664 = vmatprep.subr.mxu0 0.0
    %1665 = vmatpush1.msra.mxu0 0.0
    %1666 = vmatprep.subr.mxu0 0.0
    %1667 = vmatpush1.msra.mxu0 0.0
    %1668 = vmatprep.subr.mxu0 0.0
    %1669 = vmatpush1.msra.mxu0 0.0
    %1670 = vmatprep.subr.mxu0 0.0
    %1671 = vmatpush1.msra.mxu0 0.0
    %1672 = vmatprep.subr.mxu0 0.0
    %1673 = vmatpush1.msra.mxu0 0.0
    %1674 = vmatprep.subr.mxu0 0.0
    %1675 = vmatpush1.msra.mxu0 0.0
    %1676 = vmatprep.subr.mxu0 0.0
    %1677 = vmatpush1.msra.mxu0 0.0
    %1678 = vmatprep.subr.mxu0 0.0
    %1679 = vmatpush1.msra.mxu0 0.0
    %1680 = vmatprep.mubr.f32.mxu0 0.0
    %v1681 = vand.u32 %v1311, 4294901760
    %1682 = vmatmul.mubr.f32.gmra.mrb[0].mxu0 %v1681
    %v1683 = vpop.f32.mrb[0].mxu0
    %v1684 = vadd.f32 %v1610, %v1683
    %v1685 = vpop.f32.mrb[0].mxu0
    %1686 = vdwg.mxu0
    %1687 = vmatprep.subr.mxu0 0.0
    %v1688 = vand.u32 %v1303, 4294901760
    %1689 = vmatpush1.msra.mxu0 %v1688
    %1690 = vmatprep.subr.mxu0 0.0
    %1691 = vmatpush1.msra.mxu0 0.0
    %1692 = vmatprep.subr.mxu0 0.0
    %1693 = vmatpush1.msra.mxu0 0.0
    %1694 = vmatprep.subr.mxu0 0.0
    %1695 = vmatpush1.msra.mxu0 0.0
    %1696 = vmatprep.subr.mxu0 0.0
    %1697 = vmatpush1.msra.mxu0 0.0
    %1698 = vmatprep.subr.mxu0 0.0
    %1699 = vmatpush1.msra.mxu0 0.0
    %1700 = vmatprep.subr.mxu0 0.0
    %1701 = vmatpush1.msra.mxu0 0.0
    %1702 = vmatprep.subr.mxu0 0.0
    %1703 = vmatpush1.msra.mxu0 0.0
    %1704 = vmatprep.subr.mxu0 0.0
    %1705 = vmatpush1.msra.mxu0 0.0
    %1706 = vmatprep.subr.mxu0 0.0
    %1707 = vmatpush1.msra.mxu0 0.0
    %1708 = vmatprep.subr.mxu0 0.0
    %1709 = vmatpush1.msra.mxu0 0.0
    %1710 = vmatprep.subr.mxu0 0.0
    %1711 = vmatpush1.msra.mxu0 0.0
    %1712 = vmatprep.subr.mxu0 0.0
    %1713 = vmatpush1.msra.mxu0 0.0
    %1714 = vmatprep.subr.mxu0 0.0
    %1715 = vmatpush1.msra.mxu0 0.0
    %1716 = vmatprep.subr.mxu0 0.0
    %1717 = vmatpush1.msra.mxu0 0.0
    %1718 = vmatprep.subr.mxu0 0.0
    %1719 = vmatpush1.msra.mxu0 0.0
    %1720 = vmatprep.subr.mxu0 0.0
    %1721 = vmatpush1.msra.mxu0 0.0
    %1722 = vmatprep.subr.mxu0 0.0
    %1723 = vmatpush1.msra.mxu0 0.0
    %1724 = vmatprep.subr.mxu0 0.0
    %1725 = vmatpush1.msra.mxu0 0.0
    %1726 = vmatprep.subr.mxu0 0.0
    %1727 = vmatpush1.msra.mxu0 0.0
    %1728 = vmatprep.subr.mxu0 0.0
    %1729 = vmatpush1.msra.mxu0 0.0
    %1730 = vmatprep.subr.mxu0 0.0
    %1731 = vmatpush1.msra.mxu0 0.0
    %1732 = vmatprep.subr.mxu0 0.0
    %1733 = vmatpush1.msra.mxu0 0.0
    %1734 = vmatprep.subr.mxu0 0.0
    %1735 = vmatpush1.msra.mxu0 0.0
    %1736 = vmatprep.subr.mxu0 0.0
    %1737 = vmatpush1.msra.mxu0 0.0
    %1738 = vmatprep.subr.mxu0 0.0
    %1739 = vmatpush1.msra.mxu0 0.0
    %1740 = vmatprep.subr.mxu0 0.0
    %1741 = vmatpush1.msra.mxu0 0.0
    %1742 = vmatprep.subr.mxu0 0.0
    %1743 = vmatpush1.msra.mxu0 0.0
    %1744 = vmatprep.subr.mxu0 0.0
    %1745 = vmatpush1.msra.mxu0 0.0
    %1746 = vmatprep.subr.mxu0 0.0
    %1747 = vmatpush1.msra.mxu0 0.0
    %1748 = vmatprep.subr.mxu0 0.0
    %1749 = vmatpush1.msra.mxu0 0.0
    %1750 = vmatprep.subr.mxu0 0.0
    %1751 = vmatpush1.msra.mxu0 0.0
    %1752 = vmatprep.mubr.f32.mxu0 0.0
    %v1753 = vand.u32 %v1311, 4294901760
    %1754 = vmatmul.mubr.f32.gmra.mrb[0].mxu0 %v1753
    %v1755 = vpop.f32.mrb[0].mxu0
    %v1756 = vadd.f32 %v1684, %v1755
    %v1757 = vpop.f32.mrb[0].mxu0
    %1758 = vdwg.mxu0
    %v1759 = vmax.f32 %v1756, 0.0
    %1761 = vset.pattern.permute.xlu0 0
    %1762 = vperm.xlu0 %1761, %v82
    %v1763 = vpop.permute.xlu0 %1762
    %v1766 = vsel %vm1309, %v75, 0
    %1768 = vmatprep.subr.mxu0 0.0
    %v1769 = vand.u32 %v1759, 4294901760
    %1770 = vmatpush1.msra.mxu0 %v1769
    %1771 = vmatprep.subr.mxu0 0.0
    %1772 = vmatpush1.msra.mxu0 0.0
    %1773 = vmatprep.subr.mxu0 0.0
    %1774 = vmatpush1.msra.mxu0 0.0
    %1775 = vmatprep.subr.mxu0 0.0
    %1776 = vmatpush1.msra.mxu0 0.0
    %1777 = vmatprep.subr.mxu0 0.0
    %1778 = vmatpush1.msra.mxu0 0.0
    %1779 = vmatprep.subr.mxu0 0.0
    %1780 = vmatpush1.msra.mxu0 0.0
    %1781 = vmatprep.subr.mxu0 0.0
    %1782 = vmatpush1.msra.mxu0 0.0
    %1783 = vmatprep.subr.mxu0 0.0
    %1784 = vmatpush1.msra.mxu0 0.0
    %1785 = vmatprep.subr.mxu0 0.0
    %1786 = vmatpush1.msra.mxu0 0.0
    %1787 = vmatprep.subr.mxu0 0.0
    %1788 = vmatpush1.msra.mxu0 0.0
    %1789 = vmatprep.subr.mxu0 0.0
    %1790 = vmatpush1.msra.mxu0 0.0
    %1791 = vmatprep.subr.mxu0 0.0
    %1792 = vmatpush1.msra.mxu0 0.0
    %1793 = vmatprep.subr.mxu0 0.0
    %1794 = vmatpush1.msra.mxu0 0.0
    %1795 = vmatprep.subr.mxu0 0.0
    %1796 = vmatpush1.msra.mxu0 0.0
    %1797 = vmatprep.subr.mxu0 0.0
    %1798 = vmatpush1.msra.mxu0 0.0
    %1799 = vmatprep.subr.mxu0 0.0
    %1800 = vmatpush1.msra.mxu0 0.0
    %1801 = vmatprep.subr.mxu0 0.0
    %1802 = vmatpush1.msra.mxu0 0.0
    %1803 = vmatprep.subr.mxu0 0.0
    %1804 = vmatpush1.msra.mxu0 0.0
    %1805 = vmatprep.subr.mxu0 0.0
    %1806 = vmatpush1.msra.mxu0 0.0
    %1807 = vmatprep.subr.mxu0 0.0
    %1808 = vmatpush1.msra.mxu0 0.0
    %1809 = vmatprep.subr.mxu0 0.0
    %1810 = vmatpush1.msra.mxu0 0.0
    %1811 = vmatprep.subr.mxu0 0.0
    %1812 = vmatpush1.msra.mxu0 0.0
    %1813 = vmatprep.subr.mxu0 0.0
    %1814 = vmatpush1.msra.mxu0 0.0
    %1815 = vmatprep.subr.mxu0 0.0
    %1816 = vmatpush1.msra.mxu0 0.0
    %1817 = vmatprep.subr.mxu0 0.0
    %1818 = vmatpush1.msra.mxu0 0.0
    %1819 = vmatprep.subr.mxu0 0.0
    %1820 = vmatpush1.msra.mxu0 0.0
    %1821 = vmatprep.subr.mxu0 0.0
    %1822 = vmatpush1.msra.mxu0 0.0
    %1823 = vmatprep.subr.mxu0 0.0
    %1824 = vmatpush1.msra.mxu0 0.0
    %1825 = vmatprep.subr.mxu0 0.0
    %1826 = vmatpush1.msra.mxu0 0.0
    %1827 = vmatprep.subr.mxu0 0.0
    %1828 = vmatpush1.msra.mxu0 0.0
    %1829 = vmatprep.subr.mxu0 0.0
    %1830 = vmatpush1.msra.mxu0 0.0
    %1831 = vmatprep.subr.mxu0 0.0
    %1832 = vmatpush1.msra.mxu0 0.0
    %1833 = vmatprep.mubr.f32.mxu0 0.0
    %v1834 = vand.u32 %v1766, 4294901760
    %v1835 = vsub.f32 %v1766, %v1834
    %v1836 = vand.u32 %v1835, 4294901760
    %v1837 = vsub.f32 %v1835, %v1836
    %v1838 = vand.u32 %v1837, 4294901760
    %1839 = vmatmul.mubr.f32.gmra.mrb[0].mxu0 %v1838
    %v1840 = vpop.f32.mrb[0].mxu0
    %v1841 = vadd.f32 %v1763, %v1840
    %v1842 = vpop.f32.mrb[0].mxu0
    %1843 = vdwg.mxu0
    %1844 = vmatprep.subr.mxu0 0.0
    %v1845 = vand.u32 %v1759, 4294901760
    %v1846 = vsub.f32 %v1759, %v1845
    %v1847 = vand.u32 %v1846, 4294901760
    %v1848 = vsub.f32 %v1846, %v1847
    %v1849 = vand.u32 %v1848, 4294901760
    %1850 = vmatpush1.msra.mxu0 %v1849
    %1851 = vmatprep.subr.mxu0 0.0
    %1852 = vmatpush1.msra.mxu0 0.0
    %1853 = vmatprep.subr.mxu0 0.0
    %1854 = vmatpush1.msra.mxu0 0.0
    %1855 = vmatprep.subr.mxu0 0.0
    %1856 = vmatpush1.msra.mxu0 0.0
    %1857 = vmatprep.subr.mxu0 0.0
    %1858 = vmatpush1.msra.mxu0 0.0
    %1859 = vmatprep.subr.mxu0 0.0
    %1860 = vmatpush1.msra.mxu0 0.0
    %1861 = vmatprep.subr.mxu0 0.0
    %1862 = vmatpush1.msra.mxu0 0.0
    %1863 = vmatprep.subr.mxu0 0.0
    %1864 = vmatpush1.msra.mxu0 0.0
    %1865 = vmatprep.subr.mxu0 0.0
    %1866 = vmatpush1.msra.mxu0 0.0
    %1867 = vmatprep.subr.mxu0 0.0
    %1868 = vmatpush1.msra.mxu0 0.0
    %1869 = vmatprep.subr.mxu0 0.0
    %1870 = vmatpush1.msra.mxu0 0.0
    %1871 = vmatprep.subr.mxu0 0.0
    %1872 = vmatpush1.msra.mxu0 0.0
    %1873 = vmatprep.subr.mxu0 0.0
    %1874 = vmatpush1.msra.mxu0 0.0
    %1875 = vmatprep.subr.mxu0 0.0
    %1876 = vmatpush1.msra.mxu0 0.0
    %1877 = vmatprep.subr.mxu0 0.0
    %1878 = vmatpush1.msra.mxu0 0.0
    %1879 = vmatprep.subr.mxu0 0.0
    %1880 = vmatpush1.msra.mxu0 0.0
    %1881 = vmatprep.subr.mxu0 0.0
    %1882 = vmatpush1.msra.mxu0 0.0
    %1883 = vmatprep.subr.mxu0 0.0
    %1884 = vmatpush1.msra.mxu0 0.0
    %1885 = vmatprep.subr.mxu0 0.0
    %1886 = vmatpush1.msra.mxu0 0.0
    %1887 = vmatprep.subr.mxu0 0.0
    %1888 = vmatpush1.msra.mxu0 0.0
    %1889 = vmatprep.subr.mxu0 0.0
    %1890 = vmatpush1.msra.mxu0 0.0
    %1891 = vmatprep.subr.mxu0 0.0
    %1892 = vmatpush1.msra.mxu0 0.0
    %1893 = vmatprep.subr.mxu0 0.0
    %1894 = vmatpush1.msra.mxu0 0.0
    %1895 = vmatprep.subr.mxu0 0.0
    %1896 = vmatpush1.msra.mxu0 0.0
    %1897 = vmatprep.subr.mxu0 0.0
    %1898 = vmatpush1.msra.mxu0 0.0
    %1899 = vmatprep.subr.mxu0 0.0
    %1900 = vmatpush1.msra.mxu0 0.0
    %1901 = vmatprep.subr.mxu0 0.0
    %1902 = vmatpush1.msra.mxu0 0.0
    %1903 = vmatprep.subr.mxu0 0.0
    %1904 = vmatpush1.msra.mxu0 0.0
    %1905 = vmatprep.subr.mxu0 0.0
    %1906 = vmatpush1.msra.mxu0 0.0
    %1907 = vmatprep.subr.mxu0 0.0
    %1908 = vmatpush1.msra.mxu0 0.0
    %1909 = vmatprep.subr.mxu0 0.0
    %1910 = vmatpush1.msra.mxu0 0.0
    %1911 = vmatprep.subr.mxu0 0.0
    %1912 = vmatpush1.msra.mxu0 0.0
    %1913 = vmatprep.mubr.f32.mxu0 0.0
    %v1914 = vand.u32 %v1766, 4294901760
    %1915 = vmatmul.mubr.f32.gmra.mrb[0].mxu0 %v1914
    %v1916 = vpop.f32.mrb[0].mxu0
    %v1917 = vadd.f32 %v1841, %v1916
    %v1918 = vpop.f32.mrb[0].mxu0
    %1919 = vdwg.mxu0
    %1920 = vmatprep.subr.mxu0 0.0
    %v1921 = vand.u32 %v1759, 4294901760
    %v1922 = vsub.f32 %v1759, %v1921
    %1923 = vmatpush1.msra.mxu0 %v1922
    %1924 = vmatprep.subr.mxu0 0.0
    %1925 = vmatpush1.msra.mxu0 0.0
    %1926 = vmatprep.subr.mxu0 0.0
    %1927 = vmatpush1.msra.mxu0 0.0
    %1928 = vmatprep.subr.mxu0 0.0
    %1929 = vmatpush1.msra.mxu0 0.0
    %1930 = vmatprep.subr.mxu0 0.0
    %1931 = vmatpush1.msra.mxu0 0.0
    %1932 = vmatprep.subr.mxu0 0.0
    %1933 = vmatpush1.msra.mxu0 0.0
    %1934 = vmatprep.subr.mxu0 0.0
    %1935 = vmatpush1.msra.mxu0 0.0
    %1936 = vmatprep.subr.mxu0 0.0
    %1937 = vmatpush1.msra.mxu0 0.0
    %1938 = vmatprep.subr.mxu0 0.0
    %1939 = vmatpush1.msra.mxu0 0.0
    %1940 = vmatprep.subr.mxu0 0.0
    %1941 = vmatpush1.msra.mxu0 0.0
    %1942 = vmatprep.subr.mxu0 0.0
    %1943 = vmatpush1.msra.mxu0 0.0
    %1944 = vmatprep.subr.mxu0 0.0
    %1945 = vmatpush1.msra.mxu0 0.0
    %1946 = vmatprep.subr.mxu0 0.0
    %1947 = vmatpush1.msra.mxu0 0.0
    %1948 = vmatprep.subr.mxu0 0.0
    %1949 = vmatpush1.msra.mxu0 0.0
    %1950 = vmatprep.subr.mxu0 0.0
    %1951 = vmatpush1.msra.mxu0 0.0
    %1952 = vmatprep.subr.mxu0 0.0
    %1953 = vmatpush1.msra.mxu0 0.0
    %1954 = vmatprep.subr.mxu0 0.0
    %1955 = vmatpush1.msra.mxu0 0.0
    %1956 = vmatprep.subr.mxu0 0.0
    %1957 = vmatpush1.msra.mxu0 0.0
    %1958 = vmatprep.subr.mxu0 0.0
    %1959 = vmatpush1.msra.mxu0 0.0
    %1960 = vmatprep.subr.mxu0 0.0
    %1961 = vmatpush1.msra.mxu0 0.0
    %1962 = vmatprep.subr.mxu0 0.0
    %1963 = vmatpush1.msra.mxu0 0.0
    %1964 = vmatprep.subr.mxu0 0.0
    %1965 = vmatpush1.msra.mxu0 0.0
    %1966 = vmatprep.subr.mxu0 0.0
    %1967 = vmatpush1.msra.mxu0 0.0
    %1968 = vmatprep.subr.mxu0 0.0
    %1969 = vmatpush1.msra.mxu0 0.0
    %1970 = vmatprep.subr.mxu0 0.0
    %1971 = vmatpush1.msra.mxu0 0.0
    %1972 = vmatprep.subr.mxu0 0.0
    %1973 = vmatpush1.msra.mxu0 0.0
    %1974 = vmatprep.subr.mxu0 0.0
    %1975 = vmatpush1.msra.mxu0 0.0
    %1976 = vmatprep.subr.mxu0 0.0
    %1977 = vmatpush1.msra.mxu0 0.0
    %1978 = vmatprep.subr.mxu0 0.0
    %1979 = vmatpush1.msra.mxu0 0.0
    %1980 = vmatprep.subr.mxu0 0.0
    %1981 = vmatpush1.msra.mxu0 0.0
    %1982 = vmatprep.subr.mxu0 0.0
    %1983 = vmatpush1.msra.mxu0 0.0
    %1984 = vmatprep.subr.mxu0 0.0
    %1985 = vmatpush1.msra.mxu0 0.0
    %1986 = vmatprep.mubr.f32.mxu0 0.0
    %v1987 = vand.u32 %v1766, 4294901760
    %v1988 = vsub.f32 %v1766, %v1987
    %1989 = vmatmul.mubr.f32.gmra.mrb[0].mxu0 %v1988
    %v1990 = vpop.f32.mrb[0].mxu0
    %v1991 = vadd.f32 %v1917, %v1990
    %v1992 = vpop.f32.mrb[0].mxu0
    %1993 = vdwg.mxu0
    %1994 = vmatprep.subr.mxu0 0.0
    %v1995 = vand.u32 %v1759, 4294901760
    %1996 = vmatpush1.msra.mxu0 %v1995
    %1997 = vmatprep.subr.mxu0 0.0
    %1998 = vmatpush1.msra.mxu0 0.0
    %1999 = vmatprep.subr.mxu0 0.0
    %2000 = vmatpush1.msra.mxu0 0.0
    %2001 = vmatprep.subr.mxu0 0.0
    %2002 = vmatpush1.msra.mxu0 0.0
    %2003 = vmatprep.subr.mxu0 0.0
    %2004 = vmatpush1.msra.mxu0 0.0
    %2005 = vmatprep.subr.mxu0 0.0
    %2006 = vmatpush1.msra.mxu0 0.0
    %2007 = vmatprep.subr.mxu0 0.0
    %2008 = vmatpush1.msra.mxu0 0.0
    %2009 = vmatprep.subr.mxu0 0.0
    %2010 = vmatpush1.msra.mxu0 0.0
    %2011 = vmatprep.subr.mxu0 0.0
    %2012 = vmatpush1.msra.mxu0 0.0
    %2013 = vmatprep.subr.mxu0 0.0
    %2014 = vmatpush1.msra.mxu0 0.0
    %2015 = vmatprep.subr.mxu0 0.0
    %2016 = vmatpush1.msra.mxu0 0.0
    %2017 = vmatprep.subr.mxu0 0.0
    %2018 = vmatpush1.msra.mxu0 0.0
    %2019 = vmatprep.subr.mxu0 0.0
    %2020 = vmatpush1.msra.mxu0 0.0
    %2021 = vmatprep.subr.mxu0 0.0
    %2022 = vmatpush1.msra.mxu0 0.0
    %2023 = vmatprep.subr.mxu0 0.0
    %2024 = vmatpush1.msra.mxu0 0.0
    %2025 = vmatprep.subr.mxu0 0.0
    %2026 = vmatpush1.msra.mxu0 0.0
    %2027 = vmatprep.subr.mxu0 0.0
    %2028 = vmatpush1.msra.mxu0 0.0
    %2029 = vmatprep.subr.mxu0 0.0
    %2030 = vmatpush1.msra.mxu0 0.0
    %2031 = vmatprep.subr.mxu0 0.0
    %2032 = vmatpush1.msra.mxu0 0.0
    %2033 = vmatprep.subr.mxu0 0.0
    %2034 = vmatpush1.msra.mxu0 0.0
    %2035 = vmatprep.subr.mxu0 0.0
    %2036 = vmatpush1.msra.mxu0 0.0
    %2037 = vmatprep.subr.mxu0 0.0
    %2038 = vmatpush1.msra.mxu0 0.0
    %2039 = vmatprep.subr.mxu0 0.0
    %2040 = vmatpush1.msra.mxu0 0.0
    %2041 = vmatprep.subr.mxu0 0.0
    %2042 = vmatpush1.msra.mxu0 0.0
    %2043 = vmatprep.subr.mxu0 0.0
    %2044 = vmatpush1.msra.mxu0 0.0
    %2045 = vmatprep.subr.mxu0 0.0
    %2046 = vmatpush1.msra.mxu0 0.0
    %2047 = vmatprep.subr.mxu0 0.0
    %2048 = vmatpush1.msra.mxu0 0.0
    %2049 = vmatprep.subr.mxu0 0.0
    %2050 = vmatpush1.msra.mxu0 0.0
    %2051 = vmatprep.subr.mxu0 0.0
    %2052 = vmatpush1.msra.mxu0 0.0
    %2053 = vmatprep.subr.mxu0 0.0
    %2054 = vmatpush1.msra.mxu0 0.0
    %2055 = vmatprep.subr.mxu0 0.0
    %2056 = vmatpush1.msra.mxu0 0.0
    %2057 = vmatprep.subr.mxu0 0.0
    %2058 = vmatpush1.msra.mxu0 0.0
    %2059 = vmatprep.mubr.f32.mxu0 0.0
    %v2060 = vand.u32 %v1766, 4294901760
    %v2061 = vsub.f32 %v1766, %v2060
    %v2062 = vand.u32 %v2061, 4294901760
    %2063 = vmatmul.mubr.f32.gmra.mrb[0].mxu0 %v2062
    %v2064 = vpop.f32.mrb[0].mxu0
    %v2065 = vadd.f32 %v1991, %v2064
    %v2066 = vpop.f32.mrb[0].mxu0
    %2067 = vdwg.mxu0
    %2068 = vmatprep.subr.mxu0 0.0
    %v2069 = vand.u32 %v1759, 4294901760
    %v2070 = vsub.f32 %v1759, %v2069
    %v2071 = vand.u32 %v2070, 4294901760
    %2072 = vmatpush1.msra.mxu0 %v2071
    %2073 = vmatprep.subr.mxu0 0.0
    %2074 = vmatpush1.msra.mxu0 0.0
    %2075 = vmatprep.subr.mxu0 0.0
    %2076 = vmatpush1.msra.mxu0 0.0
    %2077 = vmatprep.subr.mxu0 0.0
    %2078 = vmatpush1.msra.mxu0 0.0
    %2079 = vmatprep.subr.mxu0 0.0
    %2080 = vmatpush1.msra.mxu0 0.0
    %2081 = vmatprep.subr.mxu0 0.0
    %2082 = vmatpush1.msra.mxu0 0.0
    %2083 = vmatprep.subr.mxu0 0.0
    %2084 = vmatpush1.msra.mxu0 0.0
    %2085 = vmatprep.subr.mxu0 0.0
    %2086 = vmatpush1.msra.mxu0 0.0
    %2087 = vmatprep.subr.mxu0 0.0
    %2088 = vmatpush1.msra.mxu0 0.0
    %2089 = vmatprep.subr.mxu0 0.0
    %2090 = vmatpush1.msra.mxu0 0.0
    %2091 = vmatprep.subr.mxu0 0.0
    %2092 = vmatpush1.msra.mxu0 0.0
    %2093 = vmatprep.subr.mxu0 0.0
    %2094 = vmatpush1.msra.mxu0 0.0
    %2095 = vmatprep.subr.mxu0 0.0
    %2096 = vmatpush1.msra.mxu0 0.0
    %2097 = vmatprep.subr.mxu0 0.0
    %2098 = vmatpush1.msra.mxu0 0.0
    %2099 = vmatprep.subr.mxu0 0.0
    %2100 = vmatpush1.msra.mxu0 0.0
    %2101 = vmatprep.subr.mxu0 0.0
    %2102 = vmatpush1.msra.mxu0 0.0
    %2103 = vmatprep.subr.mxu0 0.0
    %2104 = vmatpush1.msra.mxu0 0.0
    %2105 = vmatprep.subr.mxu0 0.0
    %2106 = vmatpush1.msra.mxu0 0.0
    %2107 = vmatprep.subr.mxu0 0.0
    %2108 = vmatpush1.msra.mxu0 0.0
    %2109 = vmatprep.subr.mxu0 0.0
    %2110 = vmatpush1.msra.mxu0 0.0
    %2111 = vmatprep.subr.mxu0 0.0
    %2112 = vmatpush1.msra.mxu0 0.0
    %2113 = vmatprep.subr.mxu0 0.0
    %2114 = vmatpush1.msra.mxu0 0.0
    %2115 = vmatprep.subr.mxu0 0.0
    %2116 = vmatpush1.msra.mxu0 0.0
    %2117 = vmatprep.subr.mxu0 0.0
    %2118 = vmatpush1.msra.mxu0 0.0
    %2119 = vmatprep.subr.mxu0 0.0
    %2120 = vmatpush1.msra.mxu0 0.0
    %2121 = vmatprep.subr.mxu0 0.0
    %2122 = vmatpush1.msra.mxu0 0.0
    %2123 = vmatprep.subr.mxu0 0.0
    %2124 = vmatpush1.msra.mxu0 0.0
    %2125 = vmatprep.subr.mxu0 0.0
    %2126 = vmatpush1.msra.mxu0 0.0
    %2127 = vmatprep.subr.mxu0 0.0
    %2128 = vmatpush1.msra.mxu0 0.0
    %2129 = vmatprep.subr.mxu0 0.0
    %2130 = vmatpush1.msra.mxu0 0.0
    %2131 = vmatprep.subr.mxu0 0.0
    %2132 = vmatpush1.msra.mxu0 0.0
    %2133 = vmatprep.subr.mxu0 0.0
    %2134 = vmatpush1.msra.mxu0 0.0
    %2135 = vmatprep.mubr.f32.mxu0 0.0
    %v2136 = vand.u32 %v1766, 4294901760
    %2137 = vmatmul.mubr.f32.gmra.mrb[0].mxu0 %v2136
    %v2138 = vpop.f32.mrb[0].mxu0
    %v2139 = vadd.f32 %v2065, %v2138
    %v2140 = vpop.f32.mrb[0].mxu0
    %2141 = vdwg.mxu0
    %2142 = vmatprep.subr.mxu0 0.0
    %v2143 = vand.u32 %v1759, 4294901760
    %2144 = vmatpush1.msra.mxu0 %v2143
    %2145 = vmatprep.subr.mxu0 0.0
    %2146 = vmatpush1.msra.mxu0 0.0
    %2147 = vmatprep.subr.mxu0 0.0
    %2148 = vmatpush1.msra.mxu0 0.0
    %2149 = vmatprep.subr.mxu0 0.0
    %2150 = vmatpush1.msra.mxu0 0.0
    %2151 = vmatprep.subr.mxu0 0.0
    %2152 = vmatpush1.msra.mxu0 0.0
    %2153 = vmatprep.subr.mxu0 0.0
    %2154 = vmatpush1.msra.mxu0 0.0
    %2155 = vmatprep.subr.mxu0 0.0
    %2156 = vmatpush1.msra.mxu0 0.0
    %2157 = vmatprep.subr.mxu0 0.0
    %2158 = vmatpush1.msra.mxu0 0.0
    %2159 = vmatprep.subr.mxu0 0.0
    %2160 = vmatpush1.msra.mxu0 0.0
    %2161 = vmatprep.subr.mxu0 0.0
    %2162 = vmatpush1.msra.mxu0 0.0
    %2163 = vmatprep.subr.mxu0 0.0
    %2164 = vmatpush1.msra.mxu0 0.0
    %2165 = vmatprep.subr.mxu0 0.0
    %2166 = vmatpush1.msra.mxu0 0.0
    %2167 = vmatprep.subr.mxu0 0.0
    %2168 = vmatpush1.msra.mxu0 0.0
    %2169 = vmatprep.subr.mxu0 0.0
    %2170 = vmatpush1.msra.mxu0 0.0
    %2171 = vmatprep.subr.mxu0 0.0
    %2172 = vmatpush1.msra.mxu0 0.0
    %2173 = vmatprep.subr.mxu0 0.0
    %2174 = vmatpush1.msra.mxu0 0.0
    %2175 = vmatprep.subr.mxu0 0.0
    %2176 = vmatpush1.msra.mxu0 0.0
    %2177 = vmatprep.subr.mxu0 0.0
    %2178 = vmatpush1.msra.mxu0 0.0
    %2179 = vmatprep.subr.mxu0 0.0
    %2180 = vmatpush1.msra.mxu0 0.0
    %2181 = vmatprep.subr.mxu0 0.0
    %2182 = vmatpush1.msra.mxu0 0.0
    %2183 = vmatprep.subr.mxu0 0.0
    %2184 = vmatpush1.msra.mxu0 0.0
    %2185 = vmatprep.subr.mxu0 0.0
    %2186 = vmatpush1.msra.mxu0 0.0
    %2187 = vmatprep.subr.mxu0 0.0
    %2188 = vmatpush1.msra.mxu0 0.0
    %2189 = vmatprep.subr.mxu0 0.0
    %2190 = vmatpush1.msra.mxu0 0.0
    %2191 = vmatprep.subr.mxu0 0.0
    %2192 = vmatpush1.msra.mxu0 0.0
    %2193 = vmatprep.subr.mxu0 0.0
    %2194 = vmatpush1.msra.mxu0 0.0
    %2195 = vmatprep.subr.mxu0 0.0
    %2196 = vmatpush1.msra.mxu0 0.0
    %2197 = vmatprep.subr.mxu0 0.0
    %2198 = vmatpush1.msra.mxu0 0.0
    %2199 = vmatprep.subr.mxu0 0.0
    %2200 = vmatpush1.msra.mxu0 0.0
    %2201 = vmatprep.subr.mxu0 0.0
    %2202 = vmatpush1.msra.mxu0 0.0
    %2203 = vmatprep.subr.mxu0 0.0
    %2204 = vmatpush1.msra.mxu0 0.0
    %2205 = vmatprep.subr.mxu0 0.0
    %2206 = vmatpush1.msra.mxu0 0.0
    %2207 = vmatprep.mubr.f32.mxu0 0.0
    %v2208 = vand.u32 %v1766, 4294901760
    %2209 = vmatmul.mubr.f32.gmra.mrb[0].mxu0 %v2208
    %v2210 = vpop.f32.mrb[0].mxu0
    %v2211 = vadd.f32 %v2139, %v2210
    %v2212 = vpop.f32.mrb[0].mxu0
    %2213 = vdwg.mxu0
    %v2214 = vmax.f32 %v2211, 0.0
    %2216 = vset.pattern.permute.xlu0 0
    %2217 = vperm.xlu0 %2216, %v83
    %v2218 = vpop.permute.xlu0 %2217
    %v2221 = vsel %vm1309, %v76, 0
    %2223 = vmatprep.subr.mxu0 0.0
    %v2224 = vand.u32 %v2214, 4294901760
    %2225 = vmatpush1.msra.mxu0 %v2224
    %2226 = vmatprep.subr.mxu0 0.0
    %2227 = vmatpush1.msra.mxu0 0.0
    %2228 = vmatprep.subr.mxu0 0.0
    %2229 = vmatpush1.msra.mxu0 0.0
    %2230 = vmatprep.subr.mxu0 0.0
    %2231 = vmatpush1.msra.mxu0 0.0
    %2232 = vmatprep.subr.mxu0 0.0
    %2233 = vmatpush1.msra.mxu0 0.0
    %2234 = vmatprep.subr.mxu0 0.0
    %2235 = vmatpush1.msra.mxu0 0.0
    %2236 = vmatprep.subr.mxu0 0.0
    %2237 = vmatpush1.msra.mxu0 0.0
    %2238 = vmatprep.subr.mxu0 0.0
    %2239 = vmatpush1.msra.mxu0 0.0
    %2240 = vmatprep.subr.mxu0 0.0
    %2241 = vmatpush1.msra.mxu0 0.0
    %2242 = vmatprep.subr.mxu0 0.0
    %2243 = vmatpush1.msra.mxu0 0.0
    %2244 = vmatprep.subr.mxu0 0.0
    %2245 = vmatpush1.msra.mxu0 0.0
    %2246 = vmatprep.subr.mxu0 0.0
    %2247 = vmatpush1.msra.mxu0 0.0
    %2248 = vmatprep.subr.mxu0 0.0
    %2249 = vmatpush1.msra.mxu0 0.0
    %2250 = vmatprep.subr.mxu0 0.0
    %2251 = vmatpush1.msra.mxu0 0.0
    %2252 = vmatprep.subr.mxu0 0.0
    %2253 = vmatpush1.msra.mxu0 0.0
    %2254 = vmatprep.subr.mxu0 0.0
    %2255 = vmatpush1.msra.mxu0 0.0
    %2256 = vmatprep.subr.mxu0 0.0
    %2257 = vmatpush1.msra.mxu0 0.0
    %2258 = vmatprep.subr.mxu0 0.0
    %2259 = vmatpush1.msra.mxu0 0.0
    %2260 = vmatprep.subr.mxu0 0.0
    %2261 = vmatpush1.msra.mxu0 0.0
    %2262 = vmatprep.subr.mxu0 0.0
    %2263 = vmatpush1.msra.mxu0 0.0
    %2264 = vmatprep.subr.mxu0 0.0
    %2265 = vmatpush1.msra.mxu0 0.0
    %2266 = vmatprep.subr.mxu0 0.0
    %2267 = vmatpush1.msra.mxu0 0.0
    %2268 = vmatprep.subr.mxu0 0.0
    %2269 = vmatpush1.msra.mxu0 0.0
    %2270 = vmatprep.subr.mxu0 0.0
    %2271 = vmatpush1.msra.mxu0 0.0
    %2272 = vmatprep.subr.mxu0 0.0
    %2273 = vmatpush1.msra.mxu0 0.0
    %2274 = vmatprep.subr.mxu0 0.0
    %2275 = vmatpush1.msra.mxu0 0.0
    %2276 = vmatprep.subr.mxu0 0.0
    %2277 = vmatpush1.msra.mxu0 0.0
    %2278 = vmatprep.subr.mxu0 0.0
    %2279 = vmatpush1.msra.mxu0 0.0
    %2280 = vmatprep.subr.mxu0 0.0
    %2281 = vmatpush1.msra.mxu0 0.0
    %2282 = vmatprep.subr.mxu0 0.0
    %2283 = vmatpush1.msra.mxu0 0.0
    %2284 = vmatprep.subr.mxu0 0.0
    %2285 = vmatpush1.msra.mxu0 0.0
    %2286 = vmatprep.subr.mxu0 0.0
    %2287 = vmatpush1.msra.mxu0 0.0
    %2288 = vmatprep.mubr.f32.mxu0 0.0
    %v2289 = vand.u32 %v2221, 4294901760
    %v2290 = vsub.f32 %v2221, %v2289
    %v2291 = vand.u32 %v2290, 4294901760
    %v2292 = vsub.f32 %v2290, %v2291
    %v2293 = vand.u32 %v2292, 4294901760
    %2294 = vmatmul.mubr.f32.gmra.mrb[0].mxu0 %v2293
    %v2295 = vpop.f32.mrb[0].mxu0
    %v2296 = vadd.f32 %v2218, %v2295
    %v2297 = vpop.f32.mrb[0].mxu0
    %2298 = vdwg.mxu0
    %2299 = vmatprep.subr.mxu0 0.0
    %v2300 = vand.u32 %v2214, 4294901760
    %v2301 = vsub.f32 %v2214, %v2300
    %v2302 = vand.u32 %v2301, 4294901760
    %v2303 = vsub.f32 %v2301, %v2302
    %v2304 = vand.u32 %v2303, 4294901760
    %2305 = vmatpush1.msra.mxu0 %v2304
    %2306 = vmatprep.subr.mxu0 0.0
    %2307 = vmatpush1.msra.mxu0 0.0
    %2308 = vmatprep.subr.mxu0 0.0
    %2309 = vmatpush1.msra.mxu0 0.0
    %2310 = vmatprep.subr.mxu0 0.0
    %2311 = vmatpush1.msra.mxu0 0.0
    %2312 = vmatprep.subr.mxu0 0.0
    %2313 = vmatpush1.msra.mxu0 0.0
    %2314 = vmatprep.subr.mxu0 0.0
    %2315 = vmatpush1.msra.mxu0 0.0
    %2316 = vmatprep.subr.mxu0 0.0
    %2317 = vmatpush1.msra.mxu0 0.0
    %2318 = vmatprep.subr.mxu0 0.0
    %2319 = vmatpush1.msra.mxu0 0.0
    %2320 = vmatprep.subr.mxu0 0.0
    %2321 = vmatpush1.msra.mxu0 0.0
    %2322 = vmatprep.subr.mxu0 0.0
    %2323 = vmatpush1.msra.mxu0 0.0
    %2324 = vmatprep.subr.mxu0 0.0
    %2325 = vmatpush1.msra.mxu0 0.0
    %2326 = vmatprep.subr.mxu0 0.0
    %2327 = vmatpush1.msra.mxu0 0.0
    %2328 = vmatprep.subr.mxu0 0.0
    %2329 = vmatpush1.msra.mxu0 0.0
    %2330 = vmatprep.subr.mxu0 0.0
    %2331 = vmatpush1.msra.mxu0 0.0
    %2332 = vmatprep.subr.mxu0 0.0
    %2333 = vmatpush1.msra.mxu0 0.0
    %2334 = vmatprep.subr.mxu0 0.0
    %2335 = vmatpush1.msra.mxu0 0.0
    %2336 = vmatprep.subr.mxu0 0.0
    %2337 = vmatpush1.msra.mxu0 0.0
    %2338 = vmatprep.subr.mxu0 0.0
    %2339 = vmatpush1.msra.mxu0 0.0
    %2340 = vmatprep.subr.mxu0 0.0
    %2341 = vmatpush1.msra.mxu0 0.0
    %2342 = vmatprep.subr.mxu0 0.0
    %2343 = vmatpush1.msra.mxu0 0.0
    %2344 = vmatprep.subr.mxu0 0.0
    %2345 = vmatpush1.msra.mxu0 0.0
    %2346 = vmatprep.subr.mxu0 0.0
    %2347 = vmatpush1.msra.mxu0 0.0
    %2348 = vmatprep.subr.mxu0 0.0
    %2349 = vmatpush1.msra.mxu0 0.0
    %2350 = vmatprep.subr.mxu0 0.0
    %2351 = vmatpush1.msra.mxu0 0.0
    %2352 = vmatprep.subr.mxu0 0.0
    %2353 = vmatpush1.msra.mxu0 0.0
    %2354 = vmatprep.subr.mxu0 0.0
    %2355 = vmatpush1.msra.mxu0 0.0
    %2356 = vmatprep.subr.mxu0 0.0
    %2357 = vmatpush1.msra.mxu0 0.0
    %2358 = vmatprep.subr.mxu0 0.0
    %2359 = vmatpush1.msra.mxu0 0.0
    %2360 = vmatprep.subr.mxu0 0.0
    %2361 = vmatpush1.msra.mxu0 0.0
    %2362 = vmatprep.subr.mxu0 0.0
    %2363 = vmatpush1.msra.mxu0 0.0
    %2364 = vmatprep.subr.mxu0 0.0
    %2365 = vmatpush1.msra.mxu0 0.0
    %2366 = vmatprep.subr.mxu0 0.0
    %2367 = vmatpush1.msra.mxu0 0.0
    %2368 = vmatprep.mubr.f32.mxu0 0.0
    %v2369 = vand.u32 %v2221, 4294901760
    %2370 = vmatmul.mubr.f32.gmra.mrb[0].mxu0 %v2369
    %v2371 = vpop.f32.mrb[0].mxu0
    %v2372 = vadd.f32 %v2296, %v2371
    %v2373 = vpop.f32.mrb[0].mxu0
    %2374 = vdwg.mxu0
    %2375 = vmatprep.subr.mxu0 0.0
    %v2376 = vand.u32 %v2214, 4294901760
    %v2377 = vsub.f32 %v2214, %v2376
    %2378 = vmatpush1.msra.mxu0 %v2377
    %2379 = vmatprep.subr.mxu0 0.0
    %2380 = vmatpush1.msra.mxu0 0.0
    %2381 = vmatprep.subr.mxu0 0.0
    %2382 = vmatpush1.msra.mxu0 0.0
    %2383 = vmatprep.subr.mxu0 0.0
    %2384 = vmatpush1.msra.mxu0 0.0
    %2385 = vmatprep.subr.mxu0 0.0
    %2386 = vmatpush1.msra.mxu0 0.0
    %2387 = vmatprep.subr.mxu0 0.0
    %2388 = vmatpush1.msra.mxu0 0.0
    %2389 = vmatprep.subr.mxu0 0.0
    %2390 = vmatpush1.msra.mxu0 0.0
    %2391 = vmatprep.subr.mxu0 0.0
    %2392 = vmatpush1.msra.mxu0 0.0
    %2393 = vmatprep.subr.mxu0 0.0
    %2394 = vmatpush1.msra.mxu0 0.0
    %2395 = vmatprep.subr.mxu0 0.0
    %2396 = vmatpush1.msra.mxu0 0.0
    %2397 = vmatprep.subr.mxu0 0.0
    %2398 = vmatpush1.msra.mxu0 0.0
    %2399 = vmatprep.subr.mxu0 0.0
    %2400 = vmatpush1.msra.mxu0 0.0
    %2401 = vmatprep.subr.mxu0 0.0
    %2402 = vmatpush1.msra.mxu0 0.0
    %2403 = vmatprep.subr.mxu0 0.0
    %2404 = vmatpush1.msra.mxu0 0.0
    %2405 = vmatprep.subr.mxu0 0.0
    %2406 = vmatpush1.msra.mxu0 0.0
    %2407 = vmatprep.subr.mxu0 0.0
    %2408 = vmatpush1.msra.mxu0 0.0
    %2409 = vmatprep.subr.mxu0 0.0
    %2410 = vmatpush1.msra.mxu0 0.0
    %2411 = vmatprep.subr.mxu0 0.0
    %2412 = vmatpush1.msra.mxu0 0.0
    %2413 = vmatprep.subr.mxu0 0.0
    %2414 = vmatpush1.msra.mxu0 0.0
    %2415 = vmatprep.subr.mxu0 0.0
    %2416 = vmatpush1.msra.mxu0 0.0
    %2417 = vmatprep.subr.mxu0 0.0
    %2418 = vmatpush1.msra.mxu0 0.0
    %2419 = vmatprep.subr.mxu0 0.0
    %2420 = vmatpush1.msra.mxu0 0.0
    %2421 = vmatprep.subr.mxu0 0.0
    %2422 = vmatpush1.msra.mxu0 0.0
    %2423 = vmatprep.subr.mxu0 0.0
    %2424 = vmatpush1.msra.mxu0 0.0
    %2425 = vmatprep.subr.mxu0 0.0
    %2426 = vmatpush1.msra.mxu0 0.0
    %2427 = vmatprep.subr.mxu0 0.0
    %2428 = vmatpush1.msra.mxu0 0.0
    %2429 = vmatprep.subr.mxu0 0.0
    %2430 = vmatpush1.msra.mxu0 0.0
    %2431 = vmatprep.subr.mxu0 0.0
    %2432 = vmatpush1.msra.mxu0 0.0
    %2433 = vmatprep.subr.mxu0 0.0
    %2434 = vmatpush1.msra.mxu0 0.0
    %2435 = vmatprep.subr.mxu0 0.0
    %2436 = vmatpush1.msra.mxu0 0.0
    %2437 = vmatprep.subr.mxu0 0.0
    %2438 = vmatpush1.msra.mxu0 0.0
    %2439 = vmatprep.subr.mxu0 0.0
    %2440 = vmatpush1.msra.mxu0 0.0
    %2441 = vmatprep.mubr.f32.mxu0 0.0
    %v2442 = vand.u32 %v2221, 4294901760
    %v2443 = vsub.f32 %v2221, %v2442
    %2444 = vmatmul.mubr.f32.gmra.mrb[0].mxu0 %v2443
    %v2445 = vpop.f32.mrb[0].mxu0
    %v2446 = vadd.f32 %v2372, %v2445
    %v2447 = vpop.f32.mrb[0].mxu0
    %2448 = vdwg.mxu0
    %2449 = vmatprep.subr.mxu0 0.0
    %v2450 = vand.u32 %v2214, 4294901760
    %2451 = vmatpush1.msra.mxu0 %v2450
    %2452 = vmatprep.subr.mxu0 0.0
    %2453 = vmatpush1.msra.mxu0 0.0
    %2454 = vmatprep.subr.mxu0 0.0
    %2455 = vmatpush1.msra.mxu0 0.0
    %2456 = vmatprep.subr.mxu0 0.0
    %2457 = vmatpush1.msra.mxu0 0.0
    %2458 = vmatprep.subr.mxu0 0.0
    %2459 = vmatpush1.msra.mxu0 0.0
    %2460 = vmatprep.subr.mxu0 0.0
    %2461 = vmatpush1.msra.mxu0 0.0
    %2462 = vmatprep.subr.mxu0 0.0
    %2463 = vmatpush1.msra.mxu0 0.0
    %2464 = vmatprep.subr.mxu0 0.0
    %2465 = vmatpush1.msra.mxu0 0.0
    %2466 = vmatprep.subr.mxu0 0.0
    %2467 = vmatpush1.msra.mxu0 0.0
    %2468 = vmatprep.subr.mxu0 0.0
    %2469 = vmatpush1.msra.mxu0 0.0
    %2470 = vmatprep.subr.mxu0 0.0
    %2471 = vmatpush1.msra.mxu0 0.0
    %2472 = vmatprep.subr.mxu0 0.0
    %2473 = vmatpush1.msra.mxu0 0.0
    %2474 = vmatprep.subr.mxu0 0.0
    %2475 = vmatpush1.msra.mxu0 0.0
    %2476 = vmatprep.subr.mxu0 0.0
    %2477 = vmatpush1.msra.mxu0 0.0
    %2478 = vmatprep.subr.mxu0 0.0
    %2479 = vmatpush1.msra.mxu0 0.0
    %2480 = vmatprep.subr.mxu0 0.0
    %2481 = vmatpush1.msra.mxu0 0.0
    %2482 = vmatprep.subr.mxu0 0.0
    %2483 = vmatpush1.msra.mxu0 0.0
    %2484 = vmatprep.subr.mxu0 0.0
    %2485 = vmatpush1.msra.mxu0 0.0
    %2486 = vmatprep.subr.mxu0 0.0
    %2487 = vmatpush1.msra.mxu0 0.0
    %2488 = vmatprep.subr.mxu0 0.0
    %2489 = vmatpush1.msra.mxu0 0.0
    %2490 = vmatprep.subr.mxu0 0.0
    %2491 = vmatpush1.msra.mxu0 0.0
    %2492 = vmatprep.subr.mxu0 0.0
    %2493 = vmatpush1.msra.mxu0 0.0
    %2494 = vmatprep.subr.mxu0 0.0
    %2495 = vmatpush1.msra.mxu0 0.0
    %2496 = vmatprep.subr.mxu0 0.0
    %2497 = vmatpush1.msra.mxu0 0.0
    %2498 = vmatprep.subr.mxu0 0.0
    %2499 = vmatpush1.msra.mxu0 0.0
    %2500 = vmatprep.subr.mxu0 0.0
    %2501 = vmatpush1.msra.mxu0 0.0
    %2502 = vmatprep.subr.mxu0 0.0
    %2503 = vmatpush1.msra.mxu0 0.0
    %2504 = vmatprep.subr.mxu0 0.0
    %2505 = vmatpush1.msra.mxu0 0.0
    %2506 = vmatprep.subr.mxu0 0.0
    %2507 = vmatpush1.msra.mxu0 0.0
    %2508 = vmatprep.subr.mxu0 0.0
    %2509 = vmatpush1.msra.mxu0 0.0
    %2510 = vmatprep.subr.mxu0 0.0
    %2511 = vmatpush1.msra.mxu0 0.0
    %2512 = vmatprep.subr.mxu0 0.0
    %2513 = vmatpush1.msra.mxu0 0.0
    %2514 = vmatprep.mubr.f32.mxu0 0.0
    %v2515 = vand.u32 %v2221, 4294901760
    %v2516 = vsub.f32 %v2221, %v2515
    %v2517 = vand.u32 %v2516, 4294901760
    %2518 = vmatmul.mubr.f32.gmra.mrb[0].mxu0 %v2517
    %v2519 = vpop.f32.mrb[0].mxu0
    %v2520 = vadd.f32 %v2446, %v2519
    %v2521 = vpop.f32.mrb[0].mxu0
    %2522 = vdwg.mxu0
    %2523 = vmatprep.subr.mxu0 0.0
    %v2524 = vand.u32 %v2214, 4294901760
    %v2525 = vsub.f32 %v2214, %v2524
    %v2526 = vand.u32 %v2525, 4294901760
    %2527 = vmatpush1.msra.mxu0 %v2526
    %2528 = vmatprep.subr.mxu0 0.0
    %2529 = vmatpush1.msra.mxu0 0.0
    %2530 = vmatprep.subr.mxu0 0.0
    %2531 = vmatpush1.msra.mxu0 0.0
    %2532 = vmatprep.subr.mxu0 0.0
    %2533 = vmatpush1.msra.mxu0 0.0
    %2534 = vmatprep.subr.mxu0 0.0
    %2535 = vmatpush1.msra.mxu0 0.0
    %2536 = vmatprep.subr.mxu0 0.0
    %2537 = vmatpush1.msra.mxu0 0.0
    %2538 = vmatprep.subr.mxu0 0.0
    %2539 = vmatpush1.msra.mxu0 0.0
    %2540 = vmatprep.subr.mxu0 0.0
    %2541 = vmatpush1.msra.mxu0 0.0
    %2542 = vmatprep.subr.mxu0 0.0
    %2543 = vmatpush1.msra.mxu0 0.0
    %2544 = vmatprep.subr.mxu0 0.0
    %2545 = vmatpush1.msra.mxu0 0.0
    %2546 = vmatprep.subr.mxu0 0.0
    %2547 = vmatpush1.msra.mxu0 0.0
    %2548 = vmatprep.subr.mxu0 0.0
    %2549 = vmatpush1.msra.mxu0 0.0
    %2550 = vmatprep.subr.mxu0 0.0
    %2551 = vmatpush1.msra.mxu0 0.0
    %2552 = vmatprep.subr.mxu0 0.0
    %2553 = vmatpush1.msra.mxu0 0.0
    %2554 = vmatprep.subr.mxu0 0.0
    %2555 = vmatpush1.msra.mxu0 0.0
    %2556 = vmatprep.subr.mxu0 0.0
    %2557 = vmatpush1.msra.mxu0 0.0
    %2558 = vmatprep.subr.mxu0 0.0
    %2559 = vmatpush1.msra.mxu0 0.0
    %2560 = vmatprep.subr.mxu0 0.0
    %2561 = vmatpush1.msra.mxu0 0.0
    %2562 = vmatprep.subr.mxu0 0.0
    %2563 = vmatpush1.msra.mxu0 0.0
    %2564 = vmatprep.subr.mxu0 0.0
    %2565 = vmatpush1.msra.mxu0 0.0
    %2566 = vmatprep.subr.mxu0 0.0
    %2567 = vmatpush1.msra.mxu0 0.0
    %2568 = vmatprep.subr.mxu0 0.0
    %2569 = vmatpush1.msra.mxu0 0.0
    %2570 = vmatprep.subr.mxu0 0.0
    %2571 = vmatpush1.msra.mxu0 0.0
    %2572 = vmatprep.subr.mxu0 0.0
    %2573 = vmatpush1.msra.mxu0 0.0
    %2574 = vmatprep.subr.mxu0 0.0
    %2575 = vmatpush1.msra.mxu0 0.0
    %2576 = vmatprep.subr.mxu0 0.0
    %2577 = vmatpush1.msra.mxu0 0.0
    %2578 = vmatprep.subr.mxu0 0.0
    %2579 = vmatpush1.msra.mxu0 0.0
    %2580 = vmatprep.subr.mxu0 0.0
    %2581 = vmatpush1.msra.mxu0 0.0
    %2582 = vmatprep.subr.mxu0 0.0
    %2583 = vmatpush1.msra.mxu0 0.0
    %2584 = vmatprep.subr.mxu0 0.0
    %2585 = vmatpush1.msra.mxu0 0.0
    %2586 = vmatprep.subr.mxu0 0.0
    %2587 = vmatpush1.msra.mxu0 0.0
    %2588 = vmatprep.subr.mxu0 0.0
    %2589 = vmatpush1.msra.mxu0 0.0
    %2590 = vmatprep.mubr.f32.mxu0 0.0
    %v2591 = vand.u32 %v2221, 4294901760
    %2592 = vmatmul.mubr.f32.gmra.mrb[0].mxu0 %v2591
    %v2593 = vpop.f32.mrb[0].mxu0
    %v2594 = vadd.f32 %v2520, %v2593
    %v2595 = vpop.f32.mrb[0].mxu0
    %2596 = vdwg.mxu0
    %2597 = vmatprep.subr.mxu0 0.0
    %v2598 = vand.u32 %v2214, 4294901760
    %2599 = vmatpush1.msra.mxu0 %v2598
    %2600 = vmatprep.subr.mxu0 0.0
    %2601 = vmatpush1.msra.mxu0 0.0
    %2602 = vmatprep.subr.mxu0 0.0
    %2603 = vmatpush1.msra.mxu0 0.0
    %2604 = vmatprep.subr.mxu0 0.0
    %2605 = vmatpush1.msra.mxu0 0.0
    %2606 = vmatprep.subr.mxu0 0.0
    %2607 = vmatpush1.msra.mxu0 0.0
    %2608 = vmatprep.subr.mxu0 0.0
    %2609 = vmatpush1.msra.mxu0 0.0
    %2610 = vmatprep.subr.mxu0 0.0
    %2611 = vmatpush1.msra.mxu0 0.0
    %2612 = vmatprep.subr.mxu0 0.0
    %2613 = vmatpush1.msra.mxu0 0.0
    %2614 = vmatprep.subr.mxu0 0.0
    %2615 = vmatpush1.msra.mxu0 0.0
    %2616 = vmatprep.subr.mxu0 0.0
    %2617 = vmatpush1.msra.mxu0 0.0
    %2618 = vmatprep.subr.mxu0 0.0
    %2619 = vmatpush1.msra.mxu0 0.0
    %2620 = vmatprep.subr.mxu0 0.0
    %2621 = vmatpush1.msra.mxu0 0.0
    %2622 = vmatprep.subr.mxu0 0.0
    %2623 = vmatpush1.msra.mxu0 0.0
    %2624 = vmatprep.subr.mxu0 0.0
    %2625 = vmatpush1.msra.mxu0 0.0
    %2626 = vmatprep.subr.mxu0 0.0
    %2627 = vmatpush1.msra.mxu0 0.0
    %2628 = vmatprep.subr.mxu0 0.0
    %2629 = vmatpush1.msra.mxu0 0.0
    %2630 = vmatprep.subr.mxu0 0.0
    %2631 = vmatpush1.msra.mxu0 0.0
    %2632 = vmatprep.subr.mxu0 0.0
    %2633 = vmatpush1.msra.mxu0 0.0
    %2634 = vmatprep.subr.mxu0 0.0
    %2635 = vmatpush1.msra.mxu0 0.0
    %2636 = vmatprep.subr.mxu0 0.0
    %2637 = vmatpush1.msra.mxu0 0.0
    %2638 = vmatprep.subr.mxu0 0.0
    %2639 = vmatpush1.msra.mxu0 0.0
    %2640 = vmatprep.subr.mxu0 0.0
    %2641 = vmatpush1.msra.mxu0 0.0
    %2642 = vmatprep.subr.mxu0 0.0
    %2643 = vmatpush1.msra.mxu0 0.0
    %2644 = vmatprep.subr.mxu0 0.0
    %2645 = vmatpush1.msra.mxu0 0.0
    %2646 = vmatprep.subr.mxu0 0.0
    %2647 = vmatpush1.msra.mxu0 0.0
    %2648 = vmatprep.subr.mxu0 0.0
    %2649 = vmatpush1.msra.mxu0 0.0
    %2650 = vmatprep.subr.mxu0 0.0
    %2651 = vmatpush1.msra.mxu0 0.0
    %2652 = vmatprep.subr.mxu0 0.0
    %2653 = vmatpush1.msra.mxu0 0.0
    %2654 = vmatprep.subr.mxu0 0.0
    %2655 = vmatpush1.msra.mxu0 0.0
    %2656 = vmatprep.subr.mxu0 0.0
    %2657 = vmatpush1.msra.mxu0 0.0
    %2658 = vmatprep.subr.mxu0 0.0
    %2659 = vmatpush1.msra.mxu0 0.0
    %2660 = vmatprep.subr.mxu0 0.0
    %2661 = vmatpush1.msra.mxu0 0.0
    %2662 = vmatprep.mubr.f32.mxu0 0.0
    %v2663 = vand.u32 %v2221, 4294901760
    %2664 = vmatmul.mubr.f32.gmra.mrb[0].mxu0 %v2663
    %v2665 = vpop.f32.mrb[0].mxu0
    %v2666 = vadd.f32 %v2594, %v2665
    %v2667 = vpop.f32.mrb[0].mxu0
    %2668 = vdwg.mxu0
    %v2669 = vmax.f32 %v2666, 0.0
    %2671 = vset.pattern.permute.xlu0 0
    %2672 = vperm.xlu0 %2671, %v84
    %v2673 = vpop.permute.xlu0 %2672
    %v2676 = vsel %vm1309, %v77, 0
    %2678 = vmatprep.subr.mxu0 0.0
    %v2679 = vand.u32 %v2669, 4294901760
    %2680 = vmatpush1.msra.mxu0 %v2679
    %2681 = vmatprep.subr.mxu0 0.0
    %2682 = vmatpush1.msra.mxu0 0.0
    %2683 = vmatprep.subr.mxu0 0.0
    %2684 = vmatpush1.msra.mxu0 0.0
    %2685 = vmatprep.subr.mxu0 0.0
    %2686 = vmatpush1.msra.mxu0 0.0
    %2687 = vmatprep.subr.mxu0 0.0
    %2688 = vmatpush1.msra.mxu0 0.0
    %2689 = vmatprep.subr.mxu0 0.0
    %2690 = vmatpush1.msra.mxu0 0.0
    %2691 = vmatprep.subr.mxu0 0.0
    %2692 = vmatpush1.msra.mxu0 0.0
    %2693 = vmatprep.subr.mxu0 0.0
    %2694 = vmatpush1.msra.mxu0 0.0
    %2695 = vmatprep.subr.mxu0 0.0
    %2696 = vmatpush1.msra.mxu0 0.0
    %2697 = vmatprep.subr.mxu0 0.0
    %2698 = vmatpush1.msra.mxu0 0.0
    %2699 = vmatprep.subr.mxu0 0.0
    %2700 = vmatpush1.msra.mxu0 0.0
    %2701 = vmatprep.subr.mxu0 0.0
    %2702 = vmatpush1.msra.mxu0 0.0
    %2703 = vmatprep.subr.mxu0 0.0
    %2704 = vmatpush1.msra.mxu0 0.0
    %2705 = vmatprep.subr.mxu0 0.0
    %2706 = vmatpush1.msra.mxu0 0.0
    %2707 = vmatprep.subr.mxu0 0.0
    %2708 = vmatpush1.msra.mxu0 0.0
    %2709 = vmatprep.subr.mxu0 0.0
    %2710 = vmatpush1.msra.mxu0 0.0
    %2711 = vmatprep.subr.mxu0 0.0
    %2712 = vmatpush1.msra.mxu0 0.0
    %2713 = vmatprep.subr.mxu0 0.0
    %2714 = vmatpush1.msra.mxu0 0.0
    %2715 = vmatprep.subr.mxu0 0.0
    %2716 = vmatpush1.msra.mxu0 0.0
    %2717 = vmatprep.subr.mxu0 0.0
    %2718 = vmatpush1.msra.mxu0 0.0
    %2719 = vmatprep.subr.mxu0 0.0
    %2720 = vmatpush1.msra.mxu0 0.0
    %2721 = vmatprep.subr.mxu0 0.0
    %2722 = vmatpush1.msra.mxu0 0.0
    %2723 = vmatprep.subr.mxu0 0.0
    %2724 = vmatpush1.msra.mxu0 0.0
    %2725 = vmatprep.subr.mxu0 0.0
    %2726 = vmatpush1.msra.mxu0 0.0
    %2727 = vmatprep.subr.mxu0 0.0
    %2728 = vmatpush1.msra.mxu0 0.0
    %2729 = vmatprep.subr.mxu0 0.0
    %2730 = vmatpush1.msra.mxu0 0.0
    %2731 = vmatprep.subr.mxu0 0.0
    %2732 = vmatpush1.msra.mxu0 0.0
    %2733 = vmatprep.subr.mxu0 0.0
    %2734 = vmatpush1.msra.mxu0 0.0
    %2735 = vmatprep.subr.mxu0 0.0
    %2736 = vmatpush1.msra.mxu0 0.0
    %2737 = vmatprep.subr.mxu0 0.0
    %2738 = vmatpush1.msra.mxu0 0.0
    %2739 = vmatprep.subr.mxu0 0.0
    %2740 = vmatpush1.msra.mxu0 0.0
    %2741 = vmatprep.subr.mxu0 0.0
    %2742 = vmatpush1.msra.mxu0 0.0
    %2743 = vmatprep.mubr.f32.mxu0 0.0
    %v2744 = vand.u32 %v2676, 4294901760
    %v2745 = vsub.f32 %v2676, %v2744
    %v2746 = vand.u32 %v2745, 4294901760
    %v2747 = vsub.f32 %v2745, %v2746
    %v2748 = vand.u32 %v2747, 4294901760
    %2749 = vmatmul.mubr.f32.gmra.mrb[0].mxu0 %v2748
    %v2750 = vpop.f32.mrb[0].mxu0
    %v2751 = vadd.f32 %v2673, %v2750
    %v2752 = vpop.f32.mrb[0].mxu0
    %2753 = vdwg.mxu0
    %2754 = vmatprep.subr.mxu0 0.0
    %v2755 = vand.u32 %v2669, 4294901760
    %v2756 = vsub.f32 %v2669, %v2755
    %v2757 = vand.u32 %v2756, 4294901760
    %v2758 = vsub.f32 %v2756, %v2757
    %v2759 = vand.u32 %v2758, 4294901760
    %2760 = vmatpush1.msra.mxu0 %v2759
    %2761 = vmatprep.subr.mxu0 0.0
    %2762 = vmatpush1.msra.mxu0 0.0
    %2763 = vmatprep.subr.mxu0 0.0
    %2764 = vmatpush1.msra.mxu0 0.0
    %2765 = vmatprep.subr.mxu0 0.0
    %2766 = vmatpush1.msra.mxu0 0.0
    %2767 = vmatprep.subr.mxu0 0.0
    %2768 = vmatpush1.msra.mxu0 0.0
    %2769 = vmatprep.subr.mxu0 0.0
    %2770 = vmatpush1.msra.mxu0 0.0
    %2771 = vmatprep.subr.mxu0 0.0
    %2772 = vmatpush1.msra.mxu0 0.0
    %2773 = vmatprep.subr.mxu0 0.0
    %2774 = vmatpush1.msra.mxu0 0.0
    %2775 = vmatprep.subr.mxu0 0.0
    %2776 = vmatpush1.msra.mxu0 0.0
    %2777 = vmatprep.subr.mxu0 0.0
    %2778 = vmatpush1.msra.mxu0 0.0
    %2779 = vmatprep.subr.mxu0 0.0
    %2780 = vmatpush1.msra.mxu0 0.0
    %2781 = vmatprep.subr.mxu0 0.0
    %2782 = vmatpush1.msra.mxu0 0.0
    %2783 = vmatprep.subr.mxu0 0.0
    %2784 = vmatpush1.msra.mxu0 0.0
    %2785 = vmatprep.subr.mxu0 0.0
    %2786 = vmatpush1.msra.mxu0 0.0
    %2787 = vmatprep.subr.mxu0 0.0
    %2788 = vmatpush1.msra.mxu0 0.0
    %2789 = vmatprep.subr.mxu0 0.0
    %2790 = vmatpush1.msra.mxu0 0.0
    %2791 = vmatprep.subr.mxu0 0.0
    %2792 = vmatpush1.msra.mxu0 0.0
    %2793 = vmatprep.subr.mxu0 0.0
    %2794 = vmatpush1.msra.mxu0 0.0
    %2795 = vmatprep.subr.mxu0 0.0
    %2796 = vmatpush1.msra.mxu0 0.0
    %2797 = vmatprep.subr.mxu0 0.0
    %2798 = vmatpush1.msra.mxu0 0.0
    %2799 = vmatprep.subr.mxu0 0.0
    %2800 = vmatpush1.msra.mxu0 0.0
    %2801 = vmatprep.subr.mxu0 0.0
    %2802 = vmatpush1.msra.mxu0 0.0
    %2803 = vmatprep.subr.mxu0 0.0
    %2804 = vmatpush1.msra.mxu0 0.0
    %2805 = vmatprep.subr.mxu0 0.0
    %2806 = vmatpush1.msra.mxu0 0.0
    %2807 = vmatprep.subr.mxu0 0.0
    %2808 = vmatpush1.msra.mxu0 0.0
    %2809 = vmatprep.subr.mxu0 0.0
    %2810 = vmatpush1.msra.mxu0 0.0
    %2811 = vmatprep.subr.mxu0 0.0
    %2812 = vmatpush1.msra.mxu0 0.0
    %2813 = vmatprep.subr.mxu0 0.0
    %2814 = vmatpush1.msra.mxu0 0.0
    %2815 = vmatprep.subr.mxu0 0.0
    %2816 = vmatpush1.msra.mxu0 0.0
    %2817 = vmatprep.subr.mxu0 0.0
    %2818 = vmatpush1.msra.mxu0 0.0
    %2819 = vmatprep.subr.mxu0 0.0
    %2820 = vmatpush1.msra.mxu0 0.0
    %2821 = vmatprep.subr.mxu0 0.0
    %2822 = vmatpush1.msra.mxu0 0.0
    %2823 = vmatprep.mubr.f32.mxu0 0.0
    %v2824 = vand.u32 %v2676, 4294901760
    %2825 = vmatmul.mubr.f32.gmra.mrb[0].mxu0 %v2824
    %v2826 = vpop.f32.mrb[0].mxu0
    %v2827 = vadd.f32 %v2751, %v2826
    %v2828 = vpop.f32.mrb[0].mxu0
    %2829 = vdwg.mxu0
    %2830 = vmatprep.subr.mxu0 0.0
    %v2831 = vand.u32 %v2669, 4294901760
    %v2832 = vsub.f32 %v2669, %v2831
    %2833 = vmatpush1.msra.mxu0 %v2832
    %2834 = vmatprep.subr.mxu0 0.0
    %2835 = vmatpush1.msra.mxu0 0.0
    %2836 = vmatprep.subr.mxu0 0.0
    %2837 = vmatpush1.msra.mxu0 0.0
    %2838 = vmatprep.subr.mxu0 0.0
    %2839 = vmatpush1.msra.mxu0 0.0
    %2840 = vmatprep.subr.mxu0 0.0
    %2841 = vmatpush1.msra.mxu0 0.0
    %2842 = vmatprep.subr.mxu0 0.0
    %2843 = vmatpush1.msra.mxu0 0.0
    %2844 = vmatprep.subr.mxu0 0.0
    %2845 = vmatpush1.msra.mxu0 0.0
    %2846 = vmatprep.subr.mxu0 0.0
    %2847 = vmatpush1.msra.mxu0 0.0
    %2848 = vmatprep.subr.mxu0 0.0
    %2849 = vmatpush1.msra.mxu0 0.0
    %2850 = vmatprep.subr.mxu0 0.0
    %2851 = vmatpush1.msra.mxu0 0.0
    %2852 = vmatprep.subr.mxu0 0.0
    %2853 = vmatpush1.msra.mxu0 0.0
    %2854 = vmatprep.subr.mxu0 0.0
    %2855 = vmatpush1.msra.mxu0 0.0
    %2856 = vmatprep.subr.mxu0 0.0
    %2857 = vmatpush1.msra.mxu0 0.0
    %2858 = vmatprep.subr.mxu0 0.0
    %2859 = vmatpush1.msra.mxu0 0.0
    %2860 = vmatprep.subr.mxu0 0.0
    %2861 = vmatpush1.msra.mxu0 0.0
    %2862 = vmatprep.subr.mxu0 0.0
    %2863 = vmatpush1.msra.mxu0 0.0
    %2864 = vmatprep.subr.mxu0 0.0
    %2865 = vmatpush1.msra.mxu0 0.0
    %2866 = vmatprep.subr.mxu0 0.0
    %2867 = vmatpush1.msra.mxu0 0.0
    %2868 = vmatprep.subr.mxu0 0.0
    %2869 = vmatpush1.msra.mxu0 0.0
    %2870 = vmatprep.subr.mxu0 0.0
    %2871 = vmatpush1.msra.mxu0 0.0
    %2872 = vmatprep.subr.mxu0 0.0
    %2873 = vmatpush1.msra.mxu0 0.0
    %2874 = vmatprep.subr.mxu0 0.0
    %2875 = vmatpush1.msra.mxu0 0.0
    %2876 = vmatprep.subr.mxu0 0.0
    %2877 = vmatpush1.msra.mxu0 0.0
    %2878 = vmatprep.subr.mxu0 0.0
    %2879 = vmatpush1.msra.mxu0 0.0
    %2880 = vmatprep.subr.mxu0 0.0
    %2881 = vmatpush1.msra.mxu0 0.0
    %2882 = vmatprep.subr.mxu0 0.0
    %2883 = vmatpush1.msra.mxu0 0.0
    %2884 = vmatprep.subr.mxu0 0.0
    %2885 = vmatpush1.msra.mxu0 0.0
    %2886 = vmatprep.subr.mxu0 0.0
    %2887 = vmatpush1.msra.mxu0 0.0
    %2888 = vmatprep.subr.mxu0 0.0
    %2889 = vmatpush1.msra.mxu0 0.0
    %2890 = vmatprep.subr.mxu0 0.0
    %2891 = vmatpush1.msra.mxu0 0.0
    %2892 = vmatprep.subr.mxu0 0.0
    %2893 = vmatpush1.msra.mxu0 0.0
    %2894 = vmatprep.subr.mxu0 0.0
    %2895 = vmatpush1.msra.mxu0 0.0
    %2896 = vmatprep.mubr.f32.mxu0 0.0
    %v2897 = vand.u32 %v2676, 4294901760
    %v2898 = vsub.f32 %v2676, %v2897
    %2899 = vmatmul.mubr.f32.gmra.mrb[0].mxu0 %v2898
    %v2900 = vpop.f32.mrb[0].mxu0
    %v2901 = vadd.f32 %v2827, %v2900
    %v2902 = vpop.f32.mrb[0].mxu0
    %2903 = vdwg.mxu0
    %2904 = vmatprep.subr.mxu0 0.0
    %v2905 = vand.u32 %v2669, 4294901760
    %2906 = vmatpush1.msra.mxu0 %v2905
    %2907 = vmatprep.subr.mxu0 0.0
    %2908 = vmatpush1.msra.mxu0 0.0
    %2909 = vmatprep.subr.mxu0 0.0
    %2910 = vmatpush1.msra.mxu0 0.0
    %2911 = vmatprep.subr.mxu0 0.0
    %2912 = vmatpush1.msra.mxu0 0.0
    %2913 = vmatprep.subr.mxu0 0.0
    %2914 = vmatpush1.msra.mxu0 0.0
    %2915 = vmatprep.subr.mxu0 0.0
    %2916 = vmatpush1.msra.mxu0 0.0
    %2917 = vmatprep.subr.mxu0 0.0
    %2918 = vmatpush1.msra.mxu0 0.0
    %2919 = vmatprep.subr.mxu0 0.0
    %2920 = vmatpush1.msra.mxu0 0.0
    %2921 = vmatprep.subr.mxu0 0.0
    %2922 = vmatpush1.msra.mxu0 0.0
    %2923 = vmatprep.subr.mxu0 0.0
    %2924 = vmatpush1.msra.mxu0 0.0
    %2925 = vmatprep.subr.mxu0 0.0
    %2926 = vmatpush1.msra.mxu0 0.0
    %2927 = vmatprep.subr.mxu0 0.0
    %2928 = vmatpush1.msra.mxu0 0.0
    %2929 = vmatprep.subr.mxu0 0.0
    %2930 = vmatpush1.msra.mxu0 0.0
    %2931 = vmatprep.subr.mxu0 0.0
    %2932 = vmatpush1.msra.mxu0 0.0
    %2933 = vmatprep.subr.mxu0 0.0
    %2934 = vmatpush1.msra.mxu0 0.0
    %2935 = vmatprep.subr.mxu0 0.0
    %2936 = vmatpush1.msra.mxu0 0.0
    %2937 = vmatprep.subr.mxu0 0.0
    %2938 = vmatpush1.msra.mxu0 0.0
    %2939 = vmatprep.subr.mxu0 0.0
    %2940 = vmatpush1.msra.mxu0 0.0
    %2941 = vmatprep.subr.mxu0 0.0
    %2942 = vmatpush1.msra.mxu0 0.0
    %2943 = vmatprep.subr.mxu0 0.0
    %2944 = vmatpush1.msra.mxu0 0.0
    %2945 = vmatprep.subr.mxu0 0.0
    %2946 = vmatpush1.msra.mxu0 0.0
    %2947 = vmatprep.subr.mxu0 0.0
    %2948 = vmatpush1.msra.mxu0 0.0
    %2949 = vmatprep.subr.mxu0 0.0
    %2950 = vmatpush1.msra.mxu0 0.0
    %2951 = vmatprep.subr.mxu0 0.0
    %2952 = vmatpush1.msra.mxu0 0.0
    %2953 = vmatprep.subr.mxu0 0.0
    %2954 = vmatpush1.msra.mxu0 0.0
    %2955 = vmatprep.subr.mxu0 0.0
    %2956 = vmatpush1.msra.mxu0 0.0
    %2957 = vmatprep.subr.mxu0 0.0
    %2958 = vmatpush1.msra.mxu0 0.0
    %2959 = vmatprep.subr.mxu0 0.0
    %2960 = vmatpush1.msra.mxu0 0.0
    %2961 = vmatprep.subr.mxu0 0.0
    %2962 = vmatpush1.msra.mxu0 0.0
    %2963 = vmatprep.subr.mxu0 0.0
    %2964 = vmatpush1.msra.mxu0 0.0
    %2965 = vmatprep.subr.mxu0 0.0
    %2966 = vmatpush1.msra.mxu0 0.0
    %2967 = vmatprep.subr.mxu0 0.0
    %2968 = vmatpush1.msra.mxu0 0.0
    %2969 = vmatprep.mubr.f32.mxu0 0.0
    %v2970 = vand.u32 %v2676, 4294901760
    %v2971 = vsub.f32 %v2676, %v2970
    %v2972 = vand.u32 %v2971, 4294901760
    %2973 = vmatmul.mubr.f32.gmra.mrb[0].mxu0 %v2972
    %v2974 = vpop.f32.mrb[0].mxu0
    %v2975 = vadd.f32 %v2901, %v2974
    %v2976 = vpop.f32.mrb[0].mxu0
    %2977 = vdwg.mxu0
    %2978 = vmatprep.subr.mxu0 0.0
    %v2979 = vand.u32 %v2669, 4294901760
    %v2980 = vsub.f32 %v2669, %v2979
    %v2981 = vand.u32 %v2980, 4294901760
    %2982 = vmatpush1.msra.mxu0 %v2981
    %2983 = vmatprep.subr.mxu0 0.0
    %2984 = vmatpush1.msra.mxu0 0.0
    %2985 = vmatprep.subr.mxu0 0.0
    %2986 = vmatpush1.msra.mxu0 0.0
    %2987 = vmatprep.subr.mxu0 0.0
    %2988 = vmatpush1.msra.mxu0 0.0
    %2989 = vmatprep.subr.mxu0 0.0
    %2990 = vmatpush1.msra.mxu0 0.0
    %2991 = vmatprep.subr.mxu0 0.0
    %2992 = vmatpush1.msra.mxu0 0.0
    %2993 = vmatprep.subr.mxu0 0.0
    %2994 = vmatpush1.msra.mxu0 0.0
    %2995 = vmatprep.subr.mxu0 0.0
    %2996 = vmatpush1.msra.mxu0 0.0
    %2997 = vmatprep.subr.mxu0 0.0
    %2998 = vmatpush1.msra.mxu0 0.0
    %2999 = vmatprep.subr.mxu0 0.0
    %3000 = vmatpush1.msra.mxu0 0.0
    %3001 = vmatprep.subr.mxu0 0.0
    %3002 = vmatpush1.msra.mxu0 0.0
    %3003 = vmatprep.subr.mxu0 0.0
    %3004 = vmatpush1.msra.mxu0 0.0
    %3005 = vmatprep.subr.mxu0 0.0
    %3006 = vmatpush1.msra.mxu0 0.0
    %3007 = vmatprep.subr.mxu0 0.0
    %3008 = vmatpush1.msra.mxu0 0.0
    %3009 = vmatprep.subr.mxu0 0.0
    %3010 = vmatpush1.msra.mxu0 0.0
    %3011 = vmatprep.subr.mxu0 0.0
    %3012 = vmatpush1.msra.mxu0 0.0
    %3013 = vmatprep.subr.mxu0 0.0
    %3014 = vmatpush1.msra.mxu0 0.0
    %3015 = vmatprep.subr.mxu0 0.0
    %3016 = vmatpush1.msra.mxu0 0.0
    %3017 = vmatprep.subr.mxu0 0.0
    %3018 = vmatpush1.msra.mxu0 0.0
    %3019 = vmatprep.subr.mxu0 0.0
    %3020 = vmatpush1.msra.mxu0 0.0
    %3021 = vmatprep.subr.mxu0 0.0
    %3022 = vmatpush1.msra.mxu0 0.0
    %3023 = vmatprep.subr.mxu0 0.0
    %3024 = vmatpush1.msra.mxu0 0.0
    %3025 = vmatprep.subr.mxu0 0.0
    %3026 = vmatpush1.msra.mxu0 0.0
    %3027 = vmatprep.subr.mxu0 0.0
    %3028 = vmatpush1.msra.mxu0 0.0
    %3029 = vmatprep.subr.mxu0 0.0
    %3030 = vmatpush1.msra.mxu0 0.0
    %3031 = vmatprep.subr.mxu0 0.0
    %3032 = vmatpush1.msra.mxu0 0.0
    %3033 = vmatprep.subr.mxu0 0.0
    %3034 = vmatpush1.msra.mxu0 0.0
    %3035 = vmatprep.subr.mxu0 0.0
    %3036 = vmatpush1.msra.mxu0 0.0
    %3037 = vmatprep.subr.mxu0 0.0
    %3038 = vmatpush1.msra.mxu0 0.0
    %3039 = vmatprep.subr.mxu0 0.0
    %3040 = vmatpush1.msra.mxu0 0.0
    %3041 = vmatprep.subr.mxu0 0.0
    %3042 = vmatpush1.msra.mxu0 0.0
    %3043 = vmatprep.subr.mxu0 0.0
    %3044 = vmatpush1.msra.mxu0 0.0
    %3045 = vmatprep.mubr.f32.mxu0 0.0
    %v3046 = vand.u32 %v2676, 4294901760
    %3047 = vmatmul.mubr.f32.gmra.mrb[0].mxu0 %v3046
    %v3048 = vpop.f32.mrb[0].mxu0
    %v3049 = vadd.f32 %v2975, %v3048
    %v3050 = vpop.f32.mrb[0].mxu0
    %3051 = vdwg.mxu0
    %3052 = vmatprep.subr.mxu0 0.0
    %v3053 = vand.u32 %v2669, 4294901760
    %3054 = vmatpush1.msra.mxu0 %v3053
    %3055 = vmatprep.subr.mxu0 0.0
    %3056 = vmatpush1.msra.mxu0 0.0
    %3057 = vmatprep.subr.mxu0 0.0
    %3058 = vmatpush1.msra.mxu0 0.0
    %3059 = vmatprep.subr.mxu0 0.0
    %3060 = vmatpush1.msra.mxu0 0.0
    %3061 = vmatprep.subr.mxu0 0.0
    %3062 = vmatpush1.msra.mxu0 0.0
    %3063 = vmatprep.subr.mxu0 0.0
    %3064 = vmatpush1.msra.mxu0 0.0
    %3065 = vmatprep.subr.mxu0 0.0
    %3066 = vmatpush1.msra.mxu0 0.0
    %3067 = vmatprep.subr.mxu0 0.0
    %3068 = vmatpush1.msra.mxu0 0.0
    %3069 = vmatprep.subr.mxu0 0.0
    %3070 = vmatpush1.msra.mxu0 0.0
    %3071 = vmatprep.subr.mxu0 0.0
    %3072 = vmatpush1.msra.mxu0 0.0
    %3073 = vmatprep.subr.mxu0 0.0
    %3074 = vmatpush1.msra.mxu0 0.0
    %3075 = vmatprep.subr.mxu0 0.0
    %3076 = vmatpush1.msra.mxu0 0.0
    %3077 = vmatprep.subr.mxu0 0.0
    %3078 = vmatpush1.msra.mxu0 0.0
    %3079 = vmatprep.subr.mxu0 0.0
    %3080 = vmatpush1.msra.mxu0 0.0
    %3081 = vmatprep.subr.mxu0 0.0
    %3082 = vmatpush1.msra.mxu0 0.0
    %3083 = vmatprep.subr.mxu0 0.0
    %3084 = vmatpush1.msra.mxu0 0.0
    %3085 = vmatprep.subr.mxu0 0.0
    %3086 = vmatpush1.msra.mxu0 0.0
    %3087 = vmatprep.subr.mxu0 0.0
    %3088 = vmatpush1.msra.mxu0 0.0
    %3089 = vmatprep.subr.mxu0 0.0
    %3090 = vmatpush1.msra.mxu0 0.0
    %3091 = vmatprep.subr.mxu0 0.0
    %3092 = vmatpush1.msra.mxu0 0.0
    %3093 = vmatprep.subr.mxu0 0.0
    %3094 = vmatpush1.msra.mxu0 0.0
    %3095 = vmatprep.subr.mxu0 0.0
    %3096 = vmatpush1.msra.mxu0 0.0
    %3097 = vmatprep.subr.mxu0 0.0
    %3098 = vmatpush1.msra.mxu0 0.0
    %3099 = vmatprep.subr.mxu0 0.0
    %3100 = vmatpush1.msra.mxu0 0.0
    %3101 = vmatprep.subr.mxu0 0.0
    %3102 = vmatpush1.msra.mxu0 0.0
    %3103 = vmatprep.subr.mxu0 0.0
    %3104 = vmatpush1.msra.mxu0 0.0
    %3105 = vmatprep.subr.mxu0 0.0
    %3106 = vmatpush1.msra.mxu0 0.0
    %3107 = vmatprep.subr.mxu0 0.0
    %3108 = vmatpush1.msra.mxu0 0.0
    %3109 = vmatprep.subr.mxu0 0.0
    %3110 = vmatpush1.msra.mxu0 0.0
    %3111 = vmatprep.subr.mxu0 0.0
    %3112 = vmatpush1.msra.mxu0 0.0
    %3113 = vmatprep.subr.mxu0 0.0
    %3114 = vmatpush1.msra.mxu0 0.0
    %3115 = vmatprep.subr.mxu0 0.0
    %3116 = vmatpush1.msra.mxu0 0.0
    %3117 = vmatprep.mubr.f32.mxu0 0.0
    %v3118 = vand.u32 %v2676, 4294901760
    %3119 = vmatmul.mubr.f32.gmra.mrb[0].mxu0 %v3118
    %v3120 = vpop.f32.mrb[0].mxu0
    %v3121 = vadd.f32 %v3049, %v3120
    %v3122 = vpop.f32.mrb[0].mxu0
    %3123 = vdwg.mxu0
    %v3124 = vxor.u32 %v3121, 2147483648
    %v3125 = vmul.f32 %v3124, 1.442695
    %v3126 = vpow.pop %v3125
    %v3127 = vadd.f32 %v3126, 1.0
    %v3128 = vrcp.pop %v3127
    %v3129 = vmul.f32 1.0, %v3128
    %3130 = vst [vmem:[%s3] sm:$0x1] %v3129
    // Predicated region
    $region26: #{_forward_packed.1} parent=1 // pred_check
      _
    $region27: #{_forward_packed.1} parent=1 // pred_check_branch
      %3132 = sbr.rel (0) target = $region29
    $region28: #{_forward_packed.1} parent=1 // pred_region
      _
    $region29: #{_forward_packed.1} parent=1 // pred_fallthru
      _
    // Predicated region
    $region30: #{_forward_packed.1} parent=1 // pred_check
      _
    $region31: #{_forward_packed.1} parent=1 // pred_check_branch
      %3134 = sbr.rel (0) target = $region33
    $region32: #{_forward_packed.1} parent=1 // pred_region
      _
    $region33: #{_forward_packed.1} parent=1 // pred_fallthru
      _
    %3135 = vsyncpa [#allocation3], 1
    %3136 = vsyncpa [#allocation5], 1

</llo_original>
